<compile_context>
chip_gen: v7x
topology: tpu7x:2x2x1
jax: 0.10.0
libtpu: 0.0.40
codegen_flags: <defaults>
</compile_context>

<pallas_src>
import numpy as np

import jax
import jax.numpy as jnp
from jax import lax
from jax.experimental import pallas as pl
from jax.experimental.pallas import tpu as pltpu


LANES = 128
VMEM_LIMIT = 32 * 1024 * 1024    # explicit scoped-VMEM limit, <= half of v7x's 64 MiB


def _round_up(x, m):
    return (x + m - 1) // m * m


# ---------------- fused whole-network kernel ----------------

def _lenet_fused_kernel(xq_ref,
                        w1a_ref, w1b_ref, b1_ref,
                        w2a_ref, w2b_ref, w2c_ref, b2_ref,
                        wf1_ref, bf1_ref, wf2_ref, bf2_ref, wf3_ref, bf3_ref,
                        o_ref):
    """Entire LeNet forward for a block of images; all intermediates stay in VMEM/vregs.

    xq_ref : (BT, 8, 384) bf16  image as 8 row-quads: lane r*96 + w*3 + c = NHWC pixel
                                (h = 4*q + r, w, c).
    w1a/b  : (384, 1024) bf16   conv1 block-Toeplitz weights (row-quad shift s=0,1);
                                output col j*512 + (2*dh+dw)*128 + pw*6 + oc is the
                                pre-bias conv1 value at (oh=2*(2t+j)+dh, ow=2*pw+dw, oc).
    w2a/b/c: (256, 512)  bf16   conv2 block-Toeplitz weights (row-pair shift s=0,1,2).
    wf1    : (640, 128)  bf16   fc1 with torch's (c,h,w) flatten order folded in.
    wf2/3  : (128, 128)  bf16   fc2 / fc3, zero-padded to 128 lanes.
    b*     : (1, 128)    f32    lane-padded biases (conv biases pre-tiled over pw).
    o_ref  : (BT, 1, 128) f32   sigmoid(fc3) in column 0.
    """
    w1a, w1b = w1a_ref[...], w1b_ref[...]
    w2a, w2b, w2c = w2a_ref[...], w2b_ref[...], w2c_ref[...]
    wf1, wf2, wf3 = wf1_ref[...], wf2_ref[...], wf3_ref[...]
    b1, b2 = b1_ref[...], b2_ref[...]
    bf1, bf2, bf3 = bf1_ref[...], bf2_ref[...], bf3_ref[...]

    def pool4(blk, bias):
        # blk: (rows, 512) = 4 pool-offset blocks of 128 lanes.
        # max over the 4 offsets first, then bias + ReLU exactly once (review item 2/3).
        m = jnp.maximum(jnp.maximum(blk[:, 0:128], blk[:, 128:256]),
                        jnp.maximum(blk[:, 256:384], blk[:, 384:512]))
        return jnp.maximum(m + bias, 0.0)

    for b in range(xq_ref.shape[0]):               # unrolled; images-per-step is small
        xq = xq_ref[b]                             # (8, 384) bf16

        # conv1 + bias + relu + 2x2 maxpool -> h1 (7, 256); row t packs pooled rows 2t|2t+1
        acc1 = jnp.dot(xq[0:7, :], w1a, preferred_element_type=jnp.float32)
        acc1 = acc1 + jnp.dot(xq[1:8, :], w1b, preferred_element_type=jnp.float32)
        h1 = jnp.concatenate([pool4(acc1[:, 0:512], b1),
                              pool4(acc1[:, 512:1024], b1)],
                             axis=-1).astype(jnp.bfloat16)

        # conv2 + bias + relu + 2x2 maxpool -> h2 (5, 128); lane = pw2*16 + oc2
        acc2 = jnp.dot(h1[0:5, :], w2a, preferred_element_type=jnp.float32)
        acc2 = acc2 + jnp.dot(h1[1:6, :], w2b, preferred_element_type=jnp.float32)
        acc2 = acc2 + jnp.dot(h1[2:7, :], w2c, preferred_element_type=jnp.float32)
        h2 = pool4(acc2, b2).astype(jnp.bfloat16)

        # flatten (torch (c,h,w) order folded into wf1) + fc1 -> relu -> fc2 -> relu -> fc3 -> sigmoid
        xfc = jnp.concatenate([h2[h:h + 1, :] for h in range(5)], axis=-1)   # (1, 640)
        z = jnp.dot(xfc, wf1, preferred_element_type=jnp.float32) + bf1
        z = jnp.maximum(z, 0.0).astype(jnp.bfloat16)
        z = jnp.dot(z, wf2, preferred_element_type=jnp.float32) + bf2
        z = jnp.maximum(z, 0.0).astype(jnp.bfloat16)
        z = jnp.dot(z, wf3, preferred_element_type=jnp.float32) + bf3
        o_ref[b] = jax.nn.sigmoid(z)


# ---------------- one-time parameter preprocessing (hoisted out of jit) ----------------

def prepare_params(params):
    """Expand PyTorch-layout params into kernel-ready, lane-padded, bf16 matrices.

    Runs ONCE outside the jitted forward (review item: hoist weight prep).  The conv
    weights become block-Toeplitz matrices that fold im2col + the four 2x2 pool offsets
    directly into the matmul; fc1 absorbs the (c,h,w) flatten-order permutation.
    """
    w1 = np.asarray(params["conv1_w"], np.float32)    # (6, 3, 5, 5)
    cb1 = np.asarray(params["conv1_b"], np.float32)
    w2 = np.asarray(params["conv2_w"], np.float32)    # (16, 6, 5, 5)
    cb2 = np.asarray(params["conv2_b"], np.float32)
    f1 = np.asarray(params["fc1_w"], np.float32)      # (400, 120), torch (c,h,w) row order
    fb1 = np.asarray(params["fc1_b"], np.float32)
    f2 = np.asarray(params["fc2_w"], np.float32)      # (120, 84)
    fb2 = np.asarray(params["fc2_b"], np.float32)
    f3 = np.asarray(params["fc3_w"], np.float32)      # (84, 1)
    fb3 = np.asarray(params["fc3_b"], np.float32)
    K = 5

    # conv1: input row-quad k-index = r*96 + w*3 + c ; output col = j*512 + (2dh+dw)*128 + pw*6 + oc
    #        image row used: 4*(t+s) + r must equal 2*(2t+j) + dh + kh  =>  r = kh + 2j + dh - 4s
    W1 = np.zeros((2, 384, 1024), np.float32)
    for s in range(2):
        for j in range(2):
            for dh in range(2):
                for kh in range(K):
                    r = kh + 2 * j + dh - 4 * s
                    if not (0 <= r < 4):
                        continue
                    for dw in range(2):
                        for kw in range(K):
                            for pw in range(14):
                                wcol = 2 * pw + dw + kw                       # image col, <= 31
                                rows = r * 96 + wcol * 3 + np.arange(3)        # c
                                cols = j * 512 + (dh * 2 + dw) * 128 + pw * 6 + np.arange(6)  # oc
                                W1[s][np.ix_(rows, cols)] = w1[:, :, kh, kw].T  # (c, oc)

    # conv2: input row-pair k-index = j*128 + w1col*6 + ic ; output col = (2dh+dw)*128 + pw2*16 + oc2
    #        h1 row used: 2*(ph2+s) + j must equal 2*ph2 + dh + kh  =>  kh = 2s + j - dh
    W2 = np.zeros((3, 256, 512), np.float32)
    for s in range(3):
        for j in range(2):
            for dh in range(2):
                kh = 2 * s + j - dh
                if not (0 <= kh < K):
                    continue
                for dw in range(2):
                    for kw in range(K):
                        for pw2 in range(5):
                            w1col = 2 * pw2 + dw + kw                          # h1 col, <= 13
                            rows = j * 128 + w1col * 6 + np.arange(6)           # ic
                            cols = (dh * 2 + dw) * 128 + pw2 * 16 + np.arange(16)  # oc2
                            W2[s][np.ix_(rows, cols)] = w2[:, :, kh, kw].T      # (ic, oc2)

    # fc1 with the torch .view(-1, 400) (c, h, w) flatten order folded in.
    Wf1 = np.zeros((640, LANES), np.float32)
    for h in range(5):
        for w in range(5):
            for c in range(16):
                Wf1[h * 128 + w * 16 + c, :120] = f1[c * 25 + h * 5 + w, :]

    Wf2 = np.zeros((LANES, LANES), np.float32); Wf2[:120, :84] = f2
    Wf3 = np.zeros((LANES, LANES), np.float32); Wf3[:84, :1] = f3

    b1r = np.zeros((1, LANES), np.float32); b1r[0, :84] = np.tile(cb1, 14)    # col pw*6+oc
    b2r = np.zeros((1, LANES), np.float32); b2r[0, :80] = np.tile(cb2, 5)     # col pw2*16+oc2 -> tiled per pw2
    # careful: conv2 col layout is pw2*16 + oc2, so tile cb2 (len 16) 5 times.
    bf1r = np.zeros((1, LANES), np.float32); bf1r[0, :120] = fb1
    bf2r = np.zeros((1, LANES), np.float32); bf2r[0, :84] = fb2
    bf3r = np.zeros((1, LANES), np.float32); bf3r[0, :1] = fb3

    return {
        "w1a": jnp.asarray(W1[0], jnp.bfloat16), "w1b": jnp.asarray(W1[1], jnp.bfloat16),
        "b1": jnp.asarray(b1r, jnp.float32),
        "w2a": jnp.asarray(W2[0], jnp.bfloat16), "w2b": jnp.asarray(W2[1], jnp.bfloat16),
        "w2c": jnp.asarray(W2[2], jnp.bfloat16),
        "b2": jnp.asarray(b2r, jnp.float32),
        "wf1": jnp.asarray(Wf1, jnp.bfloat16), "bf1": jnp.asarray(bf1r, jnp.float32),
        "wf2": jnp.asarray(Wf2, jnp.bfloat16), "bf2": jnp.asarray(bf2r, jnp.float32),
        "wf3": jnp.asarray(Wf3, jnp.bfloat16), "bf3": jnp.asarray(bf3r, jnp.float32),
    }


# ---------------- forward (one pallas_call for the whole net) ----------------

def net_forward(prep, x):
    """x: (B, 3, 32, 32) f32 NCHW (PyTorch layout). Returns (B,) f32 = sigmoid(fc3)."""
    B, C, H, W = x.shape
    assert (C, H, W) == (3, 32, 32)

    # TODO(synk): this NCHW->NHWC transpose + row-quad reshape + bf16 cast is the one
    # remaining XLA glue op outside the kernel (zero data inflation, one launch).
    xq = jnp.transpose(x, (0, 2, 3, 1)).astype(jnp.bfloat16).reshape(B, 8, 4 * 32 * 3)

    bt = 1 if B < 16 else 8                 # >=2 grid steps for B>=2 so both v7x TCs get work
    b_pad = _round_up(B, bt)
    if b_pad != B:
        xq = jnp.pad(xq, ((0, b_pad - B), (0, 0), (0, 0)))

    def wspec(shape):
        return pl.BlockSpec(shape, lambda i: (0, 0))

    out = pl.pallas_call(
        _lenet_fused_kernel,
        out_shape=jax.ShapeDtypeStruct((b_pad, 1, LANES), jnp.float32),
        grid=(b_pad // bt,),
        in_specs=[
            pl.BlockSpec((bt, 8, 384), lambda i: (i, 0, 0)),
            wspec((384, 1024)), wspec((384, 1024)), wspec((1, LANES)),
            wspec((256, 512)), wspec((256, 512)), wspec((256, 512)), wspec((1, LANES)),
            wspec((640, LANES)), wspec((1, LANES)),
            wspec((LANES, LANES)), wspec((1, LANES)),
            wspec((LANES, LANES)), wspec((1, LANES)),
        ],
        out_specs=pl.BlockSpec((bt, 1, LANES), lambda i: (i, 0, 0)),
        compiler_params=pltpu.CompilerParams(
            dimension_semantics=("parallel",),
            vmem_limit_bytes=VMEM_LIMIT,
        ),
    )(xq,
      prep["w1a"], prep["w1b"], prep["b1"],
      prep["w2a"], prep["w2b"], prep["w2c"], prep["b2"],
      prep["wf1"], prep["bf1"], prep["wf2"], prep["bf2"], prep["wf3"], prep["bf3"])

    return out[:B, 0, 0]


# ---------------- pure-JAX f32 reference (for correctness check) ----------------

def net_forward_reference(params, x):
    def conv(h, w, b):
        y = lax.conv_general_dilated(h, w, (1, 1), "VALID",
                                     dimension_numbers=("NCHW", "OIHW", "NCHW"))
        return y + b[None, :, None, None]

    def pool(h):
        return lax.reduce_window(h, -jnp.inf, lax.max, (1, 1, 2, 2), (1, 1, 2, 2), "VALID")

    h = pool(jax.nn.relu(conv(x, params["conv1_w"], params["conv1_b"])))
    h = pool(jax.nn.relu(conv(h, params["conv2_w"], params["conv2_b"])))
    h = h.reshape(h.shape[0], -1)                                   # torch (c,h,w) flatten
    h = jax.nn.relu(h @ params["fc1_w"] + params["fc1_b"])
    h = jax.nn.relu(h @ params["fc2_w"] + params["fc2_b"])
    z = h @ params["fc3_w"] + params["fc3_b"]
    return jax.nn.sigmoid(z[:, 0])


# ---------------- deterministic synthetic params ----------------

def init_params(key):
    ks = jax.random.split(key, 10)

    def uni(k, shape, fan_in):
        bound = 1.0 / jnp.sqrt(float(fan_in))
        return jax.random.uniform(k, shape, jnp.float32, -bound, bound)

    return {
        "conv1_w": uni(ks[0], (6, 3, 5, 5), 3 * 5 * 5),
        "conv1_b": uni(ks[1], (6,), 3 * 5 * 5),
        "conv2_w": uni(ks[2], (16, 6, 5, 5), 6 * 5 * 5),
        "conv2_b": uni(ks[3], (16,), 6 * 5 * 5),
        "fc1_w": uni(ks[4], (16 * 5 * 5, 120), 16 * 5 * 5),   # (in, out) = torch weight.T
        "fc1_b": uni(ks[5], (120,), 16 * 5 * 5),
        "fc2_w": uni(ks[6], (120, 84), 120),
        "fc2_b": uni(ks[7], (84,), 120),
        "fc3_w": uni(ks[8], (84, 1), 84),
        "fc3_b": uni(ks[9], (1,), 84),
    }


if __name__ == "__main__":
    key = jax.random.PRNGKey(0)
    k_params, k_x = jax.random.split(key)
    params = init_params(k_params)
    prep = prepare_params(params)            # one-time weight prep, outside jit

    # 32x32 spatial / 3 channels are required by the 16*5*5 flatten; small batch of 4.
    x = jax.random.normal(k_x, (4, 3, 32, 32), jnp.float32)

    out = jax.block_until_ready(jax.jit(net_forward)(prep, x))
    ref = jax.block_until_ready(net_forward_reference(params, x))

    assert out.shape == (4,)
    assert bool(jnp.all(jnp.isfinite(out)))
    assert bool(jnp.all((out >= 0.0) & (out <= 1.0)))          # sigmoid range
    # bf16 matmuls with f32 accumulation vs. strict f32 reference: allow small tolerance.
    assert bool(jnp.max(jnp.abs(out - ref)) < 2e-2), (out, ref)
    print("KERNEL_OK")
</pallas_src>

<mosaic_0001>
module attributes {stable_mosaic.version = 11 : i64} {
  func.func @_lenet_fused_kernel(%arg0: i32, %arg1: memref<1x8x384xbf16, #tpu.memory_space<vmem>>, %arg2: memref<384x1024xbf16, #tpu.memory_space<vmem>>, %arg3: memref<384x1024xbf16, #tpu.memory_space<vmem>>, %arg4: memref<1x128xf32, #tpu.memory_space<vmem>>, %arg5: memref<256x512xbf16, #tpu.memory_space<vmem>>, %arg6: memref<256x512xbf16, #tpu.memory_space<vmem>>, %arg7: memref<256x512xbf16, #tpu.memory_space<vmem>>, %arg8: memref<1x128xf32, #tpu.memory_space<vmem>>, %arg9: memref<640x128xbf16, #tpu.memory_space<vmem>>, %arg10: memref<1x128xf32, #tpu.memory_space<vmem>>, %arg11: memref<128x128xbf16, #tpu.memory_space<vmem>>, %arg12: memref<1x128xf32, #tpu.memory_space<vmem>>, %arg13: memref<128x128xbf16, #tpu.memory_space<vmem>>, %arg14: memref<1x128xf32, #tpu.memory_space<vmem>>, %arg15: memref<1x1x128xf32, #tpu.memory_space<vmem>>) attributes {dimension_semantics = [#tpu.dimension_semantics<parallel>], iteration_bounds = array<i64: 4>, scalar_prefetch = 0 : i64, scratch_operands = 0 : i64, tpu.core_type = #tpu.core_type<tc>, window_params = [{transform_indices = @transform_0, window_bounds = array<i64: 1, 8, 384>}, {pipeline_mode = #tpu.pipeline_mode<synchronous>, transform_indices = @transform_1, window_bounds = array<i64: 384, 1024>}, {pipeline_mode = #tpu.pipeline_mode<synchronous>, transform_indices = @transform_2, window_bounds = array<i64: 384, 1024>}, {pipeline_mode = #tpu.pipeline_mode<synchronous>, transform_indices = @transform_3, window_bounds = array<i64: 1, 128>}, {pipeline_mode = #tpu.pipeline_mode<synchronous>, transform_indices = @transform_4, window_bounds = array<i64: 256, 512>}, {pipeline_mode = #tpu.pipeline_mode<synchronous>, transform_indices = @transform_5, window_bounds = array<i64: 256, 512>}, {pipeline_mode = #tpu.pipeline_mode<synchronous>, transform_indices = @transform_6, window_bounds = array<i64: 256, 512>}, {pipeline_mode = #tpu.pipeline_mode<synchronous>, transform_indices = @transform_7, window_bounds = array<i64: 1, 128>}, {pipeline_mode = #tpu.pipeline_mode<synchronous>, transform_indices = @transform_8, window_bounds = array<i64: 640, 128>}, {pipeline_mode = #tpu.pipeline_mode<synchronous>, transform_indices = @transform_9, window_bounds = array<i64: 1, 128>}, {pipeline_mode = #tpu.pipeline_mode<synchronous>, transform_indices = @transform_10, window_bounds = array<i64: 128, 128>}, {pipeline_mode = #tpu.pipeline_mode<synchronous>, transform_indices = @transform_11, window_bounds = array<i64: 1, 128>}, {pipeline_mode = #tpu.pipeline_mode<synchronous>, transform_indices = @transform_12, window_bounds = array<i64: 128, 128>}, {pipeline_mode = #tpu.pipeline_mode<synchronous>, transform_indices = @transform_13, window_bounds = array<i64: 1, 128>}, {transform_indices = @transform_14, window_bounds = array<i64: 1, 1, 128>}]} {
    %c0 = arith.constant 0 : index
    %c0_0 = arith.constant 0 : index
    %0 = vector.load %arg2[%c0, %c0_0] : memref<384x1024xbf16, #tpu.memory_space<vmem>>, vector<384x1024xbf16>
    %c0_1 = arith.constant 0 : index
    %c0_2 = arith.constant 0 : index
    %1 = vector.load %arg3[%c0_1, %c0_2] : memref<384x1024xbf16, #tpu.memory_space<vmem>>, vector<384x1024xbf16>
    %c0_3 = arith.constant 0 : index
    %c0_4 = arith.constant 0 : index
    %2 = vector.load %arg5[%c0_3, %c0_4] : memref<256x512xbf16, #tpu.memory_space<vmem>>, vector<256x512xbf16>
    %c0_5 = arith.constant 0 : index
    %c0_6 = arith.constant 0 : index
    %3 = vector.load %arg6[%c0_5, %c0_6] : memref<256x512xbf16, #tpu.memory_space<vmem>>, vector<256x512xbf16>
    %c0_7 = arith.constant 0 : index
    %c0_8 = arith.constant 0 : index
    %4 = vector.load %arg7[%c0_7, %c0_8] : memref<256x512xbf16, #tpu.memory_space<vmem>>, vector<256x512xbf16>
    %c0_9 = arith.constant 0 : index
    %c0_10 = arith.constant 0 : index
    %5 = vector.load %arg9[%c0_9, %c0_10] : memref<640x128xbf16, #tpu.memory_space<vmem>>, vector<640x128xbf16>
    %c0_11 = arith.constant 0 : index
    %c0_12 = arith.constant 0 : index
    %6 = vector.load %arg11[%c0_11, %c0_12] : memref<128x128xbf16, #tpu.memory_space<vmem>>, vector<128x128xbf16>
    %c0_13 = arith.constant 0 : index
    %c0_14 = arith.constant 0 : index
    %7 = vector.load %arg13[%c0_13, %c0_14] : memref<128x128xbf16, #tpu.memory_space<vmem>>, vector<128x128xbf16>
    %c0_15 = arith.constant 0 : index
    %c0_16 = arith.constant 0 : index
    %8 = vector.load %arg4[%c0_15, %c0_16] : memref<1x128xf32, #tpu.memory_space<vmem>>, vector<1x128xf32>
    %c0_17 = arith.constant 0 : index
    %c0_18 = arith.constant 0 : index
    %9 = vector.load %arg8[%c0_17, %c0_18] : memref<1x128xf32, #tpu.memory_space<vmem>>, vector<1x128xf32>
    %c0_19 = arith.constant 0 : index
    %c0_20 = arith.constant 0 : index
    %10 = vector.load %arg10[%c0_19, %c0_20] : memref<1x128xf32, #tpu.memory_space<vmem>>, vector<1x128xf32>
    %c0_21 = arith.constant 0 : index
    %c0_22 = arith.constant 0 : index
    %11 = vector.load %arg12[%c0_21, %c0_22] : memref<1x128xf32, #tpu.memory_space<vmem>>, vector<1x128xf32>
    %c0_23 = arith.constant 0 : index
    %c0_24 = arith.constant 0 : index
    %12 = vector.load %arg14[%c0_23, %c0_24] : memref<1x128xf32, #tpu.memory_space<vmem>>, vector<1x128xf32>
    %c0_25 = arith.constant 0 : index
    %c0_26 = arith.constant 0 : index
    %c0_27 = arith.constant 0 : index
    %13 = vector.load %arg1[%c0_25, %c0_26, %c0_27] : memref<1x8x384xbf16, #tpu.memory_space<vmem>>, vector<1x8x384xbf16>
    %14 = vector.shape_cast %13 : vector<1x8x384xbf16> to vector<8x384xbf16>
    %15 = vector.extract_strided_slice %14 {offsets = [0, 0], sizes = [7, 384], strides = [1, 1]} : vector<8x384xbf16> to vector<7x384xbf16>
    %cst = arith.constant dense<0.000000e+00> : vector<7x1024xf32>
    %16 = tpu.matmul %15, %0, %cst {dimension_numbers = #tpu.dot_dimension_numbers<[1], [0], [0], [1], [0, 0, 1, 1], [], []>} : vector<7x384xbf16>, vector<384x1024xbf16>, vector<7x1024xf32> -> vector<7x1024xf32>
    %17 = vector.extract_strided_slice %14 {offsets = [1, 0], sizes = [7, 384], strides = [1, 1]} : vector<8x384xbf16> to vector<7x384xbf16>
    %cst_28 = arith.constant dense<0.000000e+00> : vector<7x1024xf32>
    %18 = tpu.matmul %17, %1, %cst_28 {dimension_numbers = #tpu.dot_dimension_numbers<[1], [0], [0], [1], [0, 0, 1, 1], [], []>} : vector<7x384xbf16>, vector<384x1024xbf16>, vector<7x1024xf32> -> vector<7x1024xf32>
    %19 = arith.addf %16, %18 : vector<7x1024xf32>
    %20 = vector.extract_strided_slice %19 {offsets = [0, 0], sizes = [7, 512], strides = [1, 1]} : vector<7x1024xf32> to vector<7x512xf32>
    %21 = vector.extract_strided_slice %20 {offsets = [0, 0], sizes = [7, 128], strides = [1, 1]} : vector<7x512xf32> to vector<7x128xf32>
    %22 = vector.extract_strided_slice %20 {offsets = [0, 128], sizes = [7, 128], strides = [1, 1]} : vector<7x512xf32> to vector<7x128xf32>
    %23 = arith.maximumf %21, %22 : vector<7x128xf32>
    %24 = vector.extract_strided_slice %20 {offsets = [0, 256], sizes = [7, 128], strides = [1, 1]} : vector<7x512xf32> to vector<7x128xf32>
    %25 = vector.extract_strided_slice %20 {offsets = [0, 384], sizes = [7, 128], strides = [1, 1]} : vector<7x512xf32> to vector<7x128xf32>
    %26 = arith.maximumf %24, %25 : vector<7x128xf32>
    %27 = arith.maximumf %23, %26 : vector<7x128xf32>
    %28 = vector.broadcast %8 : vector<1x128xf32> to vector<7x128xf32>
    %29 = arith.addf %27, %28 : vector<7x128xf32>
    %cst_29 = arith.constant 0.000000e+00 : f32
    %30 = vector.broadcast %cst_29 : f32 to vector<7x128xf32>
    %31 = arith.maximumf %29, %30 : vector<7x128xf32>
    %32 = vector.extract_strided_slice %19 {offsets = [0, 512], sizes = [7, 512], strides = [1, 1]} : vector<7x1024xf32> to vector<7x512xf32>
    %33 = vector.extract_strided_slice %32 {offsets = [0, 0], sizes = [7, 128], strides = [1, 1]} : vector<7x512xf32> to vector<7x128xf32>
    %34 = vector.extract_strided_slice %32 {offsets = [0, 128], sizes = [7, 128], strides = [1, 1]} : vector<7x512xf32> to vector<7x128xf32>
    %35 = arith.maximumf %33, %34 : vector<7x128xf32>
    %36 = vector.extract_strided_slice %32 {offsets = [0, 256], sizes = [7, 128], strides = [1, 1]} : vector<7x512xf32> to vector<7x128xf32>
    %37 = vector.extract_strided_slice %32 {offsets = [0, 384], sizes = [7, 128], strides = [1, 1]} : vector<7x512xf32> to vector<7x128xf32>
    %38 = arith.maximumf %36, %37 : vector<7x128xf32>
    %39 = arith.maximumf %35, %38 : vector<7x128xf32>
    %40 = vector.broadcast %8 : vector<1x128xf32> to vector<7x128xf32>
    %41 = arith.addf %39, %40 : vector<7x128xf32>
    %cst_30 = arith.constant 0.000000e+00 : f32
    %42 = vector.broadcast %cst_30 : f32 to vector<7x128xf32>
    %43 = arith.maximumf %41, %42 : vector<7x128xf32>
    %44 = tpu.concatenate %31, %43 in 1 : vector<7x128xf32>, vector<7x128xf32> -> vector<7x256xf32>
    %45 = arith.truncf %44 : vector<7x256xf32> to vector<7x256xbf16>
    %46 = vector.extract_strided_slice %45 {offsets = [0, 0], sizes = [5, 256], strides = [1, 1]} : vector<7x256xbf16> to vector<5x256xbf16>
    %cst_31 = arith.constant dense<0.000000e+00> : vector<5x512xf32>
    %47 = tpu.matmul %46, %2, %cst_31 {dimension_numbers = #tpu.dot_dimension_numbers<[1], [0], [0], [1], [0, 0, 1, 1], [], []>} : vector<5x256xbf16>, vector<256x512xbf16>, vector<5x512xf32> -> vector<5x512xf32>
    %48 = vector.extract_strided_slice %45 {offsets = [1, 0], sizes = [5, 256], strides = [1, 1]} : vector<7x256xbf16> to vector<5x256xbf16>
    %cst_32 = arith.constant dense<0.000000e+00> : vector<5x512xf32>
    %49 = tpu.matmul %48, %3, %cst_32 {dimension_numbers = #tpu.dot_dimension_numbers<[1], [0], [0], [1], [0, 0, 1, 1], [], []>} : vector<5x256xbf16>, vector<256x512xbf16>, vector<5x512xf32> -> vector<5x512xf32>
    %50 = arith.addf %47, %49 : vector<5x512xf32>
    %51 = vector.extract_strided_slice %45 {offsets = [2, 0], sizes = [5, 256], strides = [1, 1]} : vector<7x256xbf16> to vector<5x256xbf16>
    %cst_33 = arith.constant dense<0.000000e+00> : vector<5x512xf32>
    %52 = tpu.matmul %51, %4, %cst_33 {dimension_numbers = #tpu.dot_dimension_numbers<[1], [0], [0], [1], [0, 0, 1, 1], [], []>} : vector<5x256xbf16>, vector<256x512xbf16>, vector<5x512xf32> -> vector<5x512xf32>
    %53 = arith.addf %50, %52 : vector<5x512xf32>
    %54 = vector.extract_strided_slice %53 {offsets = [0, 0], sizes = [5, 128], strides = [1, 1]} : vector<5x512xf32> to vector<5x128xf32>
    %55 = vector.extract_strided_slice %53 {offsets = [0, 128], sizes = [5, 128], strides = [1, 1]} : vector<5x512xf32> to vector<5x128xf32>
    %56 = arith.maximumf %54, %55 : vector<5x128xf32>
    %57 = vector.extract_strided_slice %53 {offsets = [0, 256], sizes = [5, 128], strides = [1, 1]} : vector<5x512xf32> to vector<5x128xf32>
    %58 = vector.extract_strided_slice %53 {offsets = [0, 384], sizes = [5, 128], strides = [1, 1]} : vector<5x512xf32> to vector<5x128xf32>
    %59 = arith.maximumf %57, %58 : vector<5x128xf32>
    %60 = arith.maximumf %56, %59 : vector<5x128xf32>
    %61 = vector.broadcast %9 : vector<1x128xf32> to vector<5x128xf32>
    %62 = arith.addf %60, %61 : vector<5x128xf32>
    %cst_34 = arith.constant 0.000000e+00 : f32
    %63 = vector.broadcast %cst_34 : f32 to vector<5x128xf32>
    %64 = arith.maximumf %62, %63 : vector<5x128xf32>
    %65 = arith.truncf %64 : vector<5x128xf32> to vector<5x128xbf16>
    %66 = vector.extract_strided_slice %65 {offsets = [0, 0], sizes = [1, 128], strides = [1, 1]} : vector<5x128xbf16> to vector<1x128xbf16>
    %67 = vector.extract_strided_slice %65 {offsets = [1, 0], sizes = [1, 128], strides = [1, 1]} : vector<5x128xbf16> to vector<1x128xbf16>
    %68 = vector.extract_strided_slice %65 {offsets = [2, 0], sizes = [1, 128], strides = [1, 1]} : vector<5x128xbf16> to vector<1x128xbf16>
    %69 = vector.extract_strided_slice %65 {offsets = [3, 0], sizes = [1, 128], strides = [1, 1]} : vector<5x128xbf16> to vector<1x128xbf16>
    %70 = vector.extract_strided_slice %65 {offsets = [4, 0], sizes = [1, 128], strides = [1, 1]} : vector<5x128xbf16> to vector<1x128xbf16>
    %71 = tpu.concatenate %66, %67, %68, %69, %70 in 1 : vector<1x128xbf16>, vector<1x128xbf16>, vector<1x128xbf16>, vector<1x128xbf16>, vector<1x128xbf16> -> vector<1x640xbf16>
    %cst_35 = arith.constant dense<0.000000e+00> : vector<1x128xf32>
    %72 = tpu.matmul %71, %5, %cst_35 {dimension_numbers = #tpu.dot_dimension_numbers<[1], [0], [0], [1], [0, 0, 1, 1], [], []>} : vector<1x640xbf16>, vector<640x128xbf16>, vector<1x128xf32> -> vector<1x128xf32>
    %73 = arith.addf %72, %10 : vector<1x128xf32>
    %cst_36 = arith.constant 0.000000e+00 : f32
    %74 = vector.broadcast %cst_36 : f32 to vector<1x128xf32>
    %75 = arith.maximumf %73, %74 : vector<1x128xf32>
    %76 = arith.truncf %75 : vector<1x128xf32> to vector<1x128xbf16>
    %cst_37 = arith.constant dense<0.000000e+00> : vector<1x128xf32>
    %77 = tpu.matmul %76, %6, %cst_37 {dimension_numbers = #tpu.dot_dimension_numbers<[1], [0], [0], [1], [0, 0, 1, 1], [], []>} : vector<1x128xbf16>, vector<128x128xbf16>, vector<1x128xf32> -> vector<1x128xf32>
    %78 = arith.addf %77, %11 : vector<1x128xf32>
    %cst_38 = arith.constant 0.000000e+00 : f32
    %79 = vector.broadcast %cst_38 : f32 to vector<1x128xf32>
    %80 = arith.maximumf %78, %79 : vector<1x128xf32>
    %81 = arith.truncf %80 : vector<1x128xf32> to vector<1x128xbf16>
    %cst_39 = arith.constant dense<0.000000e+00> : vector<1x128xf32>
    %82 = tpu.matmul %81, %7, %cst_39 {dimension_numbers = #tpu.dot_dimension_numbers<[1], [0], [0], [1], [0, 0, 1, 1], [], []>} : vector<1x128xbf16>, vector<128x128xbf16>, vector<1x128xf32> -> vector<1x128xf32>
    %83 = arith.addf %82, %12 : vector<1x128xf32>
    %84 = arith.negf %83 : vector<1x128xf32>
    %85 = math.exp %84 : vector<1x128xf32>
    %cst_40 = arith.constant 1.000000e+00 : f32
    %86 = vector.broadcast %cst_40 : f32 to vector<1x128xf32>
    %87 = arith.addf %86, %85 : vector<1x128xf32>
    %88 = arith.divf %86, %87 : vector<1x128xf32>
    %c0_41 = arith.constant 0 : index
    %c0_42 = arith.constant 0 : index
    %c0_43 = arith.constant 0 : index
    %89 = vector.load %arg15[%c0_41, %c0_42, %c0_43] : memref<1x1x128xf32, #tpu.memory_space<vmem>>, vector<1x1x128xf32>
    %90 = vector.shape_cast %89 : vector<1x1x128xf32> to vector<1x128xf32>
    %91 = vector.shape_cast %88 : vector<1x128xf32> to vector<1x1x128xf32>
    tpu.vector_store %arg15[%c0_41, %c0_42, %c0_43], %91 {strides = array<i32>} : memref<1x1x128xf32, #tpu.memory_space<vmem>>, vector<1x1x128xf32>,
    return
  }
  func.func @transform_0(%arg0: i32) -> (i32, i32, i32) {
    %c0_i32 = arith.constant 0 : i32
    %c0_i32_0 = arith.constant 0 : i32
    %c0_i32_1 = arith.constant 0 : i32
    return %arg0, %c0_i32, %c0_i32_0 : i32, i32, i32
  }
  func.func @transform_1(%arg0: i32) -> (i32, i32) {
    %c0_i32 = arith.constant 0 : i32
    %c0_i32_0 = arith.constant 0 : i32
    %c0_i32_1 = arith.constant 0 : i32
    return %c0_i32, %c0_i32_0 : i32, i32
  }
  func.func @transform_2(%arg0: i32) -> (i32, i32) {
    %c0_i32 = arith.constant 0 : i32
    %c0_i32_0 = arith.constant 0 : i32
    %c0_i32_1 = arith.constant 0 : i32
    return %c0_i32, %c0_i32_0 : i32, i32
  }
  func.func @transform_3(%arg0: i32) -> (i32, i32) {
    %c0_i32 = arith.constant 0 : i32
    %c0_i32_0 = arith.constant 0 : i32
    %c0_i32_1 = arith.constant 0 : i32
    return %c0_i32, %c0_i32_0 : i32, i32
  }
  func.func @transform_4(%arg0: i32) -> (i32, i32) {
    %c0_i32 = arith.constant 0 : i32
    %c0_i32_0 = arith.constant 0 : i32
    %c0_i32_1 = arith.constant 0 : i32
    return %c0_i32, %c0_i32_0 : i32, i32
  }
  func.func @transform_5(%arg0: i32) -> (i32, i32) {
    %c0_i32 = arith.constant 0 : i32
    %c0_i32_0 = arith.constant 0 : i32
    %c0_i32_1 = arith.constant 0 : i32
    return %c0_i32, %c0_i32_0 : i32, i32
  }
  func.func @transform_6(%arg0: i32) -> (i32, i32) {
    %c0_i32 = arith.constant 0 : i32
    %c0_i32_0 = arith.constant 0 : i32
    %c0_i32_1 = arith.constant 0 : i32
    return %c0_i32, %c0_i32_0 : i32, i32
  }
  func.func @transform_7(%arg0: i32) -> (i32, i32) {
    %c0_i32 = arith.constant 0 : i32
    %c0_i32_0 = arith.constant 0 : i32
    %c0_i32_1 = arith.constant 0 : i32
    return %c0_i32, %c0_i32_0 : i32, i32
  }
  func.func @transform_8(%arg0: i32) -> (i32, i32) {
    %c0_i32 = arith.constant 0 : i32
    %c0_i32_0 = arith.constant 0 : i32
    %c0_i32_1 = arith.constant 0 : i32
    return %c0_i32, %c0_i32_0 : i32, i32
  }
  func.func @transform_9(%arg0: i32) -> (i32, i32) {
    %c0_i32 = arith.constant 0 : i32
    %c0_i32_0 = arith.constant 0 : i32
    %c0_i32_1 = arith.constant 0 : i32
    return %c0_i32, %c0_i32_0 : i32, i32
  }
  func.func @transform_10(%arg0: i32) -> (i32, i32) {
    %c0_i32 = arith.constant 0 : i32
    %c0_i32_0 = arith.constant 0 : i32
    %c0_i32_1 = arith.constant 0 : i32
    return %c0_i32, %c0_i32_0 : i32, i32
  }
  func.func @transform_11(%arg0: i32) -> (i32, i32) {
    %c0_i32 = arith.constant 0 : i32
    %c0_i32_0 = arith.constant 0 : i32
    %c0_i32_1 = arith.constant 0 : i32
    return %c0_i32, %c0_i32_0 : i32, i32
  }
  func.func @transform_12(%arg0: i32) -> (i32, i32) {
    %c0_i32 = arith.constant 0 : i32
    %c0_i32_0 = arith.constant 0 : i32
    %c0_i32_1 = arith.constant 0 : i32
    return %c0_i32, %c0_i32_0 : i32, i32
  }
  func.func @transform_13(%arg0: i32) -> (i32, i32) {
    %c0_i32 = arith.constant 0 : i32
    %c0_i32_0 = arith.constant 0 : i32
    %c0_i32_1 = arith.constant 0 : i32
    return %c0_i32, %c0_i32_0 : i32, i32
  }
  func.func @transform_14(%arg0: i32) -> (i32, i32, i32) {
    %c0_i32 = arith.constant 0 : i32
    %c0_i32_0 = arith.constant 0 : i32
    %c0_i32_1 = arith.constant 0 : i32
    return %arg0, %c0_i32, %c0_i32_0 : i32, i32, i32
  }
}

</mosaic_0001>

<llo_original>
// kernel: net_forward.1
$region0: #{net_forward.1}
  #allocation0 [shape = 'u32[]', space=smem, size = 0x4, offset = 0x4, fixed_abs, tag = 'smem constant byte address 0x4 - core index']
  #allocation1 [shape = 'u32[144,128]{1,0:T(1,128)}', space=vmem, size = 0x12000, scoped, tag = 'internal scratch']
  %s0 = inlined_call_operand.vmem [shape: bf16[4,8,384], index: 0, kind: input, shape index: {}]
  %s1 = inlined_call_operand.vmem [shape: bf16[384,1024], index: 1, kind: input, shape index: {}]
  %s2 = inlined_call_operand.vmem [shape: bf16[384,1024], index: 2, kind: input, shape index: {}]
  %s3 = inlined_call_operand.vmem [shape: f32[1,128], index: 3, kind: input, shape index: {}]
  %s4 = inlined_call_operand.vmem [shape: bf16[256,512], index: 4, kind: input, shape index: {}]
  %s5 = inlined_call_operand.vmem [shape: bf16[256,512], index: 5, kind: input, shape index: {}]
  %s6 = inlined_call_operand.vmem [shape: bf16[256,512], index: 6, kind: input, shape index: {}]
  %s7 = inlined_call_operand.vmem [shape: f32[1,128], index: 7, kind: input, shape index: {}]
  %s8 = inlined_call_operand.hbm [shape: bf16[640,128], index: 8, kind: input, shape index: {}]
  %s9 = inlined_call_operand.vmem [shape: f32[1,128], index: 9, kind: input, shape index: {}]
  %s10 = inlined_call_operand.vmem [shape: bf16[128,128], index: 10, kind: input, shape index: {}]
  %s11 = inlined_call_operand.vmem [shape: f32[1,128], index: 11, kind: input, shape index: {}]
  %s12 = inlined_call_operand.vmem [shape: bf16[128,128], index: 12, kind: input, shape index: {}]
  %s13 = inlined_call_operand.vmem [shape: f32[1,128], index: 13, kind: input, shape index: {}]
  %s14 = inlined_call_operand.vmem [shape: f32[4,1,128], index: 14, kind: output, shape index: {}]
  %s15 = sld [smem:[#allocation0]]
  $region93: #{net_forward.1} parent=0
    _
  %s17 = ssub.s32 1, %s15
  %s18 = scalar_select 0, %s17, %s15
  $region1: #{net_forward.1} parent=0
    #allocation2 [shape = 'u8[163840]{0}', space=vmem, size = 0x28000, scoped, tag = 'input window, operand 8, single buffered']
    #allocation3 [shape = 's32[2]{0}', space=sflag, size = 0x8, scoped, tag = 'scoped memory for net_forward.1']
    %19 = vsyncpa [#allocation3], 0
    loop: start=0, step=1, limit=6
    $region2: #{net_forward.1} parent=1 // loop_pre_header
      _
    $region3: #{net_forward.1} parent=1 // loop_header
      %s21 = sphi 0, %s25
      %p22 = scmp.ge.s32.totalorder %s21, 6
      %s31 = sphi 0, %s33
      %s34 = sphi 0, %s31
      %s35 = sphi 0, %s34
      %s51 = sphi 0, %s35
      %s55 = sphi 0, %s55
      %s57 = sphi 0, %s55
      %s58 = sphi 0, %s57
      %s72 = sphi 0, %s58
      %s76 = sphi 0, %s76
      %s78 = sphi 0, %s76
      %s79 = sphi 0, %s78
      %s93 = sphi 0, %s79
      %s97 = sphi 0, %s97
      %s99 = sphi 0, %s97
      %s100 = sphi 0, %s99
      %s114 = sphi 0, %s100
      %s118 = sphi 0, %s118
      %s120 = sphi 0, %s118
      %s121 = sphi 0, %s120
      %s135 = sphi 0, %s121
      %s139 = sphi 0, %s139
      %s141 = sphi 0, %s139
      %s142 = sphi 0, %s141
      %s156 = sphi 0, %s142
      %s160 = sphi 0, %s160
      %s162 = sphi 0, %s160
      %s163 = sphi 0, %s162
      %s177 = sphi 0, %s163
      %s181 = sphi 0, %s181
      %s183 = sphi 0, %s181
      %s184 = sphi 0, %s183
      %s198 = sphi 0, %s184
      %s202 = sphi 0, %s202
      %s204 = sphi 0, %s202
      %s205 = sphi 0, %s204
      %s219 = sphi 0, %s205
      %s223 = sphi 0, %s223
      %s225 = sphi 0, %s223
      %s226 = sphi 0, %s225
      %s240 = sphi 0, %s226
      %s244 = sphi 0, %s244
      %s246 = sphi 0, %s244
      %s247 = sphi 0, %s246
      %s261 = sphi 0, %s247
      %s265 = sphi 0, %s265
      %s267 = sphi 0, %s265
      %s268 = sphi 0, %s267
      %s282 = sphi 0, %s268
      %s286 = sphi 0, %s286
      %s288 = sphi 0, %s286
      %s289 = sphi 0, %s288
      %s303 = sphi 0, %s289
      %s307 = sphi 0, %s307
      %s309 = sphi 0, %s307
      %s310 = sphi 0, %s309
      %s324 = sphi 0, %s310
      %s330 = sphi 0, %s332
      %s333 = sphi 0, %s330
      %s334 = sphi 0, %s333
      %s350 = sphi 0, %s334
    $region4: #{net_forward.1} parent=1 // loop_header_branch
      %24 = sbr.rel (%p22) target = $region8
    $region5: #{net_forward.1} parent=1 // loop_body
      %s26 = ssub.s32 %s21, 1
      %s27 = ssub.s32 %s21, 2
      %s28 = sadd.s32 %s21, 1
      %s29 = ssub.s32 %s21, %s28
      %p30 = scmp.eq.s32.totalorder %s29, 0
      %s32 = sadd.s32 %s31, 1
      %s33 = scalar_select %p30, %s31, %s32
      %p36 = pneg %p30
      %p37 = scmp.eq.s32.totalorder %s21, 3
      %p38 = por %p36, %p37
      %p39 = scmp.ne.s32.totalorder %s31, %s34
      %p40 = scmp.eq.s32.totalorder %s21, 0
      %p41 = por %p39, %p40
      %p42 = scmp.ne.s32.totalorder %s31, %s34
      %p43 = scmp.eq.s32.totalorder %s26, 3
      %p44 = por %p42, %p43
      %p45 = scmp.ne.s32.totalorder %s34, %s35
      %p46 = scmp.eq.s32.totalorder %s26, 0
      %p47 = por %p45, %p46
      %p48 = scmp.ne.s32.totalorder %s34, %s35
      %p49 = scmp.eq.s32.totalorder %s27, 3
      %p50 = por %p48, %p49
      %p52 = scmp.ne.s32.totalorder %s35, %s51
      %p53 = scmp.eq.s32.totalorder %s27, 0
      %p54 = por %p52, %p53
      %s56 = sadd.s32 %s55, 1
      %p59 = scmp.eq.s32.totalorder %s21, 3
      %p60 = scmp.ne.s32.totalorder %s55, %s57
      %p61 = scmp.eq.s32.totalorder %s21, 0
      %p62 = por %p60, %p61
      %p63 = scmp.ne.s32.totalorder %s55, %s57
      %p64 = scmp.eq.s32.totalorder %s26, 3
      %p65 = por %p63, %p64
      %p66 = scmp.ne.s32.totalorder %s57, %s58
      %p67 = scmp.eq.s32.totalorder %s26, 0
      %p68 = por %p66, %p67
      %p69 = scmp.ne.s32.totalorder %s57, %s58
      %p70 = scmp.eq.s32.totalorder %s27, 3
      %p71 = por %p69, %p70
      %p73 = scmp.ne.s32.totalorder %s58, %s72
      %p74 = scmp.eq.s32.totalorder %s27, 0
      %p75 = por %p73, %p74
      %s77 = sadd.s32 %s76, 1
      %p80 = scmp.eq.s32.totalorder %s21, 3
      %p81 = scmp.ne.s32.totalorder %s76, %s78
      %p82 = scmp.eq.s32.totalorder %s21, 0
      %p83 = por %p81, %p82
      %p84 = scmp.ne.s32.totalorder %s76, %s78
      %p85 = scmp.eq.s32.totalorder %s26, 3
      %p86 = por %p84, %p85
      %p87 = scmp.ne.s32.totalorder %s78, %s79
      %p88 = scmp.eq.s32.totalorder %s26, 0
      %p89 = por %p87, %p88
      %p90 = scmp.ne.s32.totalorder %s78, %s79
      %p91 = scmp.eq.s32.totalorder %s27, 3
      %p92 = por %p90, %p91
      %p94 = scmp.ne.s32.totalorder %s79, %s93
      %p95 = scmp.eq.s32.totalorder %s27, 0
      %p96 = por %p94, %p95
      %s98 = sadd.s32 %s97, 1
      %p101 = scmp.eq.s32.totalorder %s21, 3
      %p102 = scmp.ne.s32.totalorder %s97, %s99
      %p103 = scmp.eq.s32.totalorder %s21, 0
      %p104 = por %p102, %p103
      %p105 = scmp.ne.s32.totalorder %s97, %s99
      %p106 = scmp.eq.s32.totalorder %s26, 3
      %p107 = por %p105, %p106
      %p108 = scmp.ne.s32.totalorder %s99, %s100
      %p109 = scmp.eq.s32.totalorder %s26, 0
      %p110 = por %p108, %p109
      %p111 = scmp.ne.s32.totalorder %s99, %s100
      %p112 = scmp.eq.s32.totalorder %s27, 3
      %p113 = por %p111, %p112
      %p115 = scmp.ne.s32.totalorder %s100, %s114
      %p116 = scmp.eq.s32.totalorder %s27, 0
      %p117 = por %p115, %p116
      %s119 = sadd.s32 %s118, 1
      %p122 = scmp.eq.s32.totalorder %s21, 3
      %p123 = scmp.ne.s32.totalorder %s118, %s120
      %p124 = scmp.eq.s32.totalorder %s21, 0
      %p125 = por %p123, %p124
      %p126 = scmp.ne.s32.totalorder %s118, %s120
      %p127 = scmp.eq.s32.totalorder %s26, 3
      %p128 = por %p126, %p127
      %p129 = scmp.ne.s32.totalorder %s120, %s121
      %p130 = scmp.eq.s32.totalorder %s26, 0
      %p131 = por %p129, %p130
      %p132 = scmp.ne.s32.totalorder %s120, %s121
      %p133 = scmp.eq.s32.totalorder %s27, 3
      %p134 = por %p132, %p133
      %p136 = scmp.ne.s32.totalorder %s121, %s135
      %p137 = scmp.eq.s32.totalorder %s27, 0
      %p138 = por %p136, %p137
      %s140 = sadd.s32 %s139, 1
      %p143 = scmp.eq.s32.totalorder %s21, 3
      %p144 = scmp.ne.s32.totalorder %s139, %s141
      %p145 = scmp.eq.s32.totalorder %s21, 0
      %p146 = por %p144, %p145
      %p147 = scmp.ne.s32.totalorder %s139, %s141
      %p148 = scmp.eq.s32.totalorder %s26, 3
      %p149 = por %p147, %p148
      %p150 = scmp.ne.s32.totalorder %s141, %s142
      %p151 = scmp.eq.s32.totalorder %s26, 0
      %p152 = por %p150, %p151
      %p153 = scmp.ne.s32.totalorder %s141, %s142
      %p154 = scmp.eq.s32.totalorder %s27, 3
      %p155 = por %p153, %p154
      %p157 = scmp.ne.s32.totalorder %s142, %s156
      %p158 = scmp.eq.s32.totalorder %s27, 0
      %p159 = por %p157, %p158
      %s161 = sadd.s32 %s160, 1
      %p164 = scmp.eq.s32.totalorder %s21, 3
      %p165 = scmp.ne.s32.totalorder %s160, %s162
      %p166 = scmp.eq.s32.totalorder %s21, 0
      %p167 = por %p165, %p166
      %p168 = scmp.ne.s32.totalorder %s160, %s162
      %p169 = scmp.eq.s32.totalorder %s26, 3
      %p170 = por %p168, %p169
      %p171 = scmp.ne.s32.totalorder %s162, %s163
      %p172 = scmp.eq.s32.totalorder %s26, 0
      %p173 = por %p171, %p172
      %p174 = scmp.ne.s32.totalorder %s162, %s163
      %p175 = scmp.eq.s32.totalorder %s27, 3
      %p176 = por %p174, %p175
      %p178 = scmp.ne.s32.totalorder %s163, %s177
      %p179 = scmp.eq.s32.totalorder %s27, 0
      %p180 = por %p178, %p179
      %s182 = sadd.s32 %s181, 1
      %p185 = scmp.eq.s32.totalorder %s21, 3
      %p186 = scmp.ne.s32.totalorder %s181, %s183
      %p187 = scmp.eq.s32.totalorder %s21, 0
      %p188 = por %p186, %p187
      %p189 = scmp.ne.s32.totalorder %s181, %s183
      %p190 = scmp.eq.s32.totalorder %s26, 3
      %p191 = por %p189, %p190
      %p192 = scmp.ne.s32.totalorder %s183, %s184
      %p193 = scmp.eq.s32.totalorder %s26, 0
      %p194 = por %p192, %p193
      %p195 = scmp.ne.s32.totalorder %s183, %s184
      %p196 = scmp.eq.s32.totalorder %s27, 3
      %p197 = por %p195, %p196
      %p199 = scmp.ne.s32.totalorder %s184, %s198
      %p200 = scmp.eq.s32.totalorder %s27, 0
      %p201 = por %p199, %p200
      %s203 = sadd.s32 %s202, 1
      %p206 = scmp.eq.s32.totalorder %s21, 3
      %p207 = scmp.ne.s32.totalorder %s202, %s204
      %p208 = scmp.eq.s32.totalorder %s21, 0
      %p209 = por %p207, %p208
      %p210 = scmp.ne.s32.totalorder %s202, %s204
      %p211 = scmp.eq.s32.totalorder %s26, 3
      %p212 = por %p210, %p211
      %p213 = scmp.ne.s32.totalorder %s204, %s205
      %p214 = scmp.eq.s32.totalorder %s26, 0
      %p215 = por %p213, %p214
      %p216 = scmp.ne.s32.totalorder %s204, %s205
      %p217 = scmp.eq.s32.totalorder %s27, 3
      %p218 = por %p216, %p217
      %p220 = scmp.ne.s32.totalorder %s205, %s219
      %p221 = scmp.eq.s32.totalorder %s27, 0
      %p222 = por %p220, %p221
      %s224 = sadd.s32 %s223, 1
      %p227 = scmp.eq.s32.totalorder %s21, 3
      %p228 = scmp.ne.s32.totalorder %s223, %s225
      %p229 = scmp.eq.s32.totalorder %s21, 0
      %p230 = por %p228, %p229
      %p231 = scmp.ne.s32.totalorder %s223, %s225
      %p232 = scmp.eq.s32.totalorder %s26, 3
      %p233 = por %p231, %p232
      %p234 = scmp.ne.s32.totalorder %s225, %s226
      %p235 = scmp.eq.s32.totalorder %s26, 0
      %p236 = por %p234, %p235
      %p237 = scmp.ne.s32.totalorder %s225, %s226
      %p238 = scmp.eq.s32.totalorder %s27, 3
      %p239 = por %p237, %p238
      %p241 = scmp.ne.s32.totalorder %s226, %s240
      %p242 = scmp.eq.s32.totalorder %s27, 0
      %p243 = por %p241, %p242
      %s245 = sadd.s32 %s244, 1
      %p248 = scmp.eq.s32.totalorder %s21, 3
      %p249 = scmp.ne.s32.totalorder %s244, %s246
      %p250 = scmp.eq.s32.totalorder %s21, 0
      %p251 = por %p249, %p250
      %p252 = scmp.ne.s32.totalorder %s244, %s246
      %p253 = scmp.eq.s32.totalorder %s26, 3
      %p254 = por %p252, %p253
      %p255 = scmp.ne.s32.totalorder %s246, %s247
      %p256 = scmp.eq.s32.totalorder %s26, 0
      %p257 = por %p255, %p256
      %p258 = scmp.ne.s32.totalorder %s246, %s247
      %p259 = scmp.eq.s32.totalorder %s27, 3
      %p260 = por %p258, %p259
      %p262 = scmp.ne.s32.totalorder %s247, %s261
      %p263 = scmp.eq.s32.totalorder %s27, 0
      %p264 = por %p262, %p263
      %s266 = sadd.s32 %s265, 1
      %p269 = scmp.eq.s32.totalorder %s21, 3
      %p270 = scmp.ne.s32.totalorder %s265, %s267
      %p271 = scmp.eq.s32.totalorder %s21, 0
      %p272 = por %p270, %p271
      %p273 = scmp.ne.s32.totalorder %s265, %s267
      %p274 = scmp.eq.s32.totalorder %s26, 3
      %p275 = por %p273, %p274
      %p276 = scmp.ne.s32.totalorder %s267, %s268
      %p277 = scmp.eq.s32.totalorder %s26, 0
      %p278 = por %p276, %p277
      %p279 = scmp.ne.s32.totalorder %s267, %s268
      %p280 = scmp.eq.s32.totalorder %s27, 3
      %p281 = por %p279, %p280
      %p283 = scmp.ne.s32.totalorder %s268, %s282
      %p284 = scmp.eq.s32.totalorder %s27, 0
      %p285 = por %p283, %p284
      %s287 = sadd.s32 %s286, 1
      %p290 = scmp.eq.s32.totalorder %s21, 3
      %p291 = scmp.ne.s32.totalorder %s286, %s288
      %p292 = scmp.eq.s32.totalorder %s21, 0
      %p293 = por %p291, %p292
      %p294 = scmp.ne.s32.totalorder %s286, %s288
      %p295 = scmp.eq.s32.totalorder %s26, 3
      %p296 = por %p294, %p295
      %p297 = scmp.ne.s32.totalorder %s288, %s289
      %p298 = scmp.eq.s32.totalorder %s26, 0
      %p299 = por %p297, %p298
      %p300 = scmp.ne.s32.totalorder %s288, %s289
      %p301 = scmp.eq.s32.totalorder %s27, 3
      %p302 = por %p300, %p301
      %p304 = scmp.ne.s32.totalorder %s289, %s303
      %p305 = scmp.eq.s32.totalorder %s27, 0
      %p306 = por %p304, %p305
      %s308 = sadd.s32 %s307, 1
      %p311 = scmp.eq.s32.totalorder %s21, 3
      %p312 = scmp.ne.s32.totalorder %s307, %s309
      %p313 = scmp.eq.s32.totalorder %s21, 0
      %p314 = por %p312, %p313
      %p315 = scmp.ne.s32.totalorder %s307, %s309
      %p316 = scmp.eq.s32.totalorder %s26, 3
      %p317 = por %p315, %p316
      %p318 = scmp.ne.s32.totalorder %s309, %s310
      %p319 = scmp.eq.s32.totalorder %s26, 0
      %p320 = por %p318, %p319
      %p321 = scmp.ne.s32.totalorder %s309, %s310
      %p322 = scmp.eq.s32.totalorder %s27, 3
      %p323 = por %p321, %p322
      %p325 = scmp.ne.s32.totalorder %s310, %s324
      %p326 = scmp.eq.s32.totalorder %s27, 0
      %p327 = por %p325, %p326
      %s328 = ssub.s32 %s21, %s28
      %p329 = scmp.eq.s32.totalorder %s328, 0
      %s331 = sadd.s32 %s330, 1
      %s332 = scalar_select %p329, %s330, %s331
      %p335 = pneg %p329
      %p336 = scmp.eq.s32.totalorder %s21, 3
      %p337 = por %p335, %p336
      %p338 = scmp.ne.s32.totalorder %s330, %s333
      %p339 = scmp.eq.s32.totalorder %s21, 0
      %p340 = por %p338, %p339
      %p341 = scmp.ne.s32.totalorder %s330, %s333
      %p342 = scmp.eq.s32.totalorder %s26, 3
      %p343 = por %p341, %p342
      %p344 = scmp.ne.s32.totalorder %s333, %s334
      %p345 = scmp.eq.s32.totalorder %s26, 0
      %p346 = por %p344, %p345
      %p347 = scmp.ne.s32.totalorder %s333, %s334
      %p348 = scmp.eq.s32.totalorder %s27, 3
      %p349 = por %p347, %p348
      %p351 = scmp.ne.s32.totalorder %s334, %s350
      %p352 = scmp.eq.s32.totalorder %s27, 0
      %p353 = por %p351, %p352
      %p354 = scmp.le.s32.totalorder 1, %s21
      %p355 = scmp.lt.s32.totalorder %s21, 5
      %p356 = pnand %p354, %p355
      %p357 = pneg %p356
      // Predicated region
      $region9: #{net_forward.1} parent=5 // pred_check
        _
      $region10: #{net_forward.1} parent=5 // pred_check_branch
        %359 = sbr.rel (%p356) target = $region12
      $region11: #{net_forward.1} parent=5 // pred_region
        %s360 = ssub.s32 %s21, 1
        // Predicated region
        $region13: #{net_forward.1} parent=11 // pred_check
          %p361 = pneg %p68
        $region14: #{net_forward.1} parent=11 // pred_check_branch
          %363 = sbr.rel (%p361) target = $region16
        $region15: #{net_forward.1} parent=11 // pred_region
          _
        $region16: #{net_forward.1} parent=11 // pred_fallthru
          _
        // Predicated region
        $region17: #{net_forward.1} parent=11 // pred_check
          %p364 = pneg %p89
        $region18: #{net_forward.1} parent=11 // pred_check_branch
          %366 = sbr.rel (%p364) target = $region20
        $region19: #{net_forward.1} parent=11 // pred_region
          _
        $region20: #{net_forward.1} parent=11 // pred_fallthru
          _
        // Predicated region
        $region21: #{net_forward.1} parent=11 // pred_check
          %p367 = pneg %p110
        $region22: #{net_forward.1} parent=11 // pred_check_branch
          %369 = sbr.rel (%p367) target = $region24
        $region23: #{net_forward.1} parent=11 // pred_region
          _
        $region24: #{net_forward.1} parent=11 // pred_fallthru
          _
        // Predicated region
        $region25: #{net_forward.1} parent=11 // pred_check
          %p370 = pneg %p131
        $region26: #{net_forward.1} parent=11 // pred_check_branch
          %372 = sbr.rel (%p370) target = $region28
        $region27: #{net_forward.1} parent=11 // pred_region
          _
        $region28: #{net_forward.1} parent=11 // pred_fallthru
          _
        // Predicated region
        $region29: #{net_forward.1} parent=11 // pred_check
          %p373 = pneg %p152
        $region30: #{net_forward.1} parent=11 // pred_check_branch
          %375 = sbr.rel (%p373) target = $region32
        $region31: #{net_forward.1} parent=11 // pred_region
          _
        $region32: #{net_forward.1} parent=11 // pred_fallthru
          _
        // Predicated region
        $region33: #{net_forward.1} parent=11 // pred_check
          %p376 = pneg %p173
        $region34: #{net_forward.1} parent=11 // pred_check_branch
          %378 = sbr.rel (%p376) target = $region36
        $region35: #{net_forward.1} parent=11 // pred_region
          _
        $region36: #{net_forward.1} parent=11 // pred_fallthru
          _
        // Predicated region
        $region37: #{net_forward.1} parent=11 // pred_check
          %p379 = pneg %p194
        $region38: #{net_forward.1} parent=11 // pred_check_branch
          %381 = sbr.rel (%p379) target = $region40
        $region39: #{net_forward.1} parent=11 // pred_region
          _
        $region40: #{net_forward.1} parent=11 // pred_fallthru
          _
        // Predicated region
        $region41: #{net_forward.1} parent=11 // pred_check
          %p382 = pneg %p215
        $region42: #{net_forward.1} parent=11 // pred_check_branch
          %384 = sbr.rel (%p382) target = $region44
        $region43: #{net_forward.1} parent=11 // pred_region
          %s386 = ssub.s32 5120, 5120
          %387 = vsyncadd [#allocation3], %s386
          %s388 = sshll.u32 [#allocation2], 4
          %s389 = int_to_ptr.vmem [resolvable:$true] %s388
          %394 = dma.hbm_to_vmem [thread:$0]  %s8, 5120, %s389, [#allocation3], 64, 64, 4
        $region44: #{net_forward.1} parent=11 // pred_fallthru
          _
        // Predicated region
        $region45: #{net_forward.1} parent=11 // pred_check
          %p395 = pneg %p236
        $region46: #{net_forward.1} parent=11 // pred_check_branch
          %397 = sbr.rel (%p395) target = $region48
        $region47: #{net_forward.1} parent=11 // pred_region
          _
        $region48: #{net_forward.1} parent=11 // pred_fallthru
          _
        // Predicated region
        $region49: #{net_forward.1} parent=11 // pred_check
          %p398 = pneg %p257
        $region50: #{net_forward.1} parent=11 // pred_check_branch
          %400 = sbr.rel (%p398) target = $region52
        $region51: #{net_forward.1} parent=11 // pred_region
          _
        $region52: #{net_forward.1} parent=11 // pred_fallthru
          _
        // Predicated region
        $region53: #{net_forward.1} parent=11 // pred_check
          %p401 = pneg %p278
        $region54: #{net_forward.1} parent=11 // pred_check_branch
          %403 = sbr.rel (%p401) target = $region56
        $region55: #{net_forward.1} parent=11 // pred_region
          _
        $region56: #{net_forward.1} parent=11 // pred_fallthru
          _
        // Predicated region
        $region57: #{net_forward.1} parent=11 // pred_check
          %p404 = pneg %p299
        $region58: #{net_forward.1} parent=11 // pred_check_branch
          %406 = sbr.rel (%p404) target = $region60
        $region59: #{net_forward.1} parent=11 // pred_region
          _
        $region60: #{net_forward.1} parent=11 // pred_fallthru
          _
        // Predicated region
        $region61: #{net_forward.1} parent=11 // pred_check
          %p407 = pneg %p320
        $region62: #{net_forward.1} parent=11 // pred_check_branch
          %409 = sbr.rel (%p407) target = $region64
        $region63: #{net_forward.1} parent=11 // pred_region
          _
        $region64: #{net_forward.1} parent=11 // pred_fallthru
          _
      $region12: #{net_forward.1} parent=5 // pred_fallthru
        _
      %p410 = scmp.lt.s32.totalorder %s21, 4
      // Predicated region
      $region65: #{net_forward.1} parent=5 // pred_check
        %p411 = pneg %p410
      $region66: #{net_forward.1} parent=5 // pred_check_branch
        %413 = sbr.rel (%p411) target = $region68
      $region67: #{net_forward.1} parent=5 // pred_region
        // Predicated region
        $region69: #{net_forward.1} parent=67 // pred_check
          %p414 = pneg %p41
        $region70: #{net_forward.1} parent=67 // pred_check_branch
          %416 = sbr.rel (%p414) target = $region72
        $region71: #{net_forward.1} parent=67 // pred_region
          %p417 = scmp.lt.s32.totalorder %s21, 3
          %s418 = scalar_select %p417, %s21, 3
          %s419 = smul.addr %s418, 3
          %s420 = smul.addr %s419, 4
          %s421 = scalar_lea.vmem %s0, %s420
        $region72: #{net_forward.1} parent=67 // pred_fallthru
          _
      $region68: #{net_forward.1} parent=5 // pred_fallthru
        _
      %p422 = scmp.le.s32.totalorder 1, %s21
      %p423 = scmp.lt.s32.totalorder %s21, 5
      %p424 = pnand %p422, %p423
      %p425 = pneg %p424
      // Predicated region
      $region73: #{net_forward.1} parent=5 // pred_check
        _
      $region74: #{net_forward.1} parent=5 // pred_check_branch
        %427 = sbr.rel (%p424) target = $region76
      $region75: #{net_forward.1} parent=5 // pred_region
        %s428 = ssub.s32 %s21, 1
        // Predicated region
        $region77: #{net_forward.1} parent=75 // pred_check
          %p429 = pneg %p215
        $region78: #{net_forward.1} parent=75 // pred_check_branch
          %431 = sbr.rel (%p429) target = $region80
        $region79: #{net_forward.1} parent=75 // pred_region
          %432 = dma.done [#allocation3], 5120
        $region80: #{net_forward.1} parent=75 // pred_fallthru
          _
        %p433 = scmp.lt.s32.totalorder %s26, 3
        %s434 = scalar_select %p433, %s26, 3
        %s435 = smul.addr %s434, 3
        %s436 = smul.addr %s435, 4
        %s437 = scalar_lea.vmem %s0, %s436
        %p438 = pneg %p47
        %p439 = pneg %p44
        %p440 = pneg %p68
        %p441 = pneg %p65
        %p442 = pneg %p89
        %p443 = pneg %p86
        %p444 = pneg %p110
        %p445 = pneg %p107
        %p446 = pneg %p131
        %p447 = pneg %p128
        %p448 = pneg %p152
        %p449 = pneg %p149
        %p450 = pneg %p173
        %p451 = pneg %p170
        %p452 = pneg %p194
        %p453 = pneg %p191
        %p454 = pneg %p215
        %p455 = pneg %p212
        %p456 = pneg %p236
        %p457 = pneg %p233
        %p458 = pneg %p257
        %p459 = pneg %p254
        %p460 = pneg %p278
        %p461 = pneg %p275
        %p462 = pneg %p299
        %p463 = pneg %p296
        %p464 = pneg %p320
        %p465 = pneg %p317
        %p466 = pneg %p346
        %p467 = pneg %p343
        %p468 = scmp.lt.s32.totalorder %s26, 3
        %s469 = scalar_select %p468, %s26, 3
        %s470 = scalar_lea.vmem %s14, %s469
        %p471 = scmp.lt.s32.totalorder %s26, 3
        %s472 = scalar_select %p471, %s26, 3
        %s473 = smul.addr %s472, 3
        %s474 = smul.addr %s473, 4
        %s475 = scalar_lea.vmem %s0, %s474
        %p476 = scmp.lt.s32.totalorder %s26, 3
        %s477 = scalar_select %p476, %s26, 3
        %s478 = scalar_lea.vmem %s14, %s477
        %v480 = vld [vmem:[%s1] sm:$0xff]
        %v481 = vld [vmem:[%s1 + $0x8] sm:$0xff]
        %v482 = vld [vmem:[%s1 + $0x10] sm:$0xff]
        %v483 = vld [vmem:[%s1 + $0x18] sm:$0xff]
        %v484 = vld [vmem:[%s1 + $0x20] sm:$0xff]
        %v485 = vld [vmem:[%s1 + $0x28] sm:$0xff]
        %v486 = vld [vmem:[%s1 + $0x30] sm:$0xff]
        %v487 = vld [vmem:[%s1 + $0x38] sm:$0xff]
        %v488 = vld [vmem:[%s1 + $0x40] sm:$0xff]
        %v489 = vld [vmem:[%s1 + $0x48] sm:$0xff]
        %v490 = vld [vmem:[%s1 + $0x50] sm:$0xff]
        %v491 = vld [vmem:[%s1 + $0x58] sm:$0xff]
        %v492 = vld [vmem:[%s1 + $0x60] sm:$0xff]
        %v493 = vld [vmem:[%s1 + $0x68] sm:$0xff]
        %v494 = vld [vmem:[%s1 + $0x70] sm:$0xff]
        %v495 = vld [vmem:[%s1 + $0x78] sm:$0xff]
        %v496 = vld [vmem:[%s1 + $0x80] sm:$0xff]
        %v497 = vld [vmem:[%s1 + $0x88] sm:$0xff]
        %v498 = vld [vmem:[%s1 + $0x90] sm:$0xff]
        %v499 = vld [vmem:[%s1 + $0x98] sm:$0xff]
        %v500 = vld [vmem:[%s1 + $0xa0] sm:$0xff]
        %v501 = vld [vmem:[%s1 + $0xa8] sm:$0xff]
        %v502 = vld [vmem:[%s1 + $0xb0] sm:$0xff]
        %v503 = vld [vmem:[%s1 + $0xb8] sm:$0xff]
        %v504 = vld [vmem:[%s1 + $0xc0] sm:$0xff]
        %v505 = vld [vmem:[%s1 + $0xc8] sm:$0xff]
        %v506 = vld [vmem:[%s1 + $0xd0] sm:$0xff]
        %v507 = vld [vmem:[%s1 + $0xd8] sm:$0xff]
        %v508 = vld [vmem:[%s1 + $0xe0] sm:$0xff]
        %v509 = vld [vmem:[%s1 + $0xe8] sm:$0xff]
        %v510 = vld [vmem:[%s1 + $0xf0] sm:$0xff]
        %v511 = vld [vmem:[%s1 + $0xf8] sm:$0xff]
        %v512 = vld [vmem:[%s1 + $0x100] sm:$0xff]
        %v513 = vld [vmem:[%s1 + $0x108] sm:$0xff]
        %v514 = vld [vmem:[%s1 + $0x110] sm:$0xff]
        %v515 = vld [vmem:[%s1 + $0x118] sm:$0xff]
        %v516 = vld [vmem:[%s1 + $0x120] sm:$0xff]
        %v517 = vld [vmem:[%s1 + $0x128] sm:$0xff]
        %v518 = vld [vmem:[%s1 + $0x130] sm:$0xff]
        %v519 = vld [vmem:[%s1 + $0x138] sm:$0xff]
        %v520 = vld [vmem:[%s1 + $0x140] sm:$0xff]
        %v521 = vld [vmem:[%s1 + $0x148] sm:$0xff]
        %v522 = vld [vmem:[%s1 + $0x150] sm:$0xff]
        %v523 = vld [vmem:[%s1 + $0x158] sm:$0xff]
        %v524 = vld [vmem:[%s1 + $0x160] sm:$0xff]
        %v525 = vld [vmem:[%s1 + $0x168] sm:$0xff]
        %v526 = vld [vmem:[%s1 + $0x170] sm:$0xff]
        %v527 = vld [vmem:[%s1 + $0x178] sm:$0xff]
        %v528 = vld [vmem:[%s1 + $0x180] sm:$0xff]
        %v529 = vld [vmem:[%s1 + $0x188] sm:$0xff]
        %v530 = vld [vmem:[%s1 + $0x190] sm:$0xff]
        %v531 = vld [vmem:[%s1 + $0x198] sm:$0xff]
        %v532 = vld [vmem:[%s1 + $0x1a0] sm:$0xff]
        %v533 = vld [vmem:[%s1 + $0x1a8] sm:$0xff]
        %v534 = vld [vmem:[%s1 + $0x1b0] sm:$0xff]
        %v535 = vld [vmem:[%s1 + $0x1b8] sm:$0xff]
        %v536 = vld [vmem:[%s1 + $0x1c0] sm:$0xff]
        %v537 = vld [vmem:[%s1 + $0x1c8] sm:$0xff]
        %v538 = vld [vmem:[%s1 + $0x1d0] sm:$0xff]
        %v539 = vld [vmem:[%s1 + $0x1d8] sm:$0xff]
        %v540 = vld [vmem:[%s1 + $0x1e0] sm:$0xff]
        %v541 = vld [vmem:[%s1 + $0x1e8] sm:$0xff]
        %v542 = vld [vmem:[%s1 + $0x1f0] sm:$0xff]
        %v543 = vld [vmem:[%s1 + $0x1f8] sm:$0xff]
        %v544 = vld [vmem:[%s1 + $0x200] sm:$0xff]
        %v545 = vld [vmem:[%s1 + $0x208] sm:$0xff]
        %v546 = vld [vmem:[%s1 + $0x210] sm:$0xff]
        %v547 = vld [vmem:[%s1 + $0x218] sm:$0xff]
        %v548 = vld [vmem:[%s1 + $0x220] sm:$0xff]
        %v549 = vld [vmem:[%s1 + $0x228] sm:$0xff]
        %v550 = vld [vmem:[%s1 + $0x230] sm:$0xff]
        %v551 = vld [vmem:[%s1 + $0x238] sm:$0xff]
        %v552 = vld [vmem:[%s1 + $0x240] sm:$0xff]
        %v553 = vld [vmem:[%s1 + $0x248] sm:$0xff]
        %v554 = vld [vmem:[%s1 + $0x250] sm:$0xff]
        %v555 = vld [vmem:[%s1 + $0x258] sm:$0xff]
        %v556 = vld [vmem:[%s1 + $0x260] sm:$0xff]
        %v557 = vld [vmem:[%s1 + $0x268] sm:$0xff]
        %v558 = vld [vmem:[%s1 + $0x270] sm:$0xff]
        %v559 = vld [vmem:[%s1 + $0x278] sm:$0xff]
        %v560 = vld [vmem:[%s1 + $0x280] sm:$0xff]
        %v561 = vld [vmem:[%s1 + $0x288] sm:$0xff]
        %v562 = vld [vmem:[%s1 + $0x290] sm:$0xff]
        %v563 = vld [vmem:[%s1 + $0x298] sm:$0xff]
        %v564 = vld [vmem:[%s1 + $0x2a0] sm:$0xff]
        %v565 = vld [vmem:[%s1 + $0x2a8] sm:$0xff]
        %v566 = vld [vmem:[%s1 + $0x2b0] sm:$0xff]
        %v567 = vld [vmem:[%s1 + $0x2b8] sm:$0xff]
        %v568 = vld [vmem:[%s1 + $0x2c0] sm:$0xff]
        %v569 = vld [vmem:[%s1 + $0x2c8] sm:$0xff]
        %v570 = vld [vmem:[%s1 + $0x2d0] sm:$0xff]
        %v571 = vld [vmem:[%s1 + $0x2d8] sm:$0xff]
        %v572 = vld [vmem:[%s1 + $0x2e0] sm:$0xff]
        %v573 = vld [vmem:[%s1 + $0x2e8] sm:$0xff]
        %v574 = vld [vmem:[%s1 + $0x2f0] sm:$0xff]
        %v575 = vld [vmem:[%s1 + $0x2f8] sm:$0xff]
        %v576 = vld [vmem:[%s1 + $0x300] sm:$0xff]
        %v577 = vld [vmem:[%s1 + $0x308] sm:$0xff]
        %v578 = vld [vmem:[%s1 + $0x310] sm:$0xff]
        %v579 = vld [vmem:[%s1 + $0x318] sm:$0xff]
        %v580 = vld [vmem:[%s1 + $0x320] sm:$0xff]
        %v581 = vld [vmem:[%s1 + $0x328] sm:$0xff]
        %v582 = vld [vmem:[%s1 + $0x330] sm:$0xff]
        %v583 = vld [vmem:[%s1 + $0x338] sm:$0xff]
        %v584 = vld [vmem:[%s1 + $0x340] sm:$0xff]
        %v585 = vld [vmem:[%s1 + $0x348] sm:$0xff]
        %v586 = vld [vmem:[%s1 + $0x350] sm:$0xff]
        %v587 = vld [vmem:[%s1 + $0x358] sm:$0xff]
        %v588 = vld [vmem:[%s1 + $0x360] sm:$0xff]
        %v589 = vld [vmem:[%s1 + $0x368] sm:$0xff]
        %v590 = vld [vmem:[%s1 + $0x370] sm:$0xff]
        %v591 = vld [vmem:[%s1 + $0x378] sm:$0xff]
        %v592 = vld [vmem:[%s1 + $0x380] sm:$0xff]
        %v593 = vld [vmem:[%s1 + $0x388] sm:$0xff]
        %v594 = vld [vmem:[%s1 + $0x390] sm:$0xff]
        %v595 = vld [vmem:[%s1 + $0x398] sm:$0xff]
        %v596 = vld [vmem:[%s1 + $0x3a0] sm:$0xff]
        %v597 = vld [vmem:[%s1 + $0x3a8] sm:$0xff]
        %v598 = vld [vmem:[%s1 + $0x3b0] sm:$0xff]
        %v599 = vld [vmem:[%s1 + $0x3b8] sm:$0xff]
        %v600 = vld [vmem:[%s1 + $0x3c0] sm:$0xff]
        %v601 = vld [vmem:[%s1 + $0x3c8] sm:$0xff]
        %v602 = vld [vmem:[%s1 + $0x3d0] sm:$0xff]
        %v603 = vld [vmem:[%s1 + $0x3d8] sm:$0xff]
        %v604 = vld [vmem:[%s1 + $0x3e0] sm:$0xff]
        %v605 = vld [vmem:[%s1 + $0x3e8] sm:$0xff]
        %v606 = vld [vmem:[%s1 + $0x3f0] sm:$0xff]
        %v607 = vld [vmem:[%s1 + $0x3f8] sm:$0xff]
        %v608 = vld [vmem:[%s1 + $0x400] sm:$0xff]
        %v609 = vld [vmem:[%s1 + $0x408] sm:$0xff]
        %v610 = vld [vmem:[%s1 + $0x410] sm:$0xff]
        %v611 = vld [vmem:[%s1 + $0x418] sm:$0xff]
        %v612 = vld [vmem:[%s1 + $0x420] sm:$0xff]
        %v613 = vld [vmem:[%s1 + $0x428] sm:$0xff]
        %v614 = vld [vmem:[%s1 + $0x430] sm:$0xff]
        %v615 = vld [vmem:[%s1 + $0x438] sm:$0xff]
        %v616 = vld [vmem:[%s1 + $0x440] sm:$0xff]
        %v617 = vld [vmem:[%s1 + $0x448] sm:$0xff]
        %v618 = vld [vmem:[%s1 + $0x450] sm:$0xff]
        %v619 = vld [vmem:[%s1 + $0x458] sm:$0xff]
        %v620 = vld [vmem:[%s1 + $0x460] sm:$0xff]
        %v621 = vld [vmem:[%s1 + $0x468] sm:$0xff]
        %v622 = vld [vmem:[%s1 + $0x470] sm:$0xff]
        %v623 = vld [vmem:[%s1 + $0x478] sm:$0xff]
        %v624 = vld [vmem:[%s1 + $0x480] sm:$0xff]
        %v625 = vld [vmem:[%s1 + $0x488] sm:$0xff]
        %v626 = vld [vmem:[%s1 + $0x490] sm:$0xff]
        %v627 = vld [vmem:[%s1 + $0x498] sm:$0xff]
        %v628 = vld [vmem:[%s1 + $0x4a0] sm:$0xff]
        %v629 = vld [vmem:[%s1 + $0x4a8] sm:$0xff]
        %v630 = vld [vmem:[%s1 + $0x4b0] sm:$0xff]
        %v631 = vld [vmem:[%s1 + $0x4b8] sm:$0xff]
        %v632 = vld [vmem:[%s1 + $0x4c0] sm:$0xff]
        %v633 = vld [vmem:[%s1 + $0x4c8] sm:$0xff]
        %v634 = vld [vmem:[%s1 + $0x4d0] sm:$0xff]
        %v635 = vld [vmem:[%s1 + $0x4d8] sm:$0xff]
        %v636 = vld [vmem:[%s1 + $0x4e0] sm:$0xff]
        %v637 = vld [vmem:[%s1 + $0x4e8] sm:$0xff]
        %v638 = vld [vmem:[%s1 + $0x4f0] sm:$0xff]
        %v639 = vld [vmem:[%s1 + $0x4f8] sm:$0xff]
        %v640 = vld [vmem:[%s1 + $0x500] sm:$0xff]
        %v641 = vld [vmem:[%s1 + $0x508] sm:$0xff]
        %v642 = vld [vmem:[%s1 + $0x510] sm:$0xff]
        %v643 = vld [vmem:[%s1 + $0x518] sm:$0xff]
        %v644 = vld [vmem:[%s1 + $0x520] sm:$0xff]
        %v645 = vld [vmem:[%s1 + $0x528] sm:$0xff]
        %v646 = vld [vmem:[%s1 + $0x530] sm:$0xff]
        %v647 = vld [vmem:[%s1 + $0x538] sm:$0xff]
        %v648 = vld [vmem:[%s1 + $0x540] sm:$0xff]
        %v649 = vld [vmem:[%s1 + $0x548] sm:$0xff]
        %v650 = vld [vmem:[%s1 + $0x550] sm:$0xff]
        %v651 = vld [vmem:[%s1 + $0x558] sm:$0xff]
        %v652 = vld [vmem:[%s1 + $0x560] sm:$0xff]
        %v653 = vld [vmem:[%s1 + $0x568] sm:$0xff]
        %v654 = vld [vmem:[%s1 + $0x570] sm:$0xff]
        %v655 = vld [vmem:[%s1 + $0x578] sm:$0xff]
        %v656 = vld [vmem:[%s1 + $0x580] sm:$0xff]
        %v657 = vld [vmem:[%s1 + $0x588] sm:$0xff]
        %v658 = vld [vmem:[%s1 + $0x590] sm:$0xff]
        %v659 = vld [vmem:[%s1 + $0x598] sm:$0xff]
        %v660 = vld [vmem:[%s1 + $0x5a0] sm:$0xff]
        %v661 = vld [vmem:[%s1 + $0x5a8] sm:$0xff]
        %v662 = vld [vmem:[%s1 + $0x5b0] sm:$0xff]
        %v663 = vld [vmem:[%s1 + $0x5b8] sm:$0xff]
        %v664 = vld [vmem:[%s1 + $0x5c0] sm:$0xff]
        %v665 = vld [vmem:[%s1 + $0x5c8] sm:$0xff]
        %v666 = vld [vmem:[%s1 + $0x5d0] sm:$0xff]
        %v667 = vld [vmem:[%s1 + $0x5d8] sm:$0xff]
        %v668 = vld [vmem:[%s1 + $0x5e0] sm:$0xff]
        %v669 = vld [vmem:[%s1 + $0x5e8] sm:$0xff]
        %v670 = vld [vmem:[%s1 + $0x5f0] sm:$0xff]
        %v671 = vld [vmem:[%s1 + $0x5f8] sm:$0xff]
        %v672 = vld [vmem:[%s2] sm:$0xff]
        %v673 = vld [vmem:[%s2 + $0x8] sm:$0xff]
        %v674 = vld [vmem:[%s2 + $0x10] sm:$0xff]
        %v675 = vld [vmem:[%s2 + $0x18] sm:$0xff]
        %v676 = vld [vmem:[%s2 + $0x20] sm:$0xff]
        %v677 = vld [vmem:[%s2 + $0x28] sm:$0xff]
        %v678 = vld [vmem:[%s2 + $0x30] sm:$0xff]
        %v679 = vld [vmem:[%s2 + $0x38] sm:$0xff]
        %v680 = vld [vmem:[%s2 + $0x40] sm:$0xff]
        %v681 = vld [vmem:[%s2 + $0x48] sm:$0xff]
        %v682 = vld [vmem:[%s2 + $0x50] sm:$0xff]
        %v683 = vld [vmem:[%s2 + $0x58] sm:$0xff]
        %v684 = vld [vmem:[%s2 + $0x60] sm:$0xff]
        %v685 = vld [vmem:[%s2 + $0x68] sm:$0xff]
        %v686 = vld [vmem:[%s2 + $0x70] sm:$0xff]
        %v687 = vld [vmem:[%s2 + $0x78] sm:$0xff]
        %v688 = vld [vmem:[%s2 + $0x80] sm:$0xff]
        %v689 = vld [vmem:[%s2 + $0x88] sm:$0xff]
        %v690 = vld [vmem:[%s2 + $0x90] sm:$0xff]
        %v691 = vld [vmem:[%s2 + $0x98] sm:$0xff]
        %v692 = vld [vmem:[%s2 + $0xa0] sm:$0xff]
        %v693 = vld [vmem:[%s2 + $0xa8] sm:$0xff]
        %v694 = vld [vmem:[%s2 + $0xb0] sm:$0xff]
        %v695 = vld [vmem:[%s2 + $0xb8] sm:$0xff]
        %v696 = vld [vmem:[%s2 + $0xc0] sm:$0xff]
        %v697 = vld [vmem:[%s2 + $0xc8] sm:$0xff]
        %v698 = vld [vmem:[%s2 + $0xd0] sm:$0xff]
        %v699 = vld [vmem:[%s2 + $0xd8] sm:$0xff]
        %v700 = vld [vmem:[%s2 + $0xe0] sm:$0xff]
        %v701 = vld [vmem:[%s2 + $0xe8] sm:$0xff]
        %v702 = vld [vmem:[%s2 + $0xf0] sm:$0xff]
        %v703 = vld [vmem:[%s2 + $0xf8] sm:$0xff]
        %v704 = vld [vmem:[%s2 + $0x100] sm:$0xff]
        %v705 = vld [vmem:[%s2 + $0x108] sm:$0xff]
        %v706 = vld [vmem:[%s2 + $0x110] sm:$0xff]
        %v707 = vld [vmem:[%s2 + $0x118] sm:$0xff]
        %v708 = vld [vmem:[%s2 + $0x120] sm:$0xff]
        %v709 = vld [vmem:[%s2 + $0x128] sm:$0xff]
        %v710 = vld [vmem:[%s2 + $0x130] sm:$0xff]
        %v711 = vld [vmem:[%s2 + $0x138] sm:$0xff]
        %v712 = vld [vmem:[%s2 + $0x140] sm:$0xff]
        %v713 = vld [vmem:[%s2 + $0x148] sm:$0xff]
        %v714 = vld [vmem:[%s2 + $0x150] sm:$0xff]
        %v715 = vld [vmem:[%s2 + $0x158] sm:$0xff]
        %v716 = vld [vmem:[%s2 + $0x160] sm:$0xff]
        %v717 = vld [vmem:[%s2 + $0x168] sm:$0xff]
        %v718 = vld [vmem:[%s2 + $0x170] sm:$0xff]
        %v719 = vld [vmem:[%s2 + $0x178] sm:$0xff]
        %v720 = vld [vmem:[%s2 + $0x180] sm:$0xff]
        %v721 = vld [vmem:[%s2 + $0x188] sm:$0xff]
        %v722 = vld [vmem:[%s2 + $0x190] sm:$0xff]
        %v723 = vld [vmem:[%s2 + $0x198] sm:$0xff]
        %v724 = vld [vmem:[%s2 + $0x1a0] sm:$0xff]
        %v725 = vld [vmem:[%s2 + $0x1a8] sm:$0xff]
        %v726 = vld [vmem:[%s2 + $0x1b0] sm:$0xff]
        %v727 = vld [vmem:[%s2 + $0x1b8] sm:$0xff]
        %v728 = vld [vmem:[%s2 + $0x1c0] sm:$0xff]
        %v729 = vld [vmem:[%s2 + $0x1c8] sm:$0xff]
        %v730 = vld [vmem:[%s2 + $0x1d0] sm:$0xff]
        %v731 = vld [vmem:[%s2 + $0x1d8] sm:$0xff]
        %v732 = vld [vmem:[%s2 + $0x1e0] sm:$0xff]
        %v733 = vld [vmem:[%s2 + $0x1e8] sm:$0xff]
        %v734 = vld [vmem:[%s2 + $0x1f0] sm:$0xff]
        %v735 = vld [vmem:[%s2 + $0x1f8] sm:$0xff]
        %v736 = vld [vmem:[%s2 + $0x200] sm:$0xff]
        %v737 = vld [vmem:[%s2 + $0x208] sm:$0xff]
        %v738 = vld [vmem:[%s2 + $0x210] sm:$0xff]
        %v739 = vld [vmem:[%s2 + $0x218] sm:$0xff]
        %v740 = vld [vmem:[%s2 + $0x220] sm:$0xff]
        %v741 = vld [vmem:[%s2 + $0x228] sm:$0xff]
        %v742 = vld [vmem:[%s2 + $0x230] sm:$0xff]
        %v743 = vld [vmem:[%s2 + $0x238] sm:$0xff]
        %v744 = vld [vmem:[%s2 + $0x240] sm:$0xff]
        %v745 = vld [vmem:[%s2 + $0x248] sm:$0xff]
        %v746 = vld [vmem:[%s2 + $0x250] sm:$0xff]
        %v747 = vld [vmem:[%s2 + $0x258] sm:$0xff]
        %v748 = vld [vmem:[%s2 + $0x260] sm:$0xff]
        %v749 = vld [vmem:[%s2 + $0x268] sm:$0xff]
        %v750 = vld [vmem:[%s2 + $0x270] sm:$0xff]
        %v751 = vld [vmem:[%s2 + $0x278] sm:$0xff]
        %v752 = vld [vmem:[%s2 + $0x280] sm:$0xff]
        %v753 = vld [vmem:[%s2 + $0x288] sm:$0xff]
        %v754 = vld [vmem:[%s2 + $0x290] sm:$0xff]
        %v755 = vld [vmem:[%s2 + $0x298] sm:$0xff]
        %v756 = vld [vmem:[%s2 + $0x2a0] sm:$0xff]
        %v757 = vld [vmem:[%s2 + $0x2a8] sm:$0xff]
        %v758 = vld [vmem:[%s2 + $0x2b0] sm:$0xff]
        %v759 = vld [vmem:[%s2 + $0x2b8] sm:$0xff]
        %v760 = vld [vmem:[%s2 + $0x2c0] sm:$0xff]
        %v761 = vld [vmem:[%s2 + $0x2c8] sm:$0xff]
        %v762 = vld [vmem:[%s2 + $0x2d0] sm:$0xff]
        %v763 = vld [vmem:[%s2 + $0x2d8] sm:$0xff]
        %v764 = vld [vmem:[%s2 + $0x2e0] sm:$0xff]
        %v765 = vld [vmem:[%s2 + $0x2e8] sm:$0xff]
        %v766 = vld [vmem:[%s2 + $0x2f0] sm:$0xff]
        %v767 = vld [vmem:[%s2 + $0x2f8] sm:$0xff]
        %v768 = vld [vmem:[%s2 + $0x300] sm:$0xff]
        %v769 = vld [vmem:[%s2 + $0x308] sm:$0xff]
        %v770 = vld [vmem:[%s2 + $0x310] sm:$0xff]
        %v771 = vld [vmem:[%s2 + $0x318] sm:$0xff]
        %v772 = vld [vmem:[%s2 + $0x320] sm:$0xff]
        %v773 = vld [vmem:[%s2 + $0x328] sm:$0xff]
        %v774 = vld [vmem:[%s2 + $0x330] sm:$0xff]
        %v775 = vld [vmem:[%s2 + $0x338] sm:$0xff]
        %v776 = vld [vmem:[%s2 + $0x340] sm:$0xff]
        %v777 = vld [vmem:[%s2 + $0x348] sm:$0xff]
        %v778 = vld [vmem:[%s2 + $0x350] sm:$0xff]
        %v779 = vld [vmem:[%s2 + $0x358] sm:$0xff]
        %v780 = vld [vmem:[%s2 + $0x360] sm:$0xff]
        %v781 = vld [vmem:[%s2 + $0x368] sm:$0xff]
        %v782 = vld [vmem:[%s2 + $0x370] sm:$0xff]
        %v783 = vld [vmem:[%s2 + $0x378] sm:$0xff]
        %v784 = vld [vmem:[%s2 + $0x380] sm:$0xff]
        %v785 = vld [vmem:[%s2 + $0x388] sm:$0xff]
        %v786 = vld [vmem:[%s2 + $0x390] sm:$0xff]
        %v787 = vld [vmem:[%s2 + $0x398] sm:$0xff]
        %v788 = vld [vmem:[%s2 + $0x3a0] sm:$0xff]
        %v789 = vld [vmem:[%s2 + $0x3a8] sm:$0xff]
        %v790 = vld [vmem:[%s2 + $0x3b0] sm:$0xff]
        %v791 = vld [vmem:[%s2 + $0x3b8] sm:$0xff]
        %v792 = vld [vmem:[%s2 + $0x3c0] sm:$0xff]
        %v793 = vld [vmem:[%s2 + $0x3c8] sm:$0xff]
        %v794 = vld [vmem:[%s2 + $0x3d0] sm:$0xff]
        %v795 = vld [vmem:[%s2 + $0x3d8] sm:$0xff]
        %v796 = vld [vmem:[%s2 + $0x3e0] sm:$0xff]
        %v797 = vld [vmem:[%s2 + $0x3e8] sm:$0xff]
        %v798 = vld [vmem:[%s2 + $0x3f0] sm:$0xff]
        %v799 = vld [vmem:[%s2 + $0x3f8] sm:$0xff]
        %v800 = vld [vmem:[%s2 + $0x400] sm:$0xff]
        %v801 = vld [vmem:[%s2 + $0x408] sm:$0xff]
        %v802 = vld [vmem:[%s2 + $0x410] sm:$0xff]
        %v803 = vld [vmem:[%s2 + $0x418] sm:$0xff]
        %v804 = vld [vmem:[%s2 + $0x420] sm:$0xff]
        %v805 = vld [vmem:[%s2 + $0x428] sm:$0xff]
        %v806 = vld [vmem:[%s2 + $0x430] sm:$0xff]
        %v807 = vld [vmem:[%s2 + $0x438] sm:$0xff]
        %v808 = vld [vmem:[%s2 + $0x440] sm:$0xff]
        %v809 = vld [vmem:[%s2 + $0x448] sm:$0xff]
        %v810 = vld [vmem:[%s2 + $0x450] sm:$0xff]
        %v811 = vld [vmem:[%s2 + $0x458] sm:$0xff]
        %v812 = vld [vmem:[%s2 + $0x460] sm:$0xff]
        %v813 = vld [vmem:[%s2 + $0x468] sm:$0xff]
        %v814 = vld [vmem:[%s2 + $0x470] sm:$0xff]
        %v815 = vld [vmem:[%s2 + $0x478] sm:$0xff]
        %v816 = vld [vmem:[%s2 + $0x480] sm:$0xff]
        %v817 = vld [vmem:[%s2 + $0x488] sm:$0xff]
        %v818 = vld [vmem:[%s2 + $0x490] sm:$0xff]
        %v819 = vld [vmem:[%s2 + $0x498] sm:$0xff]
        %v820 = vld [vmem:[%s2 + $0x4a0] sm:$0xff]
        %v821 = vld [vmem:[%s2 + $0x4a8] sm:$0xff]
        %v822 = vld [vmem:[%s2 + $0x4b0] sm:$0xff]
        %v823 = vld [vmem:[%s2 + $0x4b8] sm:$0xff]
        %v824 = vld [vmem:[%s2 + $0x4c0] sm:$0xff]
        %v825 = vld [vmem:[%s2 + $0x4c8] sm:$0xff]
        %v826 = vld [vmem:[%s2 + $0x4d0] sm:$0xff]
        %v827 = vld [vmem:[%s2 + $0x4d8] sm:$0xff]
        %v828 = vld [vmem:[%s2 + $0x4e0] sm:$0xff]
        %v829 = vld [vmem:[%s2 + $0x4e8] sm:$0xff]
        %v830 = vld [vmem:[%s2 + $0x4f0] sm:$0xff]
        %v831 = vld [vmem:[%s2 + $0x4f8] sm:$0xff]
        %v832 = vld [vmem:[%s2 + $0x500] sm:$0xff]
        %v833 = vld [vmem:[%s2 + $0x508] sm:$0xff]
        %v834 = vld [vmem:[%s2 + $0x510] sm:$0xff]
        %v835 = vld [vmem:[%s2 + $0x518] sm:$0xff]
        %v836 = vld [vmem:[%s2 + $0x520] sm:$0xff]
        %v837 = vld [vmem:[%s2 + $0x528] sm:$0xff]
        %v838 = vld [vmem:[%s2 + $0x530] sm:$0xff]
        %v839 = vld [vmem:[%s2 + $0x538] sm:$0xff]
        %v840 = vld [vmem:[%s2 + $0x540] sm:$0xff]
        %v841 = vld [vmem:[%s2 + $0x548] sm:$0xff]
        %v842 = vld [vmem:[%s2 + $0x550] sm:$0xff]
        %v843 = vld [vmem:[%s2 + $0x558] sm:$0xff]
        %v844 = vld [vmem:[%s2 + $0x560] sm:$0xff]
        %v845 = vld [vmem:[%s2 + $0x568] sm:$0xff]
        %v846 = vld [vmem:[%s2 + $0x570] sm:$0xff]
        %v847 = vld [vmem:[%s2 + $0x578] sm:$0xff]
        %v848 = vld [vmem:[%s2 + $0x580] sm:$0xff]
        %v849 = vld [vmem:[%s2 + $0x588] sm:$0xff]
        %v850 = vld [vmem:[%s2 + $0x590] sm:$0xff]
        %v851 = vld [vmem:[%s2 + $0x598] sm:$0xff]
        %v852 = vld [vmem:[%s2 + $0x5a0] sm:$0xff]
        %v853 = vld [vmem:[%s2 + $0x5a8] sm:$0xff]
        %v854 = vld [vmem:[%s2 + $0x5b0] sm:$0xff]
        %v855 = vld [vmem:[%s2 + $0x5b8] sm:$0xff]
        %v856 = vld [vmem:[%s2 + $0x5c0] sm:$0xff]
        %v857 = vld [vmem:[%s2 + $0x5c8] sm:$0xff]
        %v858 = vld [vmem:[%s2 + $0x5d0] sm:$0xff]
        %v859 = vld [vmem:[%s2 + $0x5d8] sm:$0xff]
        %v860 = vld [vmem:[%s2 + $0x5e0] sm:$0xff]
        %v861 = vld [vmem:[%s2 + $0x5e8] sm:$0xff]
        %v862 = vld [vmem:[%s2 + $0x5f0] sm:$0xff]
        %v863 = vld [vmem:[%s2 + $0x5f8] sm:$0xff]
        %v864 = vld [vmem:[%s4] sm:$0xff]
        %v865 = vld [vmem:[%s4 + $0x8] sm:$0xff]
        %v866 = vld [vmem:[%s4 + $0x10] sm:$0xff]
        %v867 = vld [vmem:[%s4 + $0x18] sm:$0xff]
        %v868 = vld [vmem:[%s4 + $0x20] sm:$0xff]
        %v869 = vld [vmem:[%s4 + $0x28] sm:$0xff]
        %v870 = vld [vmem:[%s4 + $0x30] sm:$0xff]
        %v871 = vld [vmem:[%s4 + $0x38] sm:$0xff]
        %v872 = vld [vmem:[%s4 + $0x40] sm:$0xff]
        %v873 = vld [vmem:[%s4 + $0x48] sm:$0xff]
        %v874 = vld [vmem:[%s4 + $0x50] sm:$0xff]
        %v875 = vld [vmem:[%s4 + $0x58] sm:$0xff]
        %v876 = vld [vmem:[%s4 + $0x60] sm:$0xff]
        %v877 = vld [vmem:[%s4 + $0x68] sm:$0xff]
        %v878 = vld [vmem:[%s4 + $0x70] sm:$0xff]
        %v879 = vld [vmem:[%s4 + $0x78] sm:$0xff]
        %v880 = vld [vmem:[%s4 + $0x80] sm:$0xff]
        %v881 = vld [vmem:[%s4 + $0x88] sm:$0xff]
        %v882 = vld [vmem:[%s4 + $0x90] sm:$0xff]
        %v883 = vld [vmem:[%s4 + $0x98] sm:$0xff]
        %v884 = vld [vmem:[%s4 + $0xa0] sm:$0xff]
        %v885 = vld [vmem:[%s4 + $0xa8] sm:$0xff]
        %v886 = vld [vmem:[%s4 + $0xb0] sm:$0xff]
        %v887 = vld [vmem:[%s4 + $0xb8] sm:$0xff]
        %v888 = vld [vmem:[%s4 + $0xc0] sm:$0xff]
        %v889 = vld [vmem:[%s4 + $0xc8] sm:$0xff]
        %v890 = vld [vmem:[%s4 + $0xd0] sm:$0xff]
        %v891 = vld [vmem:[%s4 + $0xd8] sm:$0xff]
        %v892 = vld [vmem:[%s4 + $0xe0] sm:$0xff]
        %v893 = vld [vmem:[%s4 + $0xe8] sm:$0xff]
        %v894 = vld [vmem:[%s4 + $0xf0] sm:$0xff]
        %v895 = vld [vmem:[%s4 + $0xf8] sm:$0xff]
        %v896 = vld [vmem:[%s4 + $0x100] sm:$0xff]
        %v897 = vld [vmem:[%s4 + $0x108] sm:$0xff]
        %v898 = vld [vmem:[%s4 + $0x110] sm:$0xff]
        %v899 = vld [vmem:[%s4 + $0x118] sm:$0xff]
        %v900 = vld [vmem:[%s4 + $0x120] sm:$0xff]
        %v901 = vld [vmem:[%s4 + $0x128] sm:$0xff]
        %v902 = vld [vmem:[%s4 + $0x130] sm:$0xff]
        %v903 = vld [vmem:[%s4 + $0x138] sm:$0xff]
        %v904 = vld [vmem:[%s4 + $0x140] sm:$0xff]
        %v905 = vld [vmem:[%s4 + $0x148] sm:$0xff]
        %v906 = vld [vmem:[%s4 + $0x150] sm:$0xff]
        %v907 = vld [vmem:[%s4 + $0x158] sm:$0xff]
        %v908 = vld [vmem:[%s4 + $0x160] sm:$0xff]
        %v909 = vld [vmem:[%s4 + $0x168] sm:$0xff]
        %v910 = vld [vmem:[%s4 + $0x170] sm:$0xff]
        %v911 = vld [vmem:[%s4 + $0x178] sm:$0xff]
        %v912 = vld [vmem:[%s4 + $0x180] sm:$0xff]
        %v913 = vld [vmem:[%s4 + $0x188] sm:$0xff]
        %v914 = vld [vmem:[%s4 + $0x190] sm:$0xff]
        %v915 = vld [vmem:[%s4 + $0x198] sm:$0xff]
        %v916 = vld [vmem:[%s4 + $0x1a0] sm:$0xff]
        %v917 = vld [vmem:[%s4 + $0x1a8] sm:$0xff]
        %v918 = vld [vmem:[%s4 + $0x1b0] sm:$0xff]
        %v919 = vld [vmem:[%s4 + $0x1b8] sm:$0xff]
        %v920 = vld [vmem:[%s4 + $0x1c0] sm:$0xff]
        %v921 = vld [vmem:[%s4 + $0x1c8] sm:$0xff]
        %v922 = vld [vmem:[%s4 + $0x1d0] sm:$0xff]
        %v923 = vld [vmem:[%s4 + $0x1d8] sm:$0xff]
        %v924 = vld [vmem:[%s4 + $0x1e0] sm:$0xff]
        %v925 = vld [vmem:[%s4 + $0x1e8] sm:$0xff]
        %v926 = vld [vmem:[%s4 + $0x1f0] sm:$0xff]
        %v927 = vld [vmem:[%s4 + $0x1f8] sm:$0xff]
        %v928 = vld [vmem:[%s5] sm:$0xff]
        %v929 = vld [vmem:[%s5 + $0x8] sm:$0xff]
        %v930 = vld [vmem:[%s5 + $0x10] sm:$0xff]
        %v931 = vld [vmem:[%s5 + $0x18] sm:$0xff]
        %v932 = vld [vmem:[%s5 + $0x20] sm:$0xff]
        %v933 = vld [vmem:[%s5 + $0x28] sm:$0xff]
        %v934 = vld [vmem:[%s5 + $0x30] sm:$0xff]
        %v935 = vld [vmem:[%s5 + $0x38] sm:$0xff]
        %v936 = vld [vmem:[%s5 + $0x40] sm:$0xff]
        %v937 = vld [vmem:[%s5 + $0x48] sm:$0xff]
        %v938 = vld [vmem:[%s5 + $0x50] sm:$0xff]
        %v939 = vld [vmem:[%s5 + $0x58] sm:$0xff]
        %v940 = vld [vmem:[%s5 + $0x60] sm:$0xff]
        %v941 = vld [vmem:[%s5 + $0x68] sm:$0xff]
        %v942 = vld [vmem:[%s5 + $0x70] sm:$0xff]
        %v943 = vld [vmem:[%s5 + $0x78] sm:$0xff]
        %v944 = vld [vmem:[%s5 + $0x80] sm:$0xff]
        %v945 = vld [vmem:[%s5 + $0x88] sm:$0xff]
        %v946 = vld [vmem:[%s5 + $0x90] sm:$0xff]
        %v947 = vld [vmem:[%s5 + $0x98] sm:$0xff]
        %v948 = vld [vmem:[%s5 + $0xa0] sm:$0xff]
        %v949 = vld [vmem:[%s5 + $0xa8] sm:$0xff]
        %v950 = vld [vmem:[%s5 + $0xb0] sm:$0xff]
        %v951 = vld [vmem:[%s5 + $0xb8] sm:$0xff]
        %v952 = vld [vmem:[%s5 + $0xc0] sm:$0xff]
        %v953 = vld [vmem:[%s5 + $0xc8] sm:$0xff]
        %v954 = vld [vmem:[%s5 + $0xd0] sm:$0xff]
        %v955 = vld [vmem:[%s5 + $0xd8] sm:$0xff]
        %v956 = vld [vmem:[%s5 + $0xe0] sm:$0xff]
        %v957 = vld [vmem:[%s5 + $0xe8] sm:$0xff]
        %v958 = vld [vmem:[%s5 + $0xf0] sm:$0xff]
        %v959 = vld [vmem:[%s5 + $0xf8] sm:$0xff]
        %v960 = vld [vmem:[%s5 + $0x100] sm:$0xff]
        %v961 = vld [vmem:[%s5 + $0x108] sm:$0xff]
        %v962 = vld [vmem:[%s5 + $0x110] sm:$0xff]
        %v963 = vld [vmem:[%s5 + $0x118] sm:$0xff]
        %v964 = vld [vmem:[%s5 + $0x120] sm:$0xff]
        %v965 = vld [vmem:[%s5 + $0x128] sm:$0xff]
        %v966 = vld [vmem:[%s5 + $0x130] sm:$0xff]
        %v967 = vld [vmem:[%s5 + $0x138] sm:$0xff]
        %v968 = vld [vmem:[%s5 + $0x140] sm:$0xff]
        %v969 = vld [vmem:[%s5 + $0x148] sm:$0xff]
        %v970 = vld [vmem:[%s5 + $0x150] sm:$0xff]
        %v971 = vld [vmem:[%s5 + $0x158] sm:$0xff]
        %v972 = vld [vmem:[%s5 + $0x160] sm:$0xff]
        %v973 = vld [vmem:[%s5 + $0x168] sm:$0xff]
        %v974 = vld [vmem:[%s5 + $0x170] sm:$0xff]
        %v975 = vld [vmem:[%s5 + $0x178] sm:$0xff]
        %v976 = vld [vmem:[%s5 + $0x180] sm:$0xff]
        %v977 = vld [vmem:[%s5 + $0x188] sm:$0xff]
        %v978 = vld [vmem:[%s5 + $0x190] sm:$0xff]
        %v979 = vld [vmem:[%s5 + $0x198] sm:$0xff]
        %v980 = vld [vmem:[%s5 + $0x1a0] sm:$0xff]
        %v981 = vld [vmem:[%s5 + $0x1a8] sm:$0xff]
        %v982 = vld [vmem:[%s5 + $0x1b0] sm:$0xff]
        %v983 = vld [vmem:[%s5 + $0x1b8] sm:$0xff]
        %v984 = vld [vmem:[%s5 + $0x1c0] sm:$0xff]
        %v985 = vld [vmem:[%s5 + $0x1c8] sm:$0xff]
        %v986 = vld [vmem:[%s5 + $0x1d0] sm:$0xff]
        %v987 = vld [vmem:[%s5 + $0x1d8] sm:$0xff]
        %v988 = vld [vmem:[%s5 + $0x1e0] sm:$0xff]
        %v989 = vld [vmem:[%s5 + $0x1e8] sm:$0xff]
        %v990 = vld [vmem:[%s5 + $0x1f0] sm:$0xff]
        %v991 = vld [vmem:[%s5 + $0x1f8] sm:$0xff]
        %v992 = vld [vmem:[%s6] sm:$0xff]
        %v993 = vld [vmem:[%s6 + $0x8] sm:$0xff]
        %v994 = vld [vmem:[%s6 + $0x10] sm:$0xff]
        %v995 = vld [vmem:[%s6 + $0x18] sm:$0xff]
        %v996 = vld [vmem:[%s6 + $0x20] sm:$0xff]
        %v997 = vld [vmem:[%s6 + $0x28] sm:$0xff]
        %v998 = vld [vmem:[%s6 + $0x30] sm:$0xff]
        %v999 = vld [vmem:[%s6 + $0x38] sm:$0xff]
        %v1000 = vld [vmem:[%s6 + $0x40] sm:$0xff]
        %v1001 = vld [vmem:[%s6 + $0x48] sm:$0xff]
        %v1002 = vld [vmem:[%s6 + $0x50] sm:$0xff]
        %v1003 = vld [vmem:[%s6 + $0x58] sm:$0xff]
        %v1004 = vld [vmem:[%s6 + $0x60] sm:$0xff]
        %v1005 = vld [vmem:[%s6 + $0x68] sm:$0xff]
        %v1006 = vld [vmem:[%s6 + $0x70] sm:$0xff]
        %v1007 = vld [vmem:[%s6 + $0x78] sm:$0xff]
        %v1008 = vld [vmem:[%s6 + $0x80] sm:$0xff]
        %v1009 = vld [vmem:[%s6 + $0x88] sm:$0xff]
        %v1010 = vld [vmem:[%s6 + $0x90] sm:$0xff]
        %v1011 = vld [vmem:[%s6 + $0x98] sm:$0xff]
        %v1012 = vld [vmem:[%s6 + $0xa0] sm:$0xff]
        %v1013 = vld [vmem:[%s6 + $0xa8] sm:$0xff]
        %v1014 = vld [vmem:[%s6 + $0xb0] sm:$0xff]
        %v1015 = vld [vmem:[%s6 + $0xb8] sm:$0xff]
        %v1016 = vld [vmem:[%s6 + $0xc0] sm:$0xff]
        %v1017 = vld [vmem:[%s6 + $0xc8] sm:$0xff]
        %v1018 = vld [vmem:[%s6 + $0xd0] sm:$0xff]
        %v1019 = vld [vmem:[%s6 + $0xd8] sm:$0xff]
        %v1020 = vld [vmem:[%s6 + $0xe0] sm:$0xff]
        %v1021 = vld [vmem:[%s6 + $0xe8] sm:$0xff]
        %v1022 = vld [vmem:[%s6 + $0xf0] sm:$0xff]
        %v1023 = vld [vmem:[%s6 + $0xf8] sm:$0xff]
        %v1024 = vld [vmem:[%s6 + $0x100] sm:$0xff]
        %v1025 = vld [vmem:[%s6 + $0x108] sm:$0xff]
        %v1026 = vld [vmem:[%s6 + $0x110] sm:$0xff]
        %v1027 = vld [vmem:[%s6 + $0x118] sm:$0xff]
        %v1028 = vld [vmem:[%s6 + $0x120] sm:$0xff]
        %v1029 = vld [vmem:[%s6 + $0x128] sm:$0xff]
        %v1030 = vld [vmem:[%s6 + $0x130] sm:$0xff]
        %v1031 = vld [vmem:[%s6 + $0x138] sm:$0xff]
        %v1032 = vld [vmem:[%s6 + $0x140] sm:$0xff]
        %v1033 = vld [vmem:[%s6 + $0x148] sm:$0xff]
        %v1034 = vld [vmem:[%s6 + $0x150] sm:$0xff]
        %v1035 = vld [vmem:[%s6 + $0x158] sm:$0xff]
        %v1036 = vld [vmem:[%s6 + $0x160] sm:$0xff]
        %v1037 = vld [vmem:[%s6 + $0x168] sm:$0xff]
        %v1038 = vld [vmem:[%s6 + $0x170] sm:$0xff]
        %v1039 = vld [vmem:[%s6 + $0x178] sm:$0xff]
        %v1040 = vld [vmem:[%s6 + $0x180] sm:$0xff]
        %v1041 = vld [vmem:[%s6 + $0x188] sm:$0xff]
        %v1042 = vld [vmem:[%s6 + $0x190] sm:$0xff]
        %v1043 = vld [vmem:[%s6 + $0x198] sm:$0xff]
        %v1044 = vld [vmem:[%s6 + $0x1a0] sm:$0xff]
        %v1045 = vld [vmem:[%s6 + $0x1a8] sm:$0xff]
        %v1046 = vld [vmem:[%s6 + $0x1b0] sm:$0xff]
        %v1047 = vld [vmem:[%s6 + $0x1b8] sm:$0xff]
        %v1048 = vld [vmem:[%s6 + $0x1c0] sm:$0xff]
        %v1049 = vld [vmem:[%s6 + $0x1c8] sm:$0xff]
        %v1050 = vld [vmem:[%s6 + $0x1d0] sm:$0xff]
        %v1051 = vld [vmem:[%s6 + $0x1d8] sm:$0xff]
        %v1052 = vld [vmem:[%s6 + $0x1e0] sm:$0xff]
        %v1053 = vld [vmem:[%s6 + $0x1e8] sm:$0xff]
        %v1054 = vld [vmem:[%s6 + $0x1f0] sm:$0xff]
        %v1055 = vld [vmem:[%s6 + $0x1f8] sm:$0xff]
        %v1056 = vld [vmem:[#allocation2] sm:$0xf]
        %v1057 = vld [vmem:[#allocation2 + $0x4] sm:$0xf]
        %v1058 = vld [vmem:[#allocation2 + $0x8] sm:$0xf]
        %v1059 = vld [vmem:[#allocation2 + $0xc] sm:$0xf]
        %v1060 = vld [vmem:[#allocation2 + $0x10] sm:$0xf]
        %v1061 = vld [vmem:[#allocation2 + $0x14] sm:$0xf]
        %v1062 = vld [vmem:[#allocation2 + $0x18] sm:$0xf]
        %v1063 = vld [vmem:[#allocation2 + $0x1c] sm:$0xf]
        %v1064 = vld [vmem:[#allocation2 + $0x20] sm:$0xf]
        %v1065 = vld [vmem:[#allocation2 + $0x24] sm:$0xf]
        %v1066 = vld [vmem:[#allocation2 + $0x28] sm:$0xf]
        %v1067 = vld [vmem:[#allocation2 + $0x2c] sm:$0xf]
        %v1068 = vld [vmem:[#allocation2 + $0x30] sm:$0xf]
        %v1069 = vld [vmem:[#allocation2 + $0x34] sm:$0xf]
        %v1070 = vld [vmem:[#allocation2 + $0x38] sm:$0xf]
        %v1071 = vld [vmem:[#allocation2 + $0x3c] sm:$0xf]
        %v1072 = vld [vmem:[#allocation2 + $0x40] sm:$0xf]
        %v1073 = vld [vmem:[#allocation2 + $0x44] sm:$0xf]
        %v1074 = vld [vmem:[#allocation2 + $0x48] sm:$0xf]
        %v1075 = vld [vmem:[#allocation2 + $0x4c] sm:$0xf]
        %v1076 = vld [vmem:[#allocation2 + $0x50] sm:$0xf]
        %v1077 = vld [vmem:[#allocation2 + $0x54] sm:$0xf]
        %v1078 = vld [vmem:[#allocation2 + $0x58] sm:$0xf]
        %v1079 = vld [vmem:[#allocation2 + $0x5c] sm:$0xf]
        %v1080 = vld [vmem:[#allocation2 + $0x60] sm:$0xf]
        %v1081 = vld [vmem:[#allocation2 + $0x64] sm:$0xf]
        %v1082 = vld [vmem:[#allocation2 + $0x68] sm:$0xf]
        %v1083 = vld [vmem:[#allocation2 + $0x6c] sm:$0xf]
        %v1084 = vld [vmem:[#allocation2 + $0x70] sm:$0xf]
        %v1085 = vld [vmem:[#allocation2 + $0x74] sm:$0xf]
        %v1086 = vld [vmem:[#allocation2 + $0x78] sm:$0xf]
        %v1087 = vld [vmem:[#allocation2 + $0x7c] sm:$0xf]
        %v1088 = vld [vmem:[#allocation2 + $0x80] sm:$0xf]
        %v1089 = vld [vmem:[#allocation2 + $0x84] sm:$0xf]
        %v1090 = vld [vmem:[#allocation2 + $0x88] sm:$0xf]
        %v1091 = vld [vmem:[#allocation2 + $0x8c] sm:$0xf]
        %v1092 = vld [vmem:[#allocation2 + $0x90] sm:$0xf]
        %v1093 = vld [vmem:[#allocation2 + $0x94] sm:$0xf]
        %v1094 = vld [vmem:[#allocation2 + $0x98] sm:$0xf]
        %v1095 = vld [vmem:[#allocation2 + $0x9c] sm:$0xf]
        %v1096 = vld [vmem:[#allocation2 + $0xa0] sm:$0xf]
        %v1097 = vld [vmem:[#allocation2 + $0xa4] sm:$0xf]
        %v1098 = vld [vmem:[#allocation2 + $0xa8] sm:$0xf]
        %v1099 = vld [vmem:[#allocation2 + $0xac] sm:$0xf]
        %v1100 = vld [vmem:[#allocation2 + $0xb0] sm:$0xf]
        %v1101 = vld [vmem:[#allocation2 + $0xb4] sm:$0xf]
        %v1102 = vld [vmem:[#allocation2 + $0xb8] sm:$0xf]
        %v1103 = vld [vmem:[#allocation2 + $0xbc] sm:$0xf]
        %v1104 = vld [vmem:[#allocation2 + $0xc0] sm:$0xf]
        %v1105 = vld [vmem:[#allocation2 + $0xc4] sm:$0xf]
        %v1106 = vld [vmem:[#allocation2 + $0xc8] sm:$0xf]
        %v1107 = vld [vmem:[#allocation2 + $0xcc] sm:$0xf]
        %v1108 = vld [vmem:[#allocation2 + $0xd0] sm:$0xf]
        %v1109 = vld [vmem:[#allocation2 + $0xd4] sm:$0xf]
        %v1110 = vld [vmem:[#allocation2 + $0xd8] sm:$0xf]
        %v1111 = vld [vmem:[#allocation2 + $0xdc] sm:$0xf]
        %v1112 = vld [vmem:[#allocation2 + $0xe0] sm:$0xf]
        %v1113 = vld [vmem:[#allocation2 + $0xe4] sm:$0xf]
        %v1114 = vld [vmem:[#allocation2 + $0xe8] sm:$0xf]
        %v1115 = vld [vmem:[#allocation2 + $0xec] sm:$0xf]
        %v1116 = vld [vmem:[#allocation2 + $0xf0] sm:$0xf]
        %v1117 = vld [vmem:[#allocation2 + $0xf4] sm:$0xf]
        %v1118 = vld [vmem:[#allocation2 + $0xf8] sm:$0xf]
        %v1119 = vld [vmem:[#allocation2 + $0xfc] sm:$0xf]
        %v1120 = vld [vmem:[#allocation2 + $0x100] sm:$0xf]
        %v1121 = vld [vmem:[#allocation2 + $0x104] sm:$0xf]
        %v1122 = vld [vmem:[#allocation2 + $0x108] sm:$0xf]
        %v1123 = vld [vmem:[#allocation2 + $0x10c] sm:$0xf]
        %v1124 = vld [vmem:[#allocation2 + $0x110] sm:$0xf]
        %v1125 = vld [vmem:[#allocation2 + $0x114] sm:$0xf]
        %v1126 = vld [vmem:[#allocation2 + $0x118] sm:$0xf]
        %v1127 = vld [vmem:[#allocation2 + $0x11c] sm:$0xf]
        %v1128 = vld [vmem:[#allocation2 + $0x120] sm:$0xf]
        %v1129 = vld [vmem:[#allocation2 + $0x124] sm:$0xf]
        %v1130 = vld [vmem:[#allocation2 + $0x128] sm:$0xf]
        %v1131 = vld [vmem:[#allocation2 + $0x12c] sm:$0xf]
        %v1132 = vld [vmem:[#allocation2 + $0x130] sm:$0xf]
        %v1133 = vld [vmem:[#allocation2 + $0x134] sm:$0xf]
        %v1134 = vld [vmem:[#allocation2 + $0x138] sm:$0xf]
        %v1135 = vld [vmem:[#allocation2 + $0x13c] sm:$0xf]
        %v1136 = vld [vmem:[%s10] sm:$0xf]
        %v1137 = vld [vmem:[%s10 + $0x4] sm:$0xf]
        %v1138 = vld [vmem:[%s10 + $0x8] sm:$0xf]
        %v1139 = vld [vmem:[%s10 + $0xc] sm:$0xf]
        %v1140 = vld [vmem:[%s10 + $0x10] sm:$0xf]
        %v1141 = vld [vmem:[%s10 + $0x14] sm:$0xf]
        %v1142 = vld [vmem:[%s10 + $0x18] sm:$0xf]
        %v1143 = vld [vmem:[%s10 + $0x1c] sm:$0xf]
        %v1144 = vld [vmem:[%s10 + $0x20] sm:$0xf]
        %v1145 = vld [vmem:[%s10 + $0x24] sm:$0xf]
        %v1146 = vld [vmem:[%s10 + $0x28] sm:$0xf]
        %v1147 = vld [vmem:[%s10 + $0x2c] sm:$0xf]
        %v1148 = vld [vmem:[%s10 + $0x30] sm:$0xf]
        %v1149 = vld [vmem:[%s10 + $0x34] sm:$0xf]
        %v1150 = vld [vmem:[%s10 + $0x38] sm:$0xf]
        %v1151 = vld [vmem:[%s10 + $0x3c] sm:$0xf]
        %v1152 = vld [vmem:[%s12] sm:$0xf]
        %v1153 = vld [vmem:[%s12 + $0x4] sm:$0xf]
        %v1154 = vld [vmem:[%s12 + $0x8] sm:$0xf]
        %v1155 = vld [vmem:[%s12 + $0xc] sm:$0xf]
        %v1156 = vld [vmem:[%s12 + $0x10] sm:$0xf]
        %v1157 = vld [vmem:[%s12 + $0x14] sm:$0xf]
        %v1158 = vld [vmem:[%s12 + $0x18] sm:$0xf]
        %v1159 = vld [vmem:[%s12 + $0x1c] sm:$0xf]
        %v1160 = vld [vmem:[%s12 + $0x20] sm:$0xf]
        %v1161 = vld [vmem:[%s12 + $0x24] sm:$0xf]
        %v1162 = vld [vmem:[%s12 + $0x28] sm:$0xf]
        %v1163 = vld [vmem:[%s12 + $0x2c] sm:$0xf]
        %v1164 = vld [vmem:[%s12 + $0x30] sm:$0xf]
        %v1165 = vld [vmem:[%s12 + $0x34] sm:$0xf]
        %v1166 = vld [vmem:[%s12 + $0x38] sm:$0xf]
        %v1167 = vld [vmem:[%s12 + $0x3c] sm:$0xf]
        %v1168 = vld [vmem:[%s3] sm:$0x1]
        %v1169 = vld [vmem:[%s7] sm:$0x1]
        %v1170 = vld [vmem:[%s9] sm:$0x1]
        %v1171 = vld [vmem:[%s11] sm:$0x1]
        %v1172 = vld [vmem:[%s13] sm:$0x1]
        %v1173 = vld [vmem:[%s475] sm:$0xff]
        %v1174 = vld [vmem:[%s475 + $0x8] sm:$0xf]
        %v1177 = vunpack.c.l.b16 %v1173
        %v1178 = vunpack.c.h.b16 %v1173
        %v1179 = vunpack.c.l.b16 %v1174
        %v1180 = vpack.c.b16 %v1177, %v1177
        %v1181 = vpack.c.b16 %v1178, %v1178
        %v1182 = vpack.c.b16 %v1179, %v1179
        %v1184 = vshrl.u32 %v1180, 16
        %v1186 = vshll.u32 %v1180, 16
        %v1188 = vrot.slane %v1186, 1
        %v1189 = vor.u32 %v1184, %v1188
        %v1191 = vshrl.u32 %v1181, 16
        %v1193 = vshll.u32 %v1181, 16
        %v1195 = vrot.slane %v1193, 1
        %v1196 = vor.u32 %v1191, %v1195
        %v1198 = vshrl.u32 %v1182, 16
        %v1200 = vshll.u32 %v1182, 16
        %v1202 = vrot.slane %v1200, 1
        %v1203 = vor.u32 %v1198, %v1202
        %v1399 = vunpack.c.l.b16 %v672
        %v1400 = vunpack.c.h.b16 %v672
        %v1401 = vunpack.c.l.b16 %v673
        %v1402 = vunpack.c.h.b16 %v673
        %v1403 = vunpack.c.l.b16 %v674
        %v1404 = vunpack.c.h.b16 %v674
        %v1405 = vunpack.c.l.b16 %v675
        %v1406 = vunpack.c.h.b16 %v675
        %v1407 = vunpack.c.l.b16 %v676
        %v1408 = vunpack.c.h.b16 %v676
        %v1409 = vunpack.c.l.b16 %v677
        %v1410 = vunpack.c.h.b16 %v677
        %v1411 = vunpack.c.l.b16 %v678
        %v1412 = vunpack.c.h.b16 %v678
        %v1413 = vunpack.c.l.b16 %v679
        %v1414 = vunpack.c.h.b16 %v679
        %v1415 = vunpack.c.l.b16 %v680
        %v1416 = vunpack.c.h.b16 %v680
        %v1417 = vunpack.c.l.b16 %v681
        %v1418 = vunpack.c.h.b16 %v681
        %v1419 = vunpack.c.l.b16 %v682
        %v1420 = vunpack.c.h.b16 %v682
        %v1421 = vunpack.c.l.b16 %v683
        %v1422 = vunpack.c.h.b16 %v683
        %v1423 = vunpack.c.l.b16 %v684
        %v1424 = vunpack.c.h.b16 %v684
        %v1425 = vunpack.c.l.b16 %v685
        %v1426 = vunpack.c.h.b16 %v685
        %v1427 = vunpack.c.l.b16 %v686
        %v1428 = vunpack.c.h.b16 %v686
        %v1429 = vunpack.c.l.b16 %v687
        %v1430 = vunpack.c.h.b16 %v687
        %v1431 = vunpack.c.l.b16 %v688
        %v1432 = vunpack.c.h.b16 %v688
        %v1433 = vunpack.c.l.b16 %v689
        %v1434 = vunpack.c.h.b16 %v689
        %v1435 = vunpack.c.l.b16 %v690
        %v1436 = vunpack.c.h.b16 %v690
        %v1437 = vunpack.c.l.b16 %v691
        %v1438 = vunpack.c.h.b16 %v691
        %v1439 = vunpack.c.l.b16 %v692
        %v1440 = vunpack.c.h.b16 %v692
        %v1441 = vunpack.c.l.b16 %v693
        %v1442 = vunpack.c.h.b16 %v693
        %v1443 = vunpack.c.l.b16 %v694
        %v1444 = vunpack.c.h.b16 %v694
        %v1445 = vunpack.c.l.b16 %v695
        %v1446 = vunpack.c.h.b16 %v695
        %v1447 = vunpack.c.l.b16 %v696
        %v1448 = vunpack.c.h.b16 %v696
        %v1449 = vunpack.c.l.b16 %v697
        %v1450 = vunpack.c.h.b16 %v697
        %v1451 = vunpack.c.l.b16 %v698
        %v1452 = vunpack.c.h.b16 %v698
        %v1453 = vunpack.c.l.b16 %v699
        %v1454 = vunpack.c.h.b16 %v699
        %v1455 = vunpack.c.l.b16 %v700
        %v1456 = vunpack.c.h.b16 %v700
        %v1457 = vunpack.c.l.b16 %v701
        %v1458 = vunpack.c.h.b16 %v701
        %v1459 = vunpack.c.l.b16 %v702
        %v1460 = vunpack.c.h.b16 %v702
        %v1461 = vunpack.c.l.b16 %v703
        %v1462 = vunpack.c.h.b16 %v703
        %v1463 = vunpack.c.l.b16 %v704
        %v1464 = vunpack.c.h.b16 %v704
        %v1465 = vunpack.c.l.b16 %v705
        %v1466 = vunpack.c.h.b16 %v705
        %v1467 = vunpack.c.l.b16 %v706
        %v1468 = vunpack.c.h.b16 %v706
        %v1469 = vunpack.c.l.b16 %v707
        %v1470 = vunpack.c.h.b16 %v707
        %v1471 = vunpack.c.l.b16 %v708
        %v1472 = vunpack.c.h.b16 %v708
        %v1473 = vunpack.c.l.b16 %v709
        %v1474 = vunpack.c.h.b16 %v709
        %v1475 = vunpack.c.l.b16 %v710
        %v1476 = vunpack.c.h.b16 %v710
        %v1477 = vunpack.c.l.b16 %v711
        %v1478 = vunpack.c.h.b16 %v711
        %v1479 = vunpack.c.l.b16 %v712
        %v1480 = vunpack.c.h.b16 %v712
        %v1481 = vunpack.c.l.b16 %v713
        %v1482 = vunpack.c.h.b16 %v713
        %v1483 = vunpack.c.l.b16 %v714
        %v1484 = vunpack.c.h.b16 %v714
        %v1485 = vunpack.c.l.b16 %v715
        %v1486 = vunpack.c.h.b16 %v715
        %v1487 = vunpack.c.l.b16 %v716
        %v1488 = vunpack.c.h.b16 %v716
        %v1489 = vunpack.c.l.b16 %v717
        %v1490 = vunpack.c.h.b16 %v717
        %v1491 = vunpack.c.l.b16 %v718
        %v1492 = vunpack.c.h.b16 %v718
        %v1493 = vunpack.c.l.b16 %v719
        %v1494 = vunpack.c.h.b16 %v719
        %v1495 = vunpack.c.l.b16 %v720
        %v1496 = vunpack.c.h.b16 %v720
        %v1497 = vunpack.c.l.b16 %v721
        %v1498 = vunpack.c.h.b16 %v721
        %v1499 = vunpack.c.l.b16 %v722
        %v1500 = vunpack.c.h.b16 %v722
        %v1501 = vunpack.c.l.b16 %v723
        %v1502 = vunpack.c.h.b16 %v723
        %v1503 = vunpack.c.l.b16 %v724
        %v1504 = vunpack.c.h.b16 %v724
        %v1505 = vunpack.c.l.b16 %v725
        %v1506 = vunpack.c.h.b16 %v725
        %v1507 = vunpack.c.l.b16 %v726
        %v1508 = vunpack.c.h.b16 %v726
        %v1509 = vunpack.c.l.b16 %v727
        %v1510 = vunpack.c.h.b16 %v727
        %v1511 = vunpack.c.l.b16 %v728
        %v1512 = vunpack.c.h.b16 %v728
        %v1513 = vunpack.c.l.b16 %v729
        %v1514 = vunpack.c.h.b16 %v729
        %v1515 = vunpack.c.l.b16 %v730
        %v1516 = vunpack.c.h.b16 %v730
        %v1517 = vunpack.c.l.b16 %v731
        %v1518 = vunpack.c.h.b16 %v731
        %v1519 = vunpack.c.l.b16 %v732
        %v1520 = vunpack.c.h.b16 %v732
        %v1521 = vunpack.c.l.b16 %v733
        %v1522 = vunpack.c.h.b16 %v733
        %v1523 = vunpack.c.l.b16 %v734
        %v1524 = vunpack.c.h.b16 %v734
        %v1525 = vunpack.c.l.b16 %v735
        %v1526 = vunpack.c.h.b16 %v735
        %v1527 = vunpack.c.l.b16 %v736
        %v1528 = vunpack.c.h.b16 %v736
        %v1529 = vunpack.c.l.b16 %v737
        %v1530 = vunpack.c.h.b16 %v737
        %v1531 = vunpack.c.l.b16 %v738
        %v1532 = vunpack.c.h.b16 %v738
        %v1533 = vunpack.c.l.b16 %v739
        %v1534 = vunpack.c.h.b16 %v739
        %v1535 = vunpack.c.l.b16 %v740
        %v1536 = vunpack.c.h.b16 %v740
        %v1537 = vunpack.c.l.b16 %v741
        %v1538 = vunpack.c.h.b16 %v741
        %v1539 = vunpack.c.l.b16 %v742
        %v1540 = vunpack.c.h.b16 %v742
        %v1541 = vunpack.c.l.b16 %v743
        %v1542 = vunpack.c.h.b16 %v743
        %v1543 = vunpack.c.l.b16 %v744
        %v1544 = vunpack.c.h.b16 %v744
        %v1545 = vunpack.c.l.b16 %v745
        %v1546 = vunpack.c.h.b16 %v745
        %v1547 = vunpack.c.l.b16 %v746
        %v1548 = vunpack.c.h.b16 %v746
        %v1549 = vunpack.c.l.b16 %v747
        %v1550 = vunpack.c.h.b16 %v747
        %v1551 = vunpack.c.l.b16 %v748
        %v1552 = vunpack.c.h.b16 %v748
        %v1553 = vunpack.c.l.b16 %v749
        %v1554 = vunpack.c.h.b16 %v749
        %v1555 = vunpack.c.l.b16 %v750
        %v1556 = vunpack.c.h.b16 %v750
        %v1557 = vunpack.c.l.b16 %v751
        %v1558 = vunpack.c.h.b16 %v751
        %v1559 = vunpack.c.l.b16 %v752
        %v1560 = vunpack.c.h.b16 %v752
        %v1561 = vunpack.c.l.b16 %v753
        %v1562 = vunpack.c.h.b16 %v753
        %v1563 = vunpack.c.l.b16 %v754
        %v1564 = vunpack.c.h.b16 %v754
        %v1565 = vunpack.c.l.b16 %v755
        %v1566 = vunpack.c.h.b16 %v755
        %v1567 = vunpack.c.l.b16 %v756
        %v1568 = vunpack.c.h.b16 %v756
        %v1569 = vunpack.c.l.b16 %v757
        %v1570 = vunpack.c.h.b16 %v757
        %v1571 = vunpack.c.l.b16 %v758
        %v1572 = vunpack.c.h.b16 %v758
        %v1573 = vunpack.c.l.b16 %v759
        %v1574 = vunpack.c.h.b16 %v759
        %v1575 = vunpack.c.l.b16 %v760
        %v1576 = vunpack.c.h.b16 %v760
        %v1577 = vunpack.c.l.b16 %v761
        %v1578 = vunpack.c.h.b16 %v761
        %v1579 = vunpack.c.l.b16 %v762
        %v1580 = vunpack.c.h.b16 %v762
        %v1581 = vunpack.c.l.b16 %v763
        %v1582 = vunpack.c.h.b16 %v763
        %v1583 = vunpack.c.l.b16 %v764
        %v1584 = vunpack.c.h.b16 %v764
        %v1585 = vunpack.c.l.b16 %v765
        %v1586 = vunpack.c.h.b16 %v765
        %v1587 = vunpack.c.l.b16 %v766
        %v1588 = vunpack.c.h.b16 %v766
        %v1589 = vunpack.c.l.b16 %v767
        %v1590 = vunpack.c.h.b16 %v767
        %v1591 = vunpack.c.l.b16 %v768
        %v1592 = vunpack.c.h.b16 %v768
        %v1593 = vunpack.c.l.b16 %v769
        %v1594 = vunpack.c.h.b16 %v769
        %v1595 = vunpack.c.l.b16 %v770
        %v1596 = vunpack.c.h.b16 %v770
        %v1597 = vunpack.c.l.b16 %v771
        %v1598 = vunpack.c.h.b16 %v771
        %v1599 = vunpack.c.l.b16 %v772
        %v1600 = vunpack.c.h.b16 %v772
        %v1601 = vunpack.c.l.b16 %v773
        %v1602 = vunpack.c.h.b16 %v773
        %v1603 = vunpack.c.l.b16 %v774
        %v1604 = vunpack.c.h.b16 %v774
        %v1605 = vunpack.c.l.b16 %v775
        %v1606 = vunpack.c.h.b16 %v775
        %v1607 = vunpack.c.l.b16 %v776
        %v1608 = vunpack.c.h.b16 %v776
        %v1609 = vunpack.c.l.b16 %v777
        %v1610 = vunpack.c.h.b16 %v777
        %v1611 = vunpack.c.l.b16 %v778
        %v1612 = vunpack.c.h.b16 %v778
        %v1613 = vunpack.c.l.b16 %v779
        %v1614 = vunpack.c.h.b16 %v779
        %v1615 = vunpack.c.l.b16 %v780
        %v1616 = vunpack.c.h.b16 %v780
        %v1617 = vunpack.c.l.b16 %v781
        %v1618 = vunpack.c.h.b16 %v781
        %v1619 = vunpack.c.l.b16 %v782
        %v1620 = vunpack.c.h.b16 %v782
        %v1621 = vunpack.c.l.b16 %v783
        %v1622 = vunpack.c.h.b16 %v783
        %v1623 = vunpack.c.l.b16 %v784
        %v1624 = vunpack.c.h.b16 %v784
        %v1625 = vunpack.c.l.b16 %v785
        %v1626 = vunpack.c.h.b16 %v785
        %v1627 = vunpack.c.l.b16 %v786
        %v1628 = vunpack.c.h.b16 %v786
        %v1629 = vunpack.c.l.b16 %v787
        %v1630 = vunpack.c.h.b16 %v787
        %v1631 = vunpack.c.l.b16 %v788
        %v1632 = vunpack.c.h.b16 %v788
        %v1633 = vunpack.c.l.b16 %v789
        %v1634 = vunpack.c.h.b16 %v789
        %v1635 = vunpack.c.l.b16 %v790
        %v1636 = vunpack.c.h.b16 %v790
        %v1637 = vunpack.c.l.b16 %v791
        %v1638 = vunpack.c.h.b16 %v791
        %v1639 = vunpack.c.l.b16 %v792
        %v1640 = vunpack.c.h.b16 %v792
        %v1641 = vunpack.c.l.b16 %v793
        %v1642 = vunpack.c.h.b16 %v793
        %v1643 = vunpack.c.l.b16 %v794
        %v1644 = vunpack.c.h.b16 %v794
        %v1645 = vunpack.c.l.b16 %v795
        %v1646 = vunpack.c.h.b16 %v795
        %v1647 = vunpack.c.l.b16 %v796
        %v1648 = vunpack.c.h.b16 %v796
        %v1649 = vunpack.c.l.b16 %v797
        %v1650 = vunpack.c.h.b16 %v797
        %v1651 = vunpack.c.l.b16 %v798
        %v1652 = vunpack.c.h.b16 %v798
        %v1653 = vunpack.c.l.b16 %v799
        %v1654 = vunpack.c.h.b16 %v799
        %v1655 = vunpack.c.l.b16 %v800
        %v1656 = vunpack.c.h.b16 %v800
        %v1657 = vunpack.c.l.b16 %v801
        %v1658 = vunpack.c.h.b16 %v801
        %v1659 = vunpack.c.l.b16 %v802
        %v1660 = vunpack.c.h.b16 %v802
        %v1661 = vunpack.c.l.b16 %v803
        %v1662 = vunpack.c.h.b16 %v803
        %v1663 = vunpack.c.l.b16 %v804
        %v1664 = vunpack.c.h.b16 %v804
        %v1665 = vunpack.c.l.b16 %v805
        %v1666 = vunpack.c.h.b16 %v805
        %v1667 = vunpack.c.l.b16 %v806
        %v1668 = vunpack.c.h.b16 %v806
        %v1669 = vunpack.c.l.b16 %v807
        %v1670 = vunpack.c.h.b16 %v807
        %v1671 = vunpack.c.l.b16 %v808
        %v1672 = vunpack.c.h.b16 %v808
        %v1673 = vunpack.c.l.b16 %v809
        %v1674 = vunpack.c.h.b16 %v809
        %v1675 = vunpack.c.l.b16 %v810
        %v1676 = vunpack.c.h.b16 %v810
        %v1677 = vunpack.c.l.b16 %v811
        %v1678 = vunpack.c.h.b16 %v811
        %v1679 = vunpack.c.l.b16 %v812
        %v1680 = vunpack.c.h.b16 %v812
        %v1681 = vunpack.c.l.b16 %v813
        %v1682 = vunpack.c.h.b16 %v813
        %v1683 = vunpack.c.l.b16 %v814
        %v1684 = vunpack.c.h.b16 %v814
        %v1685 = vunpack.c.l.b16 %v815
        %v1686 = vunpack.c.h.b16 %v815
        %v1687 = vunpack.c.l.b16 %v816
        %v1688 = vunpack.c.h.b16 %v816
        %v1689 = vunpack.c.l.b16 %v817
        %v1690 = vunpack.c.h.b16 %v817
        %v1691 = vunpack.c.l.b16 %v818
        %v1692 = vunpack.c.h.b16 %v818
        %v1693 = vunpack.c.l.b16 %v819
        %v1694 = vunpack.c.h.b16 %v819
        %v1695 = vunpack.c.l.b16 %v820
        %v1696 = vunpack.c.h.b16 %v820
        %v1697 = vunpack.c.l.b16 %v821
        %v1698 = vunpack.c.h.b16 %v821
        %v1699 = vunpack.c.l.b16 %v822
        %v1700 = vunpack.c.h.b16 %v822
        %v1701 = vunpack.c.l.b16 %v823
        %v1702 = vunpack.c.h.b16 %v823
        %v1703 = vunpack.c.l.b16 %v824
        %v1704 = vunpack.c.h.b16 %v824
        %v1705 = vunpack.c.l.b16 %v825
        %v1706 = vunpack.c.h.b16 %v825
        %v1707 = vunpack.c.l.b16 %v826
        %v1708 = vunpack.c.h.b16 %v826
        %v1709 = vunpack.c.l.b16 %v827
        %v1710 = vunpack.c.h.b16 %v827
        %v1711 = vunpack.c.l.b16 %v828
        %v1712 = vunpack.c.h.b16 %v828
        %v1713 = vunpack.c.l.b16 %v829
        %v1714 = vunpack.c.h.b16 %v829
        %v1715 = vunpack.c.l.b16 %v830
        %v1716 = vunpack.c.h.b16 %v830
        %v1717 = vunpack.c.l.b16 %v831
        %v1718 = vunpack.c.h.b16 %v831
        %v1719 = vunpack.c.l.b16 %v832
        %v1720 = vunpack.c.h.b16 %v832
        %v1721 = vunpack.c.l.b16 %v833
        %v1722 = vunpack.c.h.b16 %v833
        %v1723 = vunpack.c.l.b16 %v834
        %v1724 = vunpack.c.h.b16 %v834
        %v1725 = vunpack.c.l.b16 %v835
        %v1726 = vunpack.c.h.b16 %v835
        %v1727 = vunpack.c.l.b16 %v836
        %v1728 = vunpack.c.h.b16 %v836
        %v1729 = vunpack.c.l.b16 %v837
        %v1730 = vunpack.c.h.b16 %v837
        %v1731 = vunpack.c.l.b16 %v838
        %v1732 = vunpack.c.h.b16 %v838
        %v1733 = vunpack.c.l.b16 %v839
        %v1734 = vunpack.c.h.b16 %v839
        %v1735 = vunpack.c.l.b16 %v840
        %v1736 = vunpack.c.h.b16 %v840
        %v1737 = vunpack.c.l.b16 %v841
        %v1738 = vunpack.c.h.b16 %v841
        %v1739 = vunpack.c.l.b16 %v842
        %v1740 = vunpack.c.h.b16 %v842
        %v1741 = vunpack.c.l.b16 %v843
        %v1742 = vunpack.c.h.b16 %v843
        %v1743 = vunpack.c.l.b16 %v844
        %v1744 = vunpack.c.h.b16 %v844
        %v1745 = vunpack.c.l.b16 %v845
        %v1746 = vunpack.c.h.b16 %v845
        %v1747 = vunpack.c.l.b16 %v846
        %v1748 = vunpack.c.h.b16 %v846
        %v1749 = vunpack.c.l.b16 %v847
        %v1750 = vunpack.c.h.b16 %v847
        %v1751 = vunpack.c.l.b16 %v848
        %v1752 = vunpack.c.h.b16 %v848
        %v1753 = vunpack.c.l.b16 %v849
        %v1754 = vunpack.c.h.b16 %v849
        %v1755 = vunpack.c.l.b16 %v850
        %v1756 = vunpack.c.h.b16 %v850
        %v1757 = vunpack.c.l.b16 %v851
        %v1758 = vunpack.c.h.b16 %v851
        %v1759 = vunpack.c.l.b16 %v852
        %v1760 = vunpack.c.h.b16 %v852
        %v1761 = vunpack.c.l.b16 %v853
        %v1762 = vunpack.c.h.b16 %v853
        %v1763 = vunpack.c.l.b16 %v854
        %v1764 = vunpack.c.h.b16 %v854
        %v1765 = vunpack.c.l.b16 %v855
        %v1766 = vunpack.c.h.b16 %v855
        %v1767 = vunpack.c.l.b16 %v856
        %v1768 = vunpack.c.h.b16 %v856
        %v1769 = vunpack.c.l.b16 %v857
        %v1770 = vunpack.c.h.b16 %v857
        %v1771 = vunpack.c.l.b16 %v858
        %v1772 = vunpack.c.h.b16 %v858
        %v1773 = vunpack.c.l.b16 %v859
        %v1774 = vunpack.c.h.b16 %v859
        %v1775 = vunpack.c.l.b16 %v860
        %v1776 = vunpack.c.h.b16 %v860
        %v1777 = vunpack.c.l.b16 %v861
        %v1778 = vunpack.c.h.b16 %v861
        %v1779 = vunpack.c.l.b16 %v862
        %v1780 = vunpack.c.h.b16 %v862
        %v1781 = vunpack.c.l.b16 %v863
        %v1782 = vunpack.c.h.b16 %v863
        %v1783 = vpack.c.b16 %v1407, %v1399
        %v1784 = vpack.c.b16 %v1408, %v1400
        %v1785 = vpack.c.b16 %v1409, %v1401
        %v1786 = vpack.c.b16 %v1410, %v1402
        %v1787 = vpack.c.b16 %v1411, %v1403
        %v1788 = vpack.c.b16 %v1412, %v1404
        %v1789 = vpack.c.b16 %v1413, %v1405
        %v1790 = vpack.c.b16 %v1414, %v1406
        %v1791 = vpack.c.b16 %v1423, %v1415
        %v1792 = vpack.c.b16 %v1424, %v1416
        %v1793 = vpack.c.b16 %v1425, %v1417
        %v1794 = vpack.c.b16 %v1426, %v1418
        %v1795 = vpack.c.b16 %v1427, %v1419
        %v1796 = vpack.c.b16 %v1428, %v1420
        %v1797 = vpack.c.b16 %v1429, %v1421
        %v1798 = vpack.c.b16 %v1430, %v1422
        %v1799 = vpack.c.b16 %v1439, %v1431
        %v1800 = vpack.c.b16 %v1440, %v1432
        %v1801 = vpack.c.b16 %v1441, %v1433
        %v1802 = vpack.c.b16 %v1442, %v1434
        %v1803 = vpack.c.b16 %v1443, %v1435
        %v1804 = vpack.c.b16 %v1444, %v1436
        %v1805 = vpack.c.b16 %v1445, %v1437
        %v1806 = vpack.c.b16 %v1446, %v1438
        %v1807 = vpack.c.b16 %v1455, %v1447
        %v1808 = vpack.c.b16 %v1456, %v1448
        %v1809 = vpack.c.b16 %v1457, %v1449
        %v1810 = vpack.c.b16 %v1458, %v1450
        %v1811 = vpack.c.b16 %v1459, %v1451
        %v1812 = vpack.c.b16 %v1460, %v1452
        %v1813 = vpack.c.b16 %v1461, %v1453
        %v1814 = vpack.c.b16 %v1462, %v1454
        %v1815 = vpack.c.b16 %v1471, %v1463
        %v1816 = vpack.c.b16 %v1472, %v1464
        %v1817 = vpack.c.b16 %v1473, %v1465
        %v1818 = vpack.c.b16 %v1474, %v1466
        %v1819 = vpack.c.b16 %v1475, %v1467
        %v1820 = vpack.c.b16 %v1476, %v1468
        %v1821 = vpack.c.b16 %v1477, %v1469
        %v1822 = vpack.c.b16 %v1478, %v1470
        %v1823 = vpack.c.b16 %v1487, %v1479
        %v1824 = vpack.c.b16 %v1488, %v1480
        %v1825 = vpack.c.b16 %v1489, %v1481
        %v1826 = vpack.c.b16 %v1490, %v1482
        %v1827 = vpack.c.b16 %v1491, %v1483
        %v1828 = vpack.c.b16 %v1492, %v1484
        %v1829 = vpack.c.b16 %v1493, %v1485
        %v1830 = vpack.c.b16 %v1494, %v1486
        %v1831 = vpack.c.b16 %v1503, %v1495
        %v1832 = vpack.c.b16 %v1504, %v1496
        %v1833 = vpack.c.b16 %v1505, %v1497
        %v1834 = vpack.c.b16 %v1506, %v1498
        %v1835 = vpack.c.b16 %v1507, %v1499
        %v1836 = vpack.c.b16 %v1508, %v1500
        %v1837 = vpack.c.b16 %v1509, %v1501
        %v1838 = vpack.c.b16 %v1510, %v1502
        %v1839 = vpack.c.b16 %v1519, %v1511
        %v1840 = vpack.c.b16 %v1520, %v1512
        %v1841 = vpack.c.b16 %v1521, %v1513
        %v1842 = vpack.c.b16 %v1522, %v1514
        %v1843 = vpack.c.b16 %v1523, %v1515
        %v1844 = vpack.c.b16 %v1524, %v1516
        %v1845 = vpack.c.b16 %v1525, %v1517
        %v1846 = vpack.c.b16 %v1526, %v1518
        %v1847 = vpack.c.b16 %v1535, %v1527
        %v1848 = vpack.c.b16 %v1536, %v1528
        %v1849 = vpack.c.b16 %v1537, %v1529
        %v1850 = vpack.c.b16 %v1538, %v1530
        %v1851 = vpack.c.b16 %v1539, %v1531
        %v1852 = vpack.c.b16 %v1540, %v1532
        %v1853 = vpack.c.b16 %v1541, %v1533
        %v1854 = vpack.c.b16 %v1542, %v1534
        %v1855 = vpack.c.b16 %v1551, %v1543
        %v1856 = vpack.c.b16 %v1552, %v1544
        %v1857 = vpack.c.b16 %v1553, %v1545
        %v1858 = vpack.c.b16 %v1554, %v1546
        %v1859 = vpack.c.b16 %v1555, %v1547
        %v1860 = vpack.c.b16 %v1556, %v1548
        %v1861 = vpack.c.b16 %v1557, %v1549
        %v1862 = vpack.c.b16 %v1558, %v1550
        %v1863 = vpack.c.b16 %v1567, %v1559
        %v1864 = vpack.c.b16 %v1568, %v1560
        %v1865 = vpack.c.b16 %v1569, %v1561
        %v1866 = vpack.c.b16 %v1570, %v1562
        %v1867 = vpack.c.b16 %v1571, %v1563
        %v1868 = vpack.c.b16 %v1572, %v1564
        %v1869 = vpack.c.b16 %v1573, %v1565
        %v1870 = vpack.c.b16 %v1574, %v1566
        %v1871 = vpack.c.b16 %v1583, %v1575
        %v1872 = vpack.c.b16 %v1584, %v1576
        %v1873 = vpack.c.b16 %v1585, %v1577
        %v1874 = vpack.c.b16 %v1586, %v1578
        %v1875 = vpack.c.b16 %v1587, %v1579
        %v1876 = vpack.c.b16 %v1588, %v1580
        %v1877 = vpack.c.b16 %v1589, %v1581
        %v1878 = vpack.c.b16 %v1590, %v1582
        %v1879 = vpack.c.b16 %v1599, %v1591
        %v1880 = vpack.c.b16 %v1600, %v1592
        %v1881 = vpack.c.b16 %v1601, %v1593
        %v1882 = vpack.c.b16 %v1602, %v1594
        %v1883 = vpack.c.b16 %v1603, %v1595
        %v1884 = vpack.c.b16 %v1604, %v1596
        %v1885 = vpack.c.b16 %v1605, %v1597
        %v1886 = vpack.c.b16 %v1606, %v1598
        %v1887 = vpack.c.b16 %v1615, %v1607
        %v1888 = vpack.c.b16 %v1616, %v1608
        %v1889 = vpack.c.b16 %v1617, %v1609
        %v1890 = vpack.c.b16 %v1618, %v1610
        %v1891 = vpack.c.b16 %v1619, %v1611
        %v1892 = vpack.c.b16 %v1620, %v1612
        %v1893 = vpack.c.b16 %v1621, %v1613
        %v1894 = vpack.c.b16 %v1622, %v1614
        %v1895 = vpack.c.b16 %v1631, %v1623
        %v1896 = vpack.c.b16 %v1632, %v1624
        %v1897 = vpack.c.b16 %v1633, %v1625
        %v1898 = vpack.c.b16 %v1634, %v1626
        %v1899 = vpack.c.b16 %v1635, %v1627
        %v1900 = vpack.c.b16 %v1636, %v1628
        %v1901 = vpack.c.b16 %v1637, %v1629
        %v1902 = vpack.c.b16 %v1638, %v1630
        %v1903 = vpack.c.b16 %v1647, %v1639
        %v1904 = vpack.c.b16 %v1648, %v1640
        %v1905 = vpack.c.b16 %v1649, %v1641
        %v1906 = vpack.c.b16 %v1650, %v1642
        %v1907 = vpack.c.b16 %v1651, %v1643
        %v1908 = vpack.c.b16 %v1652, %v1644
        %v1909 = vpack.c.b16 %v1653, %v1645
        %v1910 = vpack.c.b16 %v1654, %v1646
        %v1911 = vpack.c.b16 %v1663, %v1655
        %v1912 = vpack.c.b16 %v1664, %v1656
        %v1913 = vpack.c.b16 %v1665, %v1657
        %v1914 = vpack.c.b16 %v1666, %v1658
        %v1915 = vpack.c.b16 %v1667, %v1659
        %v1916 = vpack.c.b16 %v1668, %v1660
        %v1917 = vpack.c.b16 %v1669, %v1661
        %v1918 = vpack.c.b16 %v1670, %v1662
        %v1919 = vpack.c.b16 %v1679, %v1671
        %v1920 = vpack.c.b16 %v1680, %v1672
        %v1921 = vpack.c.b16 %v1681, %v1673
        %v1922 = vpack.c.b16 %v1682, %v1674
        %v1923 = vpack.c.b16 %v1683, %v1675
        %v1924 = vpack.c.b16 %v1684, %v1676
        %v1925 = vpack.c.b16 %v1685, %v1677
        %v1926 = vpack.c.b16 %v1686, %v1678
        %v1927 = vpack.c.b16 %v1695, %v1687
        %v1928 = vpack.c.b16 %v1696, %v1688
        %v1929 = vpack.c.b16 %v1697, %v1689
        %v1930 = vpack.c.b16 %v1698, %v1690
        %v1931 = vpack.c.b16 %v1699, %v1691
        %v1932 = vpack.c.b16 %v1700, %v1692
        %v1933 = vpack.c.b16 %v1701, %v1693
        %v1934 = vpack.c.b16 %v1702, %v1694
        %v1935 = vpack.c.b16 %v1711, %v1703
        %v1936 = vpack.c.b16 %v1712, %v1704
        %v1937 = vpack.c.b16 %v1713, %v1705
        %v1938 = vpack.c.b16 %v1714, %v1706
        %v1939 = vpack.c.b16 %v1715, %v1707
        %v1940 = vpack.c.b16 %v1716, %v1708
        %v1941 = vpack.c.b16 %v1717, %v1709
        %v1942 = vpack.c.b16 %v1718, %v1710
        %v1943 = vpack.c.b16 %v1727, %v1719
        %v1944 = vpack.c.b16 %v1728, %v1720
        %v1945 = vpack.c.b16 %v1729, %v1721
        %v1946 = vpack.c.b16 %v1730, %v1722
        %v1947 = vpack.c.b16 %v1731, %v1723
        %v1948 = vpack.c.b16 %v1732, %v1724
        %v1949 = vpack.c.b16 %v1733, %v1725
        %v1950 = vpack.c.b16 %v1734, %v1726
        %v1951 = vpack.c.b16 %v1743, %v1735
        %v1952 = vpack.c.b16 %v1744, %v1736
        %v1953 = vpack.c.b16 %v1745, %v1737
        %v1954 = vpack.c.b16 %v1746, %v1738
        %v1955 = vpack.c.b16 %v1747, %v1739
        %v1956 = vpack.c.b16 %v1748, %v1740
        %v1957 = vpack.c.b16 %v1749, %v1741
        %v1958 = vpack.c.b16 %v1750, %v1742
        %v1959 = vpack.c.b16 %v1759, %v1751
        %v1960 = vpack.c.b16 %v1760, %v1752
        %v1961 = vpack.c.b16 %v1761, %v1753
        %v1962 = vpack.c.b16 %v1762, %v1754
        %v1963 = vpack.c.b16 %v1763, %v1755
        %v1964 = vpack.c.b16 %v1764, %v1756
        %v1965 = vpack.c.b16 %v1765, %v1757
        %v1966 = vpack.c.b16 %v1766, %v1758
        %v1967 = vpack.c.b16 %v1775, %v1767
        %v1968 = vpack.c.b16 %v1776, %v1768
        %v1969 = vpack.c.b16 %v1777, %v1769
        %v1970 = vpack.c.b16 %v1778, %v1770
        %v1971 = vpack.c.b16 %v1779, %v1771
        %v1972 = vpack.c.b16 %v1780, %v1772
        %v1973 = vpack.c.b16 %v1781, %v1773
        %v1974 = vpack.c.b16 %v1782, %v1774
        %2167 = vmatprep.subr.bf16.mxu0 %v1784
        %2168 = vmatpush1.bf16.msra.mxu0 %v1783
        %2169 = vmatprep.subr.bf16.mxu0 %v1792
        %2170 = vmatpush1.bf16.msra.mxu0 %v1791
        %2171 = vmatprep.subr.bf16.mxu0 %v1800
        %2172 = vmatpush1.bf16.msra.mxu0 %v1799
        %2173 = vmatprep.subr.bf16.mxu0 %v1808
        %2174 = vmatpush1.bf16.msra.mxu0 %v1807
        %2175 = vmatprep.subr.bf16.mxu0 %v1816
        %2176 = vmatpush1.bf16.msra.mxu0 %v1815
        %2177 = vmatprep.subr.bf16.mxu0 %v1824
        %2178 = vmatpush1.bf16.msra.mxu0 %v1823
        %2179 = vmatprep.subr.bf16.mxu0 %v1832
        %2180 = vmatpush1.bf16.msra.mxu0 %v1831
        %2181 = vmatprep.subr.bf16.mxu0 %v1840
        %2182 = vmatpush1.bf16.msra.mxu0 %v1839
        %2183 = vmatprep.subr.bf16.mxu0 %v1848
        %2184 = vmatpush1.bf16.msra.mxu0 %v1847
        %2185 = vmatprep.subr.bf16.mxu0 %v1856
        %2186 = vmatpush1.bf16.msra.mxu0 %v1855
        %2187 = vmatprep.subr.bf16.mxu0 %v1864
        %2188 = vmatpush1.bf16.msra.mxu0 %v1863
        %2189 = vmatprep.subr.bf16.mxu0 %v1872
        %2190 = vmatpush1.bf16.msra.mxu0 %v1871
        %2191 = vmatprep.subr.bf16.mxu0 %v1880
        %2192 = vmatpush1.bf16.msra.mxu0 %v1879
        %2193 = vmatprep.subr.bf16.mxu0 %v1888
        %2194 = vmatpush1.bf16.msra.mxu0 %v1887
        %2195 = vmatprep.subr.bf16.mxu0 %v1896
        %2196 = vmatpush1.bf16.msra.mxu0 %v1895
        %2197 = vmatprep.subr.bf16.mxu0 %v1904
        %2198 = vmatpush1.bf16.msra.mxu0 %v1903
        %2199 = vmatprep.mubr.bf16.mxu0 %v1196
        %2200 = vmatmul.mubr.bf16.gmra.mrb[0].mxu0 %v1189
        %v2201 = vpop.f32.mrb[0].mxu0
        %v2202 = vadd.f32 0.0, %v2201
        %v2203 = vpop.f32.mrb[0].mxu0
        %v2204 = vadd.f32 0.0, %v2203
        %v2205 = vpop.f32.mrb[0].mxu0
        %v2206 = vpop.f32.mrb[0].mxu0
        %2207 = vdwg.mxu0
        %2208 = vmatprep.subr.bf16.mxu0 %v1912
        %2209 = vmatpush1.bf16.msra.mxu0 %v1911
        %2210 = vmatprep.subr.bf16.mxu0 %v1920
        %2211 = vmatpush1.bf16.msra.mxu0 %v1919
        %2212 = vmatprep.subr.bf16.mxu0 %v1928
        %2213 = vmatpush1.bf16.msra.mxu0 %v1927
        %2214 = vmatprep.subr.bf16.mxu0 %v1936
        %2215 = vmatpush1.bf16.msra.mxu0 %v1935
        %2216 = vmatprep.subr.bf16.mxu0 %v1944
        %2217 = vmatpush1.bf16.msra.mxu0 %v1943
        %2218 = vmatprep.subr.bf16.mxu0 %v1952
        %2219 = vmatpush1.bf16.msra.mxu0 %v1951
        %2220 = vmatprep.subr.bf16.mxu0 %v1960
        %2221 = vmatpush1.bf16.msra.mxu0 %v1959
        %2222 = vmatprep.subr.bf16.mxu0 %v1968
        %2223 = vmatpush1.bf16.msra.mxu0 %v1967
        %2224 = vmatprep.subr.bf16.mxu0 0
        %2225 = vmatpush1.bf16.msra.mxu0 0
        %2226 = vmatprep.subr.bf16.mxu0 0
        %2227 = vmatpush1.bf16.msra.mxu0 0
        %2228 = vmatprep.subr.bf16.mxu0 0
        %2229 = vmatpush1.bf16.msra.mxu0 0
        %2230 = vmatprep.subr.bf16.mxu0 0
        %2231 = vmatpush1.bf16.msra.mxu0 0
        %2232 = vmatprep.subr.bf16.mxu0 0
        %2233 = vmatpush1.bf16.msra.mxu0 0
        %2234 = vmatprep.subr.bf16.mxu0 0
        %2235 = vmatpush1.bf16.msra.mxu0 0
        %2236 = vmatprep.subr.bf16.mxu0 0
        %2237 = vmatpush1.bf16.msra.mxu0 0
        %2238 = vmatprep.subr.bf16.mxu0 0
        %2239 = vmatpush1.bf16.msra.mxu0 0
        %2240 = vmatprep.mubr.bf16.mxu0 0
        %2241 = vmatmul.mubr.bf16.gmra.mrb[0].mxu0 %v1203
        %v2242 = vpop.f32.mrb[0].mxu0
        %v2243 = vadd.f32 %v2202, %v2242
        %v2244 = vpop.f32.mrb[0].mxu0
        %v2245 = vadd.f32 %v2204, %v2244
        %v2246 = vpop.f32.mrb[0].mxu0
        %v2247 = vpop.f32.mrb[0].mxu0
        %2248 = vdwg.mxu0
        %2249 = vmatprep.subr.bf16.mxu0 %v1786
        %2250 = vmatpush1.bf16.msra.mxu0 %v1785
        %2251 = vmatprep.subr.bf16.mxu0 %v1794
        %2252 = vmatpush1.bf16.msra.mxu0 %v1793
        %2253 = vmatprep.subr.bf16.mxu0 %v1802
        %2254 = vmatpush1.bf16.msra.mxu0 %v1801
        %2255 = vmatprep.subr.bf16.mxu0 %v1810
        %2256 = vmatpush1.bf16.msra.mxu0 %v1809
        %2257 = vmatprep.subr.bf16.mxu0 %v1818
        %2258 = vmatpush1.bf16.msra.mxu0 %v1817
        %2259 = vmatprep.subr.bf16.mxu0 %v1826
        %2260 = vmatpush1.bf16.msra.mxu0 %v1825
        %2261 = vmatprep.subr.bf16.mxu0 %v1834
        %2262 = vmatpush1.bf16.msra.mxu0 %v1833
        %2263 = vmatprep.subr.bf16.mxu0 %v1842
        %2264 = vmatpush1.bf16.msra.mxu0 %v1841
        %2265 = vmatprep.subr.bf16.mxu0 %v1850
        %2266 = vmatpush1.bf16.msra.mxu0 %v1849
        %2267 = vmatprep.subr.bf16.mxu0 %v1858
        %2268 = vmatpush1.bf16.msra.mxu0 %v1857
        %2269 = vmatprep.subr.bf16.mxu0 %v1866
        %2270 = vmatpush1.bf16.msra.mxu0 %v1865
        %2271 = vmatprep.subr.bf16.mxu0 %v1874
        %2272 = vmatpush1.bf16.msra.mxu0 %v1873
        %2273 = vmatprep.subr.bf16.mxu0 %v1882
        %2274 = vmatpush1.bf16.msra.mxu0 %v1881
        %2275 = vmatprep.subr.bf16.mxu0 %v1890
        %2276 = vmatpush1.bf16.msra.mxu0 %v1889
        %2277 = vmatprep.subr.bf16.mxu0 %v1898
        %2278 = vmatpush1.bf16.msra.mxu0 %v1897
        %2279 = vmatprep.subr.bf16.mxu0 %v1906
        %2280 = vmatpush1.bf16.msra.mxu0 %v1905
        %2281 = vmatprep.mubr.bf16.mxu0 %v1196
        %2282 = vmatmul.mubr.bf16.gmra.mrb[0].mxu0 %v1189
        %v2283 = vpop.f32.mrb[0].mxu0
        %v2284 = vadd.f32 0.0, %v2283
        %v2285 = vpop.f32.mrb[0].mxu0
        %v2286 = vadd.f32 0.0, %v2285
        %v2287 = vpop.f32.mrb[0].mxu0
        %v2288 = vpop.f32.mrb[0].mxu0
        %2289 = vdwg.mxu0
        %2290 = vmatprep.subr.bf16.mxu0 %v1914
        %2291 = vmatpush1.bf16.msra.mxu0 %v1913
        %2292 = vmatprep.subr.bf16.mxu0 %v1922
        %2293 = vmatpush1.bf16.msra.mxu0 %v1921
        %2294 = vmatprep.subr.bf16.mxu0 %v1930
        %2295 = vmatpush1.bf16.msra.mxu0 %v1929
        %2296 = vmatprep.subr.bf16.mxu0 %v1938
        %2297 = vmatpush1.bf16.msra.mxu0 %v1937
        %2298 = vmatprep.subr.bf16.mxu0 %v1946
        %2299 = vmatpush1.bf16.msra.mxu0 %v1945
        %2300 = vmatprep.subr.bf16.mxu0 %v1954
        %2301 = vmatpush1.bf16.msra.mxu0 %v1953
        %2302 = vmatprep.subr.bf16.mxu0 %v1962
        %2303 = vmatpush1.bf16.msra.mxu0 %v1961
        %2304 = vmatprep.subr.bf16.mxu0 %v1970
        %2305 = vmatpush1.bf16.msra.mxu0 %v1969
        %2306 = vmatprep.subr.bf16.mxu0 0
        %2307 = vmatpush1.bf16.msra.mxu0 0
        %2308 = vmatprep.subr.bf16.mxu0 0
        %2309 = vmatpush1.bf16.msra.mxu0 0
        %2310 = vmatprep.subr.bf16.mxu0 0
        %2311 = vmatpush1.bf16.msra.mxu0 0
        %2312 = vmatprep.subr.bf16.mxu0 0
        %2313 = vmatpush1.bf16.msra.mxu0 0
        %2314 = vmatprep.subr.bf16.mxu0 0
        %2315 = vmatpush1.bf16.msra.mxu0 0
        %2316 = vmatprep.subr.bf16.mxu0 0
        %2317 = vmatpush1.bf16.msra.mxu0 0
        %2318 = vmatprep.subr.bf16.mxu0 0
        %2319 = vmatpush1.bf16.msra.mxu0 0
        %2320 = vmatprep.subr.bf16.mxu0 0
        %2321 = vmatpush1.bf16.msra.mxu0 0
        %2322 = vmatprep.mubr.bf16.mxu0 0
        %2323 = vmatmul.mubr.bf16.gmra.mrb[0].mxu0 %v1203
        %v2324 = vpop.f32.mrb[0].mxu0
        %v2325 = vadd.f32 %v2284, %v2324
        %v2326 = vpop.f32.mrb[0].mxu0
        %v2327 = vadd.f32 %v2286, %v2326
        %v2328 = vpop.f32.mrb[0].mxu0
        %v2329 = vpop.f32.mrb[0].mxu0
        %2330 = vdwg.mxu0
        %2331 = vmatprep.subr.bf16.mxu0 %v1788
        %2332 = vmatpush1.bf16.msra.mxu0 %v1787
        %2333 = vmatprep.subr.bf16.mxu0 %v1796
        %2334 = vmatpush1.bf16.msra.mxu0 %v1795
        %2335 = vmatprep.subr.bf16.mxu0 %v1804
        %2336 = vmatpush1.bf16.msra.mxu0 %v1803
        %2337 = vmatprep.subr.bf16.mxu0 %v1812
        %2338 = vmatpush1.bf16.msra.mxu0 %v1811
        %2339 = vmatprep.subr.bf16.mxu0 %v1820
        %2340 = vmatpush1.bf16.msra.mxu0 %v1819
        %2341 = vmatprep.subr.bf16.mxu0 %v1828
        %2342 = vmatpush1.bf16.msra.mxu0 %v1827
        %2343 = vmatprep.subr.bf16.mxu0 %v1836
        %2344 = vmatpush1.bf16.msra.mxu0 %v1835
        %2345 = vmatprep.subr.bf16.mxu0 %v1844
        %2346 = vmatpush1.bf16.msra.mxu0 %v1843
        %2347 = vmatprep.subr.bf16.mxu0 %v1852
        %2348 = vmatpush1.bf16.msra.mxu0 %v1851
        %2349 = vmatprep.subr.bf16.mxu0 %v1860
        %2350 = vmatpush1.bf16.msra.mxu0 %v1859
        %2351 = vmatprep.subr.bf16.mxu0 %v1868
        %2352 = vmatpush1.bf16.msra.mxu0 %v1867
        %2353 = vmatprep.subr.bf16.mxu0 %v1876
        %2354 = vmatpush1.bf16.msra.mxu0 %v1875
        %2355 = vmatprep.subr.bf16.mxu0 %v1884
        %2356 = vmatpush1.bf16.msra.mxu0 %v1883
        %2357 = vmatprep.subr.bf16.mxu0 %v1892
        %2358 = vmatpush1.bf16.msra.mxu0 %v1891
        %2359 = vmatprep.subr.bf16.mxu0 %v1900
        %2360 = vmatpush1.bf16.msra.mxu0 %v1899
        %2361 = vmatprep.subr.bf16.mxu0 %v1908
        %2362 = vmatpush1.bf16.msra.mxu0 %v1907
        %2363 = vmatprep.mubr.bf16.mxu0 %v1196
        %2364 = vmatmul.mubr.bf16.gmra.mrb[0].mxu0 %v1189
        %v2365 = vpop.f32.mrb[0].mxu0
        %v2366 = vadd.f32 0.0, %v2365
        %v2367 = vpop.f32.mrb[0].mxu0
        %v2368 = vadd.f32 0.0, %v2367
        %v2369 = vpop.f32.mrb[0].mxu0
        %v2370 = vpop.f32.mrb[0].mxu0
        %2371 = vdwg.mxu0
        %2372 = vmatprep.subr.bf16.mxu0 %v1916
        %2373 = vmatpush1.bf16.msra.mxu0 %v1915
        %2374 = vmatprep.subr.bf16.mxu0 %v1924
        %2375 = vmatpush1.bf16.msra.mxu0 %v1923
        %2376 = vmatprep.subr.bf16.mxu0 %v1932
        %2377 = vmatpush1.bf16.msra.mxu0 %v1931
        %2378 = vmatprep.subr.bf16.mxu0 %v1940
        %2379 = vmatpush1.bf16.msra.mxu0 %v1939
        %2380 = vmatprep.subr.bf16.mxu0 %v1948
        %2381 = vmatpush1.bf16.msra.mxu0 %v1947
        %2382 = vmatprep.subr.bf16.mxu0 %v1956
        %2383 = vmatpush1.bf16.msra.mxu0 %v1955
        %2384 = vmatprep.subr.bf16.mxu0 %v1964
        %2385 = vmatpush1.bf16.msra.mxu0 %v1963
        %2386 = vmatprep.subr.bf16.mxu0 %v1972
        %2387 = vmatpush1.bf16.msra.mxu0 %v1971
        %2388 = vmatprep.subr.bf16.mxu0 0
        %2389 = vmatpush1.bf16.msra.mxu0 0
        %2390 = vmatprep.subr.bf16.mxu0 0
        %2391 = vmatpush1.bf16.msra.mxu0 0
        %2392 = vmatprep.subr.bf16.mxu0 0
        %2393 = vmatpush1.bf16.msra.mxu0 0
        %2394 = vmatprep.subr.bf16.mxu0 0
        %2395 = vmatpush1.bf16.msra.mxu0 0
        %2396 = vmatprep.subr.bf16.mxu0 0
        %2397 = vmatpush1.bf16.msra.mxu0 0
        %2398 = vmatprep.subr.bf16.mxu0 0
        %2399 = vmatpush1.bf16.msra.mxu0 0
        %2400 = vmatprep.subr.bf16.mxu0 0
        %2401 = vmatpush1.bf16.msra.mxu0 0
        %2402 = vmatprep.subr.bf16.mxu0 0
        %2403 = vmatpush1.bf16.msra.mxu0 0
        %2404 = vmatprep.mubr.bf16.mxu0 0
        %2405 = vmatmul.mubr.bf16.gmra.mrb[0].mxu0 %v1203
        %v2406 = vpop.f32.mrb[0].mxu0
        %v2407 = vadd.f32 %v2366, %v2406
        %v2408 = vpop.f32.mrb[0].mxu0
        %v2409 = vadd.f32 %v2368, %v2408
        %v2410 = vpop.f32.mrb[0].mxu0
        %v2411 = vpop.f32.mrb[0].mxu0
        %2412 = vdwg.mxu0
        %2413 = vmatprep.subr.bf16.mxu0 %v1790
        %2414 = vmatpush1.bf16.msra.mxu0 %v1789
        %2415 = vmatprep.subr.bf16.mxu0 %v1798
        %2416 = vmatpush1.bf16.msra.mxu0 %v1797
        %2417 = vmatprep.subr.bf16.mxu0 %v1806
        %2418 = vmatpush1.bf16.msra.mxu0 %v1805
        %2419 = vmatprep.subr.bf16.mxu0 %v1814
        %2420 = vmatpush1.bf16.msra.mxu0 %v1813
        %2421 = vmatprep.subr.bf16.mxu0 %v1822
        %2422 = vmatpush1.bf16.msra.mxu0 %v1821
        %2423 = vmatprep.subr.bf16.mxu0 %v1830
        %2424 = vmatpush1.bf16.msra.mxu0 %v1829
        %2425 = vmatprep.subr.bf16.mxu0 %v1838
        %2426 = vmatpush1.bf16.msra.mxu0 %v1837
        %2427 = vmatprep.subr.bf16.mxu0 %v1846
        %2428 = vmatpush1.bf16.msra.mxu0 %v1845
        %2429 = vmatprep.subr.bf16.mxu0 %v1854
        %2430 = vmatpush1.bf16.msra.mxu0 %v1853
        %2431 = vmatprep.subr.bf16.mxu0 %v1862
        %2432 = vmatpush1.bf16.msra.mxu0 %v1861
        %2433 = vmatprep.subr.bf16.mxu0 %v1870
        %2434 = vmatpush1.bf16.msra.mxu0 %v1869
        %2435 = vmatprep.subr.bf16.mxu0 %v1878
        %2436 = vmatpush1.bf16.msra.mxu0 %v1877
        %2437 = vmatprep.subr.bf16.mxu0 %v1886
        %2438 = vmatpush1.bf16.msra.mxu0 %v1885
        %2439 = vmatprep.subr.bf16.mxu0 %v1894
        %2440 = vmatpush1.bf16.msra.mxu0 %v1893
        %2441 = vmatprep.subr.bf16.mxu0 %v1902
        %2442 = vmatpush1.bf16.msra.mxu0 %v1901
        %2443 = vmatprep.subr.bf16.mxu0 %v1910
        %2444 = vmatpush1.bf16.msra.mxu0 %v1909
        %2445 = vmatprep.mubr.bf16.mxu0 %v1196
        %2446 = vmatmul.mubr.bf16.gmra.mrb[0].mxu0 %v1189
        %v2447 = vpop.f32.mrb[0].mxu0
        %v2448 = vadd.f32 0.0, %v2447
        %v2449 = vpop.f32.mrb[0].mxu0
        %v2450 = vadd.f32 0.0, %v2449
        %v2451 = vpop.f32.mrb[0].mxu0
        %v2452 = vpop.f32.mrb[0].mxu0
        %2453 = vdwg.mxu0
        %2454 = vmatprep.subr.bf16.mxu0 %v1918
        %2455 = vmatpush1.bf16.msra.mxu0 %v1917
        %2456 = vmatprep.subr.bf16.mxu0 %v1926
        %2457 = vmatpush1.bf16.msra.mxu0 %v1925
        %2458 = vmatprep.subr.bf16.mxu0 %v1934
        %2459 = vmatpush1.bf16.msra.mxu0 %v1933
        %2460 = vmatprep.subr.bf16.mxu0 %v1942
        %2461 = vmatpush1.bf16.msra.mxu0 %v1941
        %2462 = vmatprep.subr.bf16.mxu0 %v1950
        %2463 = vmatpush1.bf16.msra.mxu0 %v1949
        %2464 = vmatprep.subr.bf16.mxu0 %v1958
        %2465 = vmatpush1.bf16.msra.mxu0 %v1957
        %2466 = vmatprep.subr.bf16.mxu0 %v1966
        %2467 = vmatpush1.bf16.msra.mxu0 %v1965
        %2468 = vmatprep.subr.bf16.mxu0 %v1974
        %2469 = vmatpush1.bf16.msra.mxu0 %v1973
        %2470 = vmatprep.subr.bf16.mxu0 0
        %2471 = vmatpush1.bf16.msra.mxu0 0
        %2472 = vmatprep.subr.bf16.mxu0 0
        %2473 = vmatpush1.bf16.msra.mxu0 0
        %2474 = vmatprep.subr.bf16.mxu0 0
        %2475 = vmatpush1.bf16.msra.mxu0 0
        %2476 = vmatprep.subr.bf16.mxu0 0
        %2477 = vmatpush1.bf16.msra.mxu0 0
        %2478 = vmatprep.subr.bf16.mxu0 0
        %2479 = vmatpush1.bf16.msra.mxu0 0
        %2480 = vmatprep.subr.bf16.mxu0 0
        %2481 = vmatpush1.bf16.msra.mxu0 0
        %2482 = vmatprep.subr.bf16.mxu0 0
        %2483 = vmatpush1.bf16.msra.mxu0 0
        %2484 = vmatprep.subr.bf16.mxu0 0
        %2485 = vmatpush1.bf16.msra.mxu0 0
        %2486 = vmatprep.mubr.bf16.mxu0 0
        %2487 = vmatmul.mubr.bf16.gmra.mrb[0].mxu0 %v1203
        %v2488 = vpop.f32.mrb[0].mxu0
        %v2489 = vadd.f32 %v2448, %v2488
        %v2490 = vpop.f32.mrb[0].mxu0
        %v2491 = vadd.f32 %v2450, %v2490
        %v2492 = vpop.f32.mrb[0].mxu0
        %v2493 = vpop.f32.mrb[0].mxu0
        %2494 = vdwg.mxu0
        %v2690 = vunpack.c.l.b16 %v480
        %v2691 = vunpack.c.h.b16 %v480
        %v2692 = vunpack.c.l.b16 %v481
        %v2693 = vunpack.c.h.b16 %v481
        %v2694 = vunpack.c.l.b16 %v482
        %v2695 = vunpack.c.h.b16 %v482
        %v2696 = vunpack.c.l.b16 %v483
        %v2697 = vunpack.c.h.b16 %v483
        %v2698 = vunpack.c.l.b16 %v484
        %v2699 = vunpack.c.h.b16 %v484
        %v2700 = vunpack.c.l.b16 %v485
        %v2701 = vunpack.c.h.b16 %v485
        %v2702 = vunpack.c.l.b16 %v486
        %v2703 = vunpack.c.h.b16 %v486
        %v2704 = vunpack.c.l.b16 %v487
        %v2705 = vunpack.c.h.b16 %v487
        %v2706 = vunpack.c.l.b16 %v488
        %v2707 = vunpack.c.h.b16 %v488
        %v2708 = vunpack.c.l.b16 %v489
        %v2709 = vunpack.c.h.b16 %v489
        %v2710 = vunpack.c.l.b16 %v490
        %v2711 = vunpack.c.h.b16 %v490
        %v2712 = vunpack.c.l.b16 %v491
        %v2713 = vunpack.c.h.b16 %v491
        %v2714 = vunpack.c.l.b16 %v492
        %v2715 = vunpack.c.h.b16 %v492
        %v2716 = vunpack.c.l.b16 %v493
        %v2717 = vunpack.c.h.b16 %v493
        %v2718 = vunpack.c.l.b16 %v494
        %v2719 = vunpack.c.h.b16 %v494
        %v2720 = vunpack.c.l.b16 %v495
        %v2721 = vunpack.c.h.b16 %v495
        %v2722 = vunpack.c.l.b16 %v496
        %v2723 = vunpack.c.h.b16 %v496
        %v2724 = vunpack.c.l.b16 %v497
        %v2725 = vunpack.c.h.b16 %v497
        %v2726 = vunpack.c.l.b16 %v498
        %v2727 = vunpack.c.h.b16 %v498
        %v2728 = vunpack.c.l.b16 %v499
        %v2729 = vunpack.c.h.b16 %v499
        %v2730 = vunpack.c.l.b16 %v500
        %v2731 = vunpack.c.h.b16 %v500
        %v2732 = vunpack.c.l.b16 %v501
        %v2733 = vunpack.c.h.b16 %v501
        %v2734 = vunpack.c.l.b16 %v502
        %v2735 = vunpack.c.h.b16 %v502
        %v2736 = vunpack.c.l.b16 %v503
        %v2737 = vunpack.c.h.b16 %v503
        %v2738 = vunpack.c.l.b16 %v504
        %v2739 = vunpack.c.h.b16 %v504
        %v2740 = vunpack.c.l.b16 %v505
        %v2741 = vunpack.c.h.b16 %v505
        %v2742 = vunpack.c.l.b16 %v506
        %v2743 = vunpack.c.h.b16 %v506
        %v2744 = vunpack.c.l.b16 %v507
        %v2745 = vunpack.c.h.b16 %v507
        %v2746 = vunpack.c.l.b16 %v508
        %v2747 = vunpack.c.h.b16 %v508
        %v2748 = vunpack.c.l.b16 %v509
        %v2749 = vunpack.c.h.b16 %v509
        %v2750 = vunpack.c.l.b16 %v510
        %v2751 = vunpack.c.h.b16 %v510
        %v2752 = vunpack.c.l.b16 %v511
        %v2753 = vunpack.c.h.b16 %v511
        %v2754 = vunpack.c.l.b16 %v512
        %v2755 = vunpack.c.h.b16 %v512
        %v2756 = vunpack.c.l.b16 %v513
        %v2757 = vunpack.c.h.b16 %v513
        %v2758 = vunpack.c.l.b16 %v514
        %v2759 = vunpack.c.h.b16 %v514
        %v2760 = vunpack.c.l.b16 %v515
        %v2761 = vunpack.c.h.b16 %v515
        %v2762 = vunpack.c.l.b16 %v516
        %v2763 = vunpack.c.h.b16 %v516
        %v2764 = vunpack.c.l.b16 %v517
        %v2765 = vunpack.c.h.b16 %v517
        %v2766 = vunpack.c.l.b16 %v518
        %v2767 = vunpack.c.h.b16 %v518
        %v2768 = vunpack.c.l.b16 %v519
        %v2769 = vunpack.c.h.b16 %v519
        %v2770 = vunpack.c.l.b16 %v520
        %v2771 = vunpack.c.h.b16 %v520
        %v2772 = vunpack.c.l.b16 %v521
        %v2773 = vunpack.c.h.b16 %v521
        %v2774 = vunpack.c.l.b16 %v522
        %v2775 = vunpack.c.h.b16 %v522
        %v2776 = vunpack.c.l.b16 %v523
        %v2777 = vunpack.c.h.b16 %v523
        %v2778 = vunpack.c.l.b16 %v524
        %v2779 = vunpack.c.h.b16 %v524
        %v2780 = vunpack.c.l.b16 %v525
        %v2781 = vunpack.c.h.b16 %v525
        %v2782 = vunpack.c.l.b16 %v526
        %v2783 = vunpack.c.h.b16 %v526
        %v2784 = vunpack.c.l.b16 %v527
        %v2785 = vunpack.c.h.b16 %v527
        %v2786 = vunpack.c.l.b16 %v528
        %v2787 = vunpack.c.h.b16 %v528
        %v2788 = vunpack.c.l.b16 %v529
        %v2789 = vunpack.c.h.b16 %v529
        %v2790 = vunpack.c.l.b16 %v530
        %v2791 = vunpack.c.h.b16 %v530
        %v2792 = vunpack.c.l.b16 %v531
        %v2793 = vunpack.c.h.b16 %v531
        %v2794 = vunpack.c.l.b16 %v532
        %v2795 = vunpack.c.h.b16 %v532
        %v2796 = vunpack.c.l.b16 %v533
        %v2797 = vunpack.c.h.b16 %v533
        %v2798 = vunpack.c.l.b16 %v534
        %v2799 = vunpack.c.h.b16 %v534
        %v2800 = vunpack.c.l.b16 %v535
        %v2801 = vunpack.c.h.b16 %v535
        %v2802 = vunpack.c.l.b16 %v536
        %v2803 = vunpack.c.h.b16 %v536
        %v2804 = vunpack.c.l.b16 %v537
        %v2805 = vunpack.c.h.b16 %v537
        %v2806 = vunpack.c.l.b16 %v538
        %v2807 = vunpack.c.h.b16 %v538
        %v2808 = vunpack.c.l.b16 %v539
        %v2809 = vunpack.c.h.b16 %v539
        %v2810 = vunpack.c.l.b16 %v540
        %v2811 = vunpack.c.h.b16 %v540
        %v2812 = vunpack.c.l.b16 %v541
        %v2813 = vunpack.c.h.b16 %v541
        %v2814 = vunpack.c.l.b16 %v542
        %v2815 = vunpack.c.h.b16 %v542
        %v2816 = vunpack.c.l.b16 %v543
        %v2817 = vunpack.c.h.b16 %v543
        %v2818 = vunpack.c.l.b16 %v544
        %v2819 = vunpack.c.h.b16 %v544
        %v2820 = vunpack.c.l.b16 %v545
        %v2821 = vunpack.c.h.b16 %v545
        %v2822 = vunpack.c.l.b16 %v546
        %v2823 = vunpack.c.h.b16 %v546
        %v2824 = vunpack.c.l.b16 %v547
        %v2825 = vunpack.c.h.b16 %v547
        %v2826 = vunpack.c.l.b16 %v548
        %v2827 = vunpack.c.h.b16 %v548
        %v2828 = vunpack.c.l.b16 %v549
        %v2829 = vunpack.c.h.b16 %v549
        %v2830 = vunpack.c.l.b16 %v550
        %v2831 = vunpack.c.h.b16 %v550
        %v2832 = vunpack.c.l.b16 %v551
        %v2833 = vunpack.c.h.b16 %v551
        %v2834 = vunpack.c.l.b16 %v552
        %v2835 = vunpack.c.h.b16 %v552
        %v2836 = vunpack.c.l.b16 %v553
        %v2837 = vunpack.c.h.b16 %v553
        %v2838 = vunpack.c.l.b16 %v554
        %v2839 = vunpack.c.h.b16 %v554
        %v2840 = vunpack.c.l.b16 %v555
        %v2841 = vunpack.c.h.b16 %v555
        %v2842 = vunpack.c.l.b16 %v556
        %v2843 = vunpack.c.h.b16 %v556
        %v2844 = vunpack.c.l.b16 %v557
        %v2845 = vunpack.c.h.b16 %v557
        %v2846 = vunpack.c.l.b16 %v558
        %v2847 = vunpack.c.h.b16 %v558
        %v2848 = vunpack.c.l.b16 %v559
        %v2849 = vunpack.c.h.b16 %v559
        %v2850 = vunpack.c.l.b16 %v560
        %v2851 = vunpack.c.h.b16 %v560
        %v2852 = vunpack.c.l.b16 %v561
        %v2853 = vunpack.c.h.b16 %v561
        %v2854 = vunpack.c.l.b16 %v562
        %v2855 = vunpack.c.h.b16 %v562
        %v2856 = vunpack.c.l.b16 %v563
        %v2857 = vunpack.c.h.b16 %v563
        %v2858 = vunpack.c.l.b16 %v564
        %v2859 = vunpack.c.h.b16 %v564
        %v2860 = vunpack.c.l.b16 %v565
        %v2861 = vunpack.c.h.b16 %v565
        %v2862 = vunpack.c.l.b16 %v566
        %v2863 = vunpack.c.h.b16 %v566
        %v2864 = vunpack.c.l.b16 %v567
        %v2865 = vunpack.c.h.b16 %v567
        %v2866 = vunpack.c.l.b16 %v568
        %v2867 = vunpack.c.h.b16 %v568
        %v2868 = vunpack.c.l.b16 %v569
        %v2869 = vunpack.c.h.b16 %v569
        %v2870 = vunpack.c.l.b16 %v570
        %v2871 = vunpack.c.h.b16 %v570
        %v2872 = vunpack.c.l.b16 %v571
        %v2873 = vunpack.c.h.b16 %v571
        %v2874 = vunpack.c.l.b16 %v572
        %v2875 = vunpack.c.h.b16 %v572
        %v2876 = vunpack.c.l.b16 %v573
        %v2877 = vunpack.c.h.b16 %v573
        %v2878 = vunpack.c.l.b16 %v574
        %v2879 = vunpack.c.h.b16 %v574
        %v2880 = vunpack.c.l.b16 %v575
        %v2881 = vunpack.c.h.b16 %v575
        %v2882 = vunpack.c.l.b16 %v576
        %v2883 = vunpack.c.h.b16 %v576
        %v2884 = vunpack.c.l.b16 %v577
        %v2885 = vunpack.c.h.b16 %v577
        %v2886 = vunpack.c.l.b16 %v578
        %v2887 = vunpack.c.h.b16 %v578
        %v2888 = vunpack.c.l.b16 %v579
        %v2889 = vunpack.c.h.b16 %v579
        %v2890 = vunpack.c.l.b16 %v580
        %v2891 = vunpack.c.h.b16 %v580
        %v2892 = vunpack.c.l.b16 %v581
        %v2893 = vunpack.c.h.b16 %v581
        %v2894 = vunpack.c.l.b16 %v582
        %v2895 = vunpack.c.h.b16 %v582
        %v2896 = vunpack.c.l.b16 %v583
        %v2897 = vunpack.c.h.b16 %v583
        %v2898 = vunpack.c.l.b16 %v584
        %v2899 = vunpack.c.h.b16 %v584
        %v2900 = vunpack.c.l.b16 %v585
        %v2901 = vunpack.c.h.b16 %v585
        %v2902 = vunpack.c.l.b16 %v586
        %v2903 = vunpack.c.h.b16 %v586
        %v2904 = vunpack.c.l.b16 %v587
        %v2905 = vunpack.c.h.b16 %v587
        %v2906 = vunpack.c.l.b16 %v588
        %v2907 = vunpack.c.h.b16 %v588
        %v2908 = vunpack.c.l.b16 %v589
        %v2909 = vunpack.c.h.b16 %v589
        %v2910 = vunpack.c.l.b16 %v590
        %v2911 = vunpack.c.h.b16 %v590
        %v2912 = vunpack.c.l.b16 %v591
        %v2913 = vunpack.c.h.b16 %v591
        %v2914 = vunpack.c.l.b16 %v592
        %v2915 = vunpack.c.h.b16 %v592
        %v2916 = vunpack.c.l.b16 %v593
        %v2917 = vunpack.c.h.b16 %v593
        %v2918 = vunpack.c.l.b16 %v594
        %v2919 = vunpack.c.h.b16 %v594
        %v2920 = vunpack.c.l.b16 %v595
        %v2921 = vunpack.c.h.b16 %v595
        %v2922 = vunpack.c.l.b16 %v596
        %v2923 = vunpack.c.h.b16 %v596
        %v2924 = vunpack.c.l.b16 %v597
        %v2925 = vunpack.c.h.b16 %v597
        %v2926 = vunpack.c.l.b16 %v598
        %v2927 = vunpack.c.h.b16 %v598
        %v2928 = vunpack.c.l.b16 %v599
        %v2929 = vunpack.c.h.b16 %v599
        %v2930 = vunpack.c.l.b16 %v600
        %v2931 = vunpack.c.h.b16 %v600
        %v2932 = vunpack.c.l.b16 %v601
        %v2933 = vunpack.c.h.b16 %v601
        %v2934 = vunpack.c.l.b16 %v602
        %v2935 = vunpack.c.h.b16 %v602
        %v2936 = vunpack.c.l.b16 %v603
        %v2937 = vunpack.c.h.b16 %v603
        %v2938 = vunpack.c.l.b16 %v604
        %v2939 = vunpack.c.h.b16 %v604
        %v2940 = vunpack.c.l.b16 %v605
        %v2941 = vunpack.c.h.b16 %v605
        %v2942 = vunpack.c.l.b16 %v606
        %v2943 = vunpack.c.h.b16 %v606
        %v2944 = vunpack.c.l.b16 %v607
        %v2945 = vunpack.c.h.b16 %v607
        %v2946 = vunpack.c.l.b16 %v608
        %v2947 = vunpack.c.h.b16 %v608
        %v2948 = vunpack.c.l.b16 %v609
        %v2949 = vunpack.c.h.b16 %v609
        %v2950 = vunpack.c.l.b16 %v610
        %v2951 = vunpack.c.h.b16 %v610
        %v2952 = vunpack.c.l.b16 %v611
        %v2953 = vunpack.c.h.b16 %v611
        %v2954 = vunpack.c.l.b16 %v612
        %v2955 = vunpack.c.h.b16 %v612
        %v2956 = vunpack.c.l.b16 %v613
        %v2957 = vunpack.c.h.b16 %v613
        %v2958 = vunpack.c.l.b16 %v614
        %v2959 = vunpack.c.h.b16 %v614
        %v2960 = vunpack.c.l.b16 %v615
        %v2961 = vunpack.c.h.b16 %v615
        %v2962 = vunpack.c.l.b16 %v616
        %v2963 = vunpack.c.h.b16 %v616
        %v2964 = vunpack.c.l.b16 %v617
        %v2965 = vunpack.c.h.b16 %v617
        %v2966 = vunpack.c.l.b16 %v618
        %v2967 = vunpack.c.h.b16 %v618
        %v2968 = vunpack.c.l.b16 %v619
        %v2969 = vunpack.c.h.b16 %v619
        %v2970 = vunpack.c.l.b16 %v620
        %v2971 = vunpack.c.h.b16 %v620
        %v2972 = vunpack.c.l.b16 %v621
        %v2973 = vunpack.c.h.b16 %v621
        %v2974 = vunpack.c.l.b16 %v622
        %v2975 = vunpack.c.h.b16 %v622
        %v2976 = vunpack.c.l.b16 %v623
        %v2977 = vunpack.c.h.b16 %v623
        %v2978 = vunpack.c.l.b16 %v624
        %v2979 = vunpack.c.h.b16 %v624
        %v2980 = vunpack.c.l.b16 %v625
        %v2981 = vunpack.c.h.b16 %v625
        %v2982 = vunpack.c.l.b16 %v626
        %v2983 = vunpack.c.h.b16 %v626
        %v2984 = vunpack.c.l.b16 %v627
        %v2985 = vunpack.c.h.b16 %v627
        %v2986 = vunpack.c.l.b16 %v628
        %v2987 = vunpack.c.h.b16 %v628
        %v2988 = vunpack.c.l.b16 %v629
        %v2989 = vunpack.c.h.b16 %v629
        %v2990 = vunpack.c.l.b16 %v630
        %v2991 = vunpack.c.h.b16 %v630
        %v2992 = vunpack.c.l.b16 %v631
        %v2993 = vunpack.c.h.b16 %v631
        %v2994 = vunpack.c.l.b16 %v632
        %v2995 = vunpack.c.h.b16 %v632
        %v2996 = vunpack.c.l.b16 %v633
        %v2997 = vunpack.c.h.b16 %v633
        %v2998 = vunpack.c.l.b16 %v634
        %v2999 = vunpack.c.h.b16 %v634
        %v3000 = vunpack.c.l.b16 %v635
        %v3001 = vunpack.c.h.b16 %v635
        %v3002 = vunpack.c.l.b16 %v636
        %v3003 = vunpack.c.h.b16 %v636
        %v3004 = vunpack.c.l.b16 %v637
        %v3005 = vunpack.c.h.b16 %v637
        %v3006 = vunpack.c.l.b16 %v638
        %v3007 = vunpack.c.h.b16 %v638
        %v3008 = vunpack.c.l.b16 %v639
        %v3009 = vunpack.c.h.b16 %v639
        %v3010 = vunpack.c.l.b16 %v640
        %v3011 = vunpack.c.h.b16 %v640
        %v3012 = vunpack.c.l.b16 %v641
        %v3013 = vunpack.c.h.b16 %v641
        %v3014 = vunpack.c.l.b16 %v642
        %v3015 = vunpack.c.h.b16 %v642
        %v3016 = vunpack.c.l.b16 %v643
        %v3017 = vunpack.c.h.b16 %v643
        %v3018 = vunpack.c.l.b16 %v644
        %v3019 = vunpack.c.h.b16 %v644
        %v3020 = vunpack.c.l.b16 %v645
        %v3021 = vunpack.c.h.b16 %v645
        %v3022 = vunpack.c.l.b16 %v646
        %v3023 = vunpack.c.h.b16 %v646
        %v3024 = vunpack.c.l.b16 %v647
        %v3025 = vunpack.c.h.b16 %v647
        %v3026 = vunpack.c.l.b16 %v648
        %v3027 = vunpack.c.h.b16 %v648
        %v3028 = vunpack.c.l.b16 %v649
        %v3029 = vunpack.c.h.b16 %v649
        %v3030 = vunpack.c.l.b16 %v650
        %v3031 = vunpack.c.h.b16 %v650
        %v3032 = vunpack.c.l.b16 %v651
        %v3033 = vunpack.c.h.b16 %v651
        %v3034 = vunpack.c.l.b16 %v652
        %v3035 = vunpack.c.h.b16 %v652
        %v3036 = vunpack.c.l.b16 %v653
        %v3037 = vunpack.c.h.b16 %v653
        %v3038 = vunpack.c.l.b16 %v654
        %v3039 = vunpack.c.h.b16 %v654
        %v3040 = vunpack.c.l.b16 %v655
        %v3041 = vunpack.c.h.b16 %v655
        %v3042 = vunpack.c.l.b16 %v656
        %v3043 = vunpack.c.h.b16 %v656
        %v3044 = vunpack.c.l.b16 %v657
        %v3045 = vunpack.c.h.b16 %v657
        %v3046 = vunpack.c.l.b16 %v658
        %v3047 = vunpack.c.h.b16 %v658
        %v3048 = vunpack.c.l.b16 %v659
        %v3049 = vunpack.c.h.b16 %v659
        %v3050 = vunpack.c.l.b16 %v660
        %v3051 = vunpack.c.h.b16 %v660
        %v3052 = vunpack.c.l.b16 %v661
        %v3053 = vunpack.c.h.b16 %v661
        %v3054 = vunpack.c.l.b16 %v662
        %v3055 = vunpack.c.h.b16 %v662
        %v3056 = vunpack.c.l.b16 %v663
        %v3057 = vunpack.c.h.b16 %v663
        %v3058 = vunpack.c.l.b16 %v664
        %v3059 = vunpack.c.h.b16 %v664
        %v3060 = vunpack.c.l.b16 %v665
        %v3061 = vunpack.c.h.b16 %v665
        %v3062 = vunpack.c.l.b16 %v666
        %v3063 = vunpack.c.h.b16 %v666
        %v3064 = vunpack.c.l.b16 %v667
        %v3065 = vunpack.c.h.b16 %v667
        %v3066 = vunpack.c.l.b16 %v668
        %v3067 = vunpack.c.h.b16 %v668
        %v3068 = vunpack.c.l.b16 %v669
        %v3069 = vunpack.c.h.b16 %v669
        %v3070 = vunpack.c.l.b16 %v670
        %v3071 = vunpack.c.h.b16 %v670
        %v3072 = vunpack.c.l.b16 %v671
        %v3073 = vunpack.c.h.b16 %v671
        %v3074 = vpack.c.b16 %v2698, %v2690
        %v3075 = vpack.c.b16 %v2699, %v2691
        %v3076 = vpack.c.b16 %v2700, %v2692
        %v3077 = vpack.c.b16 %v2701, %v2693
        %v3078 = vpack.c.b16 %v2702, %v2694
        %v3079 = vpack.c.b16 %v2703, %v2695
        %v3080 = vpack.c.b16 %v2704, %v2696
        %v3081 = vpack.c.b16 %v2705, %v2697
        %v3082 = vpack.c.b16 %v2714, %v2706
        %v3083 = vpack.c.b16 %v2715, %v2707
        %v3084 = vpack.c.b16 %v2716, %v2708
        %v3085 = vpack.c.b16 %v2717, %v2709
        %v3086 = vpack.c.b16 %v2718, %v2710
        %v3087 = vpack.c.b16 %v2719, %v2711
        %v3088 = vpack.c.b16 %v2720, %v2712
        %v3089 = vpack.c.b16 %v2721, %v2713
        %v3090 = vpack.c.b16 %v2730, %v2722
        %v3091 = vpack.c.b16 %v2731, %v2723
        %v3092 = vpack.c.b16 %v2732, %v2724
        %v3093 = vpack.c.b16 %v2733, %v2725
        %v3094 = vpack.c.b16 %v2734, %v2726
        %v3095 = vpack.c.b16 %v2735, %v2727
        %v3096 = vpack.c.b16 %v2736, %v2728
        %v3097 = vpack.c.b16 %v2737, %v2729
        %v3098 = vpack.c.b16 %v2746, %v2738
        %v3099 = vpack.c.b16 %v2747, %v2739
        %v3100 = vpack.c.b16 %v2748, %v2740
        %v3101 = vpack.c.b16 %v2749, %v2741
        %v3102 = vpack.c.b16 %v2750, %v2742
        %v3103 = vpack.c.b16 %v2751, %v2743
        %v3104 = vpack.c.b16 %v2752, %v2744
        %v3105 = vpack.c.b16 %v2753, %v2745
        %v3106 = vpack.c.b16 %v2762, %v2754
        %v3107 = vpack.c.b16 %v2763, %v2755
        %v3108 = vpack.c.b16 %v2764, %v2756
        %v3109 = vpack.c.b16 %v2765, %v2757
        %v3110 = vpack.c.b16 %v2766, %v2758
        %v3111 = vpack.c.b16 %v2767, %v2759
        %v3112 = vpack.c.b16 %v2768, %v2760
        %v3113 = vpack.c.b16 %v2769, %v2761
        %v3114 = vpack.c.b16 %v2778, %v2770
        %v3115 = vpack.c.b16 %v2779, %v2771
        %v3116 = vpack.c.b16 %v2780, %v2772
        %v3117 = vpack.c.b16 %v2781, %v2773
        %v3118 = vpack.c.b16 %v2782, %v2774
        %v3119 = vpack.c.b16 %v2783, %v2775
        %v3120 = vpack.c.b16 %v2784, %v2776
        %v3121 = vpack.c.b16 %v2785, %v2777
        %v3122 = vpack.c.b16 %v2794, %v2786
        %v3123 = vpack.c.b16 %v2795, %v2787
        %v3124 = vpack.c.b16 %v2796, %v2788
        %v3125 = vpack.c.b16 %v2797, %v2789
        %v3126 = vpack.c.b16 %v2798, %v2790
        %v3127 = vpack.c.b16 %v2799, %v2791
        %v3128 = vpack.c.b16 %v2800, %v2792
        %v3129 = vpack.c.b16 %v2801, %v2793
        %v3130 = vpack.c.b16 %v2810, %v2802
        %v3131 = vpack.c.b16 %v2811, %v2803
        %v3132 = vpack.c.b16 %v2812, %v2804
        %v3133 = vpack.c.b16 %v2813, %v2805
        %v3134 = vpack.c.b16 %v2814, %v2806
        %v3135 = vpack.c.b16 %v2815, %v2807
        %v3136 = vpack.c.b16 %v2816, %v2808
        %v3137 = vpack.c.b16 %v2817, %v2809
        %v3138 = vpack.c.b16 %v2826, %v2818
        %v3139 = vpack.c.b16 %v2827, %v2819
        %v3140 = vpack.c.b16 %v2828, %v2820
        %v3141 = vpack.c.b16 %v2829, %v2821
        %v3142 = vpack.c.b16 %v2830, %v2822
        %v3143 = vpack.c.b16 %v2831, %v2823
        %v3144 = vpack.c.b16 %v2832, %v2824
        %v3145 = vpack.c.b16 %v2833, %v2825
        %v3146 = vpack.c.b16 %v2842, %v2834
        %v3147 = vpack.c.b16 %v2843, %v2835
        %v3148 = vpack.c.b16 %v2844, %v2836
        %v3149 = vpack.c.b16 %v2845, %v2837
        %v3150 = vpack.c.b16 %v2846, %v2838
        %v3151 = vpack.c.b16 %v2847, %v2839
        %v3152 = vpack.c.b16 %v2848, %v2840
        %v3153 = vpack.c.b16 %v2849, %v2841
        %v3154 = vpack.c.b16 %v2858, %v2850
        %v3155 = vpack.c.b16 %v2859, %v2851
        %v3156 = vpack.c.b16 %v2860, %v2852
        %v3157 = vpack.c.b16 %v2861, %v2853
        %v3158 = vpack.c.b16 %v2862, %v2854
        %v3159 = vpack.c.b16 %v2863, %v2855
        %v3160 = vpack.c.b16 %v2864, %v2856
        %v3161 = vpack.c.b16 %v2865, %v2857
        %v3162 = vpack.c.b16 %v2874, %v2866
        %v3163 = vpack.c.b16 %v2875, %v2867
        %v3164 = vpack.c.b16 %v2876, %v2868
        %v3165 = vpack.c.b16 %v2877, %v2869
        %v3166 = vpack.c.b16 %v2878, %v2870
        %v3167 = vpack.c.b16 %v2879, %v2871
        %v3168 = vpack.c.b16 %v2880, %v2872
        %v3169 = vpack.c.b16 %v2881, %v2873
        %v3170 = vpack.c.b16 %v2890, %v2882
        %v3171 = vpack.c.b16 %v2891, %v2883
        %v3172 = vpack.c.b16 %v2892, %v2884
        %v3173 = vpack.c.b16 %v2893, %v2885
        %v3174 = vpack.c.b16 %v2894, %v2886
        %v3175 = vpack.c.b16 %v2895, %v2887
        %v3176 = vpack.c.b16 %v2896, %v2888
        %v3177 = vpack.c.b16 %v2897, %v2889
        %v3178 = vpack.c.b16 %v2906, %v2898
        %v3179 = vpack.c.b16 %v2907, %v2899
        %v3180 = vpack.c.b16 %v2908, %v2900
        %v3181 = vpack.c.b16 %v2909, %v2901
        %v3182 = vpack.c.b16 %v2910, %v2902
        %v3183 = vpack.c.b16 %v2911, %v2903
        %v3184 = vpack.c.b16 %v2912, %v2904
        %v3185 = vpack.c.b16 %v2913, %v2905
        %v3186 = vpack.c.b16 %v2922, %v2914
        %v3187 = vpack.c.b16 %v2923, %v2915
        %v3188 = vpack.c.b16 %v2924, %v2916
        %v3189 = vpack.c.b16 %v2925, %v2917
        %v3190 = vpack.c.b16 %v2926, %v2918
        %v3191 = vpack.c.b16 %v2927, %v2919
        %v3192 = vpack.c.b16 %v2928, %v2920
        %v3193 = vpack.c.b16 %v2929, %v2921
        %v3194 = vpack.c.b16 %v2938, %v2930
        %v3195 = vpack.c.b16 %v2939, %v2931
        %v3196 = vpack.c.b16 %v2940, %v2932
        %v3197 = vpack.c.b16 %v2941, %v2933
        %v3198 = vpack.c.b16 %v2942, %v2934
        %v3199 = vpack.c.b16 %v2943, %v2935
        %v3200 = vpack.c.b16 %v2944, %v2936
        %v3201 = vpack.c.b16 %v2945, %v2937
        %v3202 = vpack.c.b16 %v2954, %v2946
        %v3203 = vpack.c.b16 %v2955, %v2947
        %v3204 = vpack.c.b16 %v2956, %v2948
        %v3205 = vpack.c.b16 %v2957, %v2949
        %v3206 = vpack.c.b16 %v2958, %v2950
        %v3207 = vpack.c.b16 %v2959, %v2951
        %v3208 = vpack.c.b16 %v2960, %v2952
        %v3209 = vpack.c.b16 %v2961, %v2953
        %v3210 = vpack.c.b16 %v2970, %v2962
        %v3211 = vpack.c.b16 %v2971, %v2963
        %v3212 = vpack.c.b16 %v2972, %v2964
        %v3213 = vpack.c.b16 %v2973, %v2965
        %v3214 = vpack.c.b16 %v2974, %v2966
        %v3215 = vpack.c.b16 %v2975, %v2967
        %v3216 = vpack.c.b16 %v2976, %v2968
        %v3217 = vpack.c.b16 %v2977, %v2969
        %v3218 = vpack.c.b16 %v2986, %v2978
        %v3219 = vpack.c.b16 %v2987, %v2979
        %v3220 = vpack.c.b16 %v2988, %v2980
        %v3221 = vpack.c.b16 %v2989, %v2981
        %v3222 = vpack.c.b16 %v2990, %v2982
        %v3223 = vpack.c.b16 %v2991, %v2983
        %v3224 = vpack.c.b16 %v2992, %v2984
        %v3225 = vpack.c.b16 %v2993, %v2985
        %v3226 = vpack.c.b16 %v3002, %v2994
        %v3227 = vpack.c.b16 %v3003, %v2995
        %v3228 = vpack.c.b16 %v3004, %v2996
        %v3229 = vpack.c.b16 %v3005, %v2997
        %v3230 = vpack.c.b16 %v3006, %v2998
        %v3231 = vpack.c.b16 %v3007, %v2999
        %v3232 = vpack.c.b16 %v3008, %v3000
        %v3233 = vpack.c.b16 %v3009, %v3001
        %v3234 = vpack.c.b16 %v3018, %v3010
        %v3235 = vpack.c.b16 %v3019, %v3011
        %v3236 = vpack.c.b16 %v3020, %v3012
        %v3237 = vpack.c.b16 %v3021, %v3013
        %v3238 = vpack.c.b16 %v3022, %v3014
        %v3239 = vpack.c.b16 %v3023, %v3015
        %v3240 = vpack.c.b16 %v3024, %v3016
        %v3241 = vpack.c.b16 %v3025, %v3017
        %v3242 = vpack.c.b16 %v3034, %v3026
        %v3243 = vpack.c.b16 %v3035, %v3027
        %v3244 = vpack.c.b16 %v3036, %v3028
        %v3245 = vpack.c.b16 %v3037, %v3029
        %v3246 = vpack.c.b16 %v3038, %v3030
        %v3247 = vpack.c.b16 %v3039, %v3031
        %v3248 = vpack.c.b16 %v3040, %v3032
        %v3249 = vpack.c.b16 %v3041, %v3033
        %v3250 = vpack.c.b16 %v3050, %v3042
        %v3251 = vpack.c.b16 %v3051, %v3043
        %v3252 = vpack.c.b16 %v3052, %v3044
        %v3253 = vpack.c.b16 %v3053, %v3045
        %v3254 = vpack.c.b16 %v3054, %v3046
        %v3255 = vpack.c.b16 %v3055, %v3047
        %v3256 = vpack.c.b16 %v3056, %v3048
        %v3257 = vpack.c.b16 %v3057, %v3049
        %v3258 = vpack.c.b16 %v3066, %v3058
        %v3259 = vpack.c.b16 %v3067, %v3059
        %v3260 = vpack.c.b16 %v3068, %v3060
        %v3261 = vpack.c.b16 %v3069, %v3061
        %v3262 = vpack.c.b16 %v3070, %v3062
        %v3263 = vpack.c.b16 %v3071, %v3063
        %v3264 = vpack.c.b16 %v3072, %v3064
        %v3265 = vpack.c.b16 %v3073, %v3065
        %3458 = vmatprep.subr.bf16.mxu0 %v3075
        %3459 = vmatpush1.bf16.msra.mxu0 %v3074
        %3460 = vmatprep.subr.bf16.mxu0 %v3083
        %3461 = vmatpush1.bf16.msra.mxu0 %v3082
        %3462 = vmatprep.subr.bf16.mxu0 %v3091
        %3463 = vmatpush1.bf16.msra.mxu0 %v3090
        %3464 = vmatprep.subr.bf16.mxu0 %v3099
        %3465 = vmatpush1.bf16.msra.mxu0 %v3098
        %3466 = vmatprep.subr.bf16.mxu0 %v3107
        %3467 = vmatpush1.bf16.msra.mxu0 %v3106
        %3468 = vmatprep.subr.bf16.mxu0 %v3115
        %3469 = vmatpush1.bf16.msra.mxu0 %v3114
        %3470 = vmatprep.subr.bf16.mxu0 %v3123
        %3471 = vmatpush1.bf16.msra.mxu0 %v3122
        %3472 = vmatprep.subr.bf16.mxu0 %v3131
        %3473 = vmatpush1.bf16.msra.mxu0 %v3130
        %3474 = vmatprep.subr.bf16.mxu0 %v3139
        %3475 = vmatpush1.bf16.msra.mxu0 %v3138
        %3476 = vmatprep.subr.bf16.mxu0 %v3147
        %3477 = vmatpush1.bf16.msra.mxu0 %v3146
        %3478 = vmatprep.subr.bf16.mxu0 %v3155
        %3479 = vmatpush1.bf16.msra.mxu0 %v3154
        %3480 = vmatprep.subr.bf16.mxu0 %v3163
        %3481 = vmatpush1.bf16.msra.mxu0 %v3162
        %3482 = vmatprep.subr.bf16.mxu0 %v3171
        %3483 = vmatpush1.bf16.msra.mxu0 %v3170
        %3484 = vmatprep.subr.bf16.mxu0 %v3179
        %3485 = vmatpush1.bf16.msra.mxu0 %v3178
        %3486 = vmatprep.subr.bf16.mxu0 %v3187
        %3487 = vmatpush1.bf16.msra.mxu0 %v3186
        %3488 = vmatprep.subr.bf16.mxu0 %v3195
        %3489 = vmatpush1.bf16.msra.mxu0 %v3194
        %3490 = vmatprep.mubr.bf16.mxu0 %v1181
        %3491 = vmatmul.mubr.bf16.gmra.mrb[0].mxu0 %v1180
        %v3492 = vpop.f32.mrb[0].mxu0
        %v3493 = vadd.f32 %v2243, %v3492
        %v3494 = vpop.f32.mrb[0].mxu0
        %v3495 = vadd.f32 %v2245, %v3494
        %v3496 = vpop.f32.mrb[0].mxu0
        %v3497 = vpop.f32.mrb[0].mxu0
        %3498 = vdwg.mxu0
        %3499 = vmatprep.subr.bf16.mxu0 %v3203
        %3500 = vmatpush1.bf16.msra.mxu0 %v3202
        %3501 = vmatprep.subr.bf16.mxu0 %v3211
        %3502 = vmatpush1.bf16.msra.mxu0 %v3210
        %3503 = vmatprep.subr.bf16.mxu0 %v3219
        %3504 = vmatpush1.bf16.msra.mxu0 %v3218
        %3505 = vmatprep.subr.bf16.mxu0 %v3227
        %3506 = vmatpush1.bf16.msra.mxu0 %v3226
        %3507 = vmatprep.subr.bf16.mxu0 %v3235
        %3508 = vmatpush1.bf16.msra.mxu0 %v3234
        %3509 = vmatprep.subr.bf16.mxu0 %v3243
        %3510 = vmatpush1.bf16.msra.mxu0 %v3242
        %3511 = vmatprep.subr.bf16.mxu0 %v3251
        %3512 = vmatpush1.bf16.msra.mxu0 %v3250
        %3513 = vmatprep.subr.bf16.mxu0 %v3259
        %3514 = vmatpush1.bf16.msra.mxu0 %v3258
        %3515 = vmatprep.subr.bf16.mxu0 0
        %3516 = vmatpush1.bf16.msra.mxu0 0
        %3517 = vmatprep.subr.bf16.mxu0 0
        %3518 = vmatpush1.bf16.msra.mxu0 0
        %3519 = vmatprep.subr.bf16.mxu0 0
        %3520 = vmatpush1.bf16.msra.mxu0 0
        %3521 = vmatprep.subr.bf16.mxu0 0
        %3522 = vmatpush1.bf16.msra.mxu0 0
        %3523 = vmatprep.subr.bf16.mxu0 0
        %3524 = vmatpush1.bf16.msra.mxu0 0
        %3525 = vmatprep.subr.bf16.mxu0 0
        %3526 = vmatpush1.bf16.msra.mxu0 0
        %3527 = vmatprep.subr.bf16.mxu0 0
        %3528 = vmatpush1.bf16.msra.mxu0 0
        %3529 = vmatprep.subr.bf16.mxu0 0
        %3530 = vmatpush1.bf16.msra.mxu0 0
        %3531 = vmatprep.mubr.bf16.mxu0 0
        %3532 = vmatmul.mubr.bf16.gmra.mrb[0].mxu0 %v1182
        %v3533 = vpop.f32.mrb[0].mxu0
        %v3534 = vadd.f32 %v3493, %v3533
        %v3535 = vpop.f32.mrb[0].mxu0
        %v3536 = vadd.f32 %v3495, %v3535
        %v3537 = vpop.f32.mrb[0].mxu0
        %v3538 = vpop.f32.mrb[0].mxu0
        %3539 = vdwg.mxu0
        %3540 = vmatprep.subr.bf16.mxu0 %v3077
        %3541 = vmatpush1.bf16.msra.mxu0 %v3076
        %3542 = vmatprep.subr.bf16.mxu0 %v3085
        %3543 = vmatpush1.bf16.msra.mxu0 %v3084
        %3544 = vmatprep.subr.bf16.mxu0 %v3093
        %3545 = vmatpush1.bf16.msra.mxu0 %v3092
        %3546 = vmatprep.subr.bf16.mxu0 %v3101
        %3547 = vmatpush1.bf16.msra.mxu0 %v3100
        %3548 = vmatprep.subr.bf16.mxu0 %v3109
        %3549 = vmatpush1.bf16.msra.mxu0 %v3108
        %3550 = vmatprep.subr.bf16.mxu0 %v3117
        %3551 = vmatpush1.bf16.msra.mxu0 %v3116
        %3552 = vmatprep.subr.bf16.mxu0 %v3125
        %3553 = vmatpush1.bf16.msra.mxu0 %v3124
        %3554 = vmatprep.subr.bf16.mxu0 %v3133
        %3555 = vmatpush1.bf16.msra.mxu0 %v3132
        %3556 = vmatprep.subr.bf16.mxu0 %v3141
        %3557 = vmatpush1.bf16.msra.mxu0 %v3140
        %3558 = vmatprep.subr.bf16.mxu0 %v3149
        %3559 = vmatpush1.bf16.msra.mxu0 %v3148
        %3560 = vmatprep.subr.bf16.mxu0 %v3157
        %3561 = vmatpush1.bf16.msra.mxu0 %v3156
        %3562 = vmatprep.subr.bf16.mxu0 %v3165
        %3563 = vmatpush1.bf16.msra.mxu0 %v3164
        %3564 = vmatprep.subr.bf16.mxu0 %v3173
        %3565 = vmatpush1.bf16.msra.mxu0 %v3172
        %3566 = vmatprep.subr.bf16.mxu0 %v3181
        %3567 = vmatpush1.bf16.msra.mxu0 %v3180
        %3568 = vmatprep.subr.bf16.mxu0 %v3189
        %3569 = vmatpush1.bf16.msra.mxu0 %v3188
        %3570 = vmatprep.subr.bf16.mxu0 %v3197
        %3571 = vmatpush1.bf16.msra.mxu0 %v3196
        %3572 = vmatprep.mubr.bf16.mxu0 %v1181
        %3573 = vmatmul.mubr.bf16.gmra.mrb[0].mxu0 %v1180
        %v3574 = vpop.f32.mrb[0].mxu0
        %v3575 = vadd.f32 %v2325, %v3574
        %v3576 = vpop.f32.mrb[0].mxu0
        %v3577 = vadd.f32 %v2327, %v3576
        %v3578 = vpop.f32.mrb[0].mxu0
        %v3579 = vpop.f32.mrb[0].mxu0
        %3580 = vdwg.mxu0
        %3581 = vmatprep.subr.bf16.mxu0 %v3205
        %3582 = vmatpush1.bf16.msra.mxu0 %v3204
        %3583 = vmatprep.subr.bf16.mxu0 %v3213
        %3584 = vmatpush1.bf16.msra.mxu0 %v3212
        %3585 = vmatprep.subr.bf16.mxu0 %v3221
        %3586 = vmatpush1.bf16.msra.mxu0 %v3220
        %3587 = vmatprep.subr.bf16.mxu0 %v3229
        %3588 = vmatpush1.bf16.msra.mxu0 %v3228
        %3589 = vmatprep.subr.bf16.mxu0 %v3237
        %3590 = vmatpush1.bf16.msra.mxu0 %v3236
        %3591 = vmatprep.subr.bf16.mxu0 %v3245
        %3592 = vmatpush1.bf16.msra.mxu0 %v3244
        %3593 = vmatprep.subr.bf16.mxu0 %v3253
        %3594 = vmatpush1.bf16.msra.mxu0 %v3252
        %3595 = vmatprep.subr.bf16.mxu0 %v3261
        %3596 = vmatpush1.bf16.msra.mxu0 %v3260
        %3597 = vmatprep.subr.bf16.mxu0 0
        %3598 = vmatpush1.bf16.msra.mxu0 0
        %3599 = vmatprep.subr.bf16.mxu0 0
        %3600 = vmatpush1.bf16.msra.mxu0 0
        %3601 = vmatprep.subr.bf16.mxu0 0
        %3602 = vmatpush1.bf16.msra.mxu0 0
        %3603 = vmatprep.subr.bf16.mxu0 0
        %3604 = vmatpush1.bf16.msra.mxu0 0
        %3605 = vmatprep.subr.bf16.mxu0 0
        %3606 = vmatpush1.bf16.msra.mxu0 0
        %3607 = vmatprep.subr.bf16.mxu0 0
        %3608 = vmatpush1.bf16.msra.mxu0 0
        %3609 = vmatprep.subr.bf16.mxu0 0
        %3610 = vmatpush1.bf16.msra.mxu0 0
        %3611 = vmatprep.subr.bf16.mxu0 0
        %3612 = vmatpush1.bf16.msra.mxu0 0
        %3613 = vmatprep.mubr.bf16.mxu0 0
        %3614 = vmatmul.mubr.bf16.gmra.mrb[0].mxu0 %v1182
        %v3615 = vpop.f32.mrb[0].mxu0
        %v3616 = vadd.f32 %v3575, %v3615
        %v3617 = vpop.f32.mrb[0].mxu0
        %v3618 = vadd.f32 %v3577, %v3617
        %v3619 = vpop.f32.mrb[0].mxu0
        %v3620 = vpop.f32.mrb[0].mxu0
        %3621 = vdwg.mxu0
        %3622 = vmatprep.subr.bf16.mxu0 %v3079
        %3623 = vmatpush1.bf16.msra.mxu0 %v3078
        %3624 = vmatprep.subr.bf16.mxu0 %v3087
        %3625 = vmatpush1.bf16.msra.mxu0 %v3086
        %3626 = vmatprep.subr.bf16.mxu0 %v3095
        %3627 = vmatpush1.bf16.msra.mxu0 %v3094
        %3628 = vmatprep.subr.bf16.mxu0 %v3103
        %3629 = vmatpush1.bf16.msra.mxu0 %v3102
        %3630 = vmatprep.subr.bf16.mxu0 %v3111
        %3631 = vmatpush1.bf16.msra.mxu0 %v3110
        %3632 = vmatprep.subr.bf16.mxu0 %v3119
        %3633 = vmatpush1.bf16.msra.mxu0 %v3118
        %3634 = vmatprep.subr.bf16.mxu0 %v3127
        %3635 = vmatpush1.bf16.msra.mxu0 %v3126
        %3636 = vmatprep.subr.bf16.mxu0 %v3135
        %3637 = vmatpush1.bf16.msra.mxu0 %v3134
        %3638 = vmatprep.subr.bf16.mxu0 %v3143
        %3639 = vmatpush1.bf16.msra.mxu0 %v3142
        %3640 = vmatprep.subr.bf16.mxu0 %v3151
        %3641 = vmatpush1.bf16.msra.mxu0 %v3150
        %3642 = vmatprep.subr.bf16.mxu0 %v3159
        %3643 = vmatpush1.bf16.msra.mxu0 %v3158
        %3644 = vmatprep.subr.bf16.mxu0 %v3167
        %3645 = vmatpush1.bf16.msra.mxu0 %v3166
        %3646 = vmatprep.subr.bf16.mxu0 %v3175
        %3647 = vmatpush1.bf16.msra.mxu0 %v3174
        %3648 = vmatprep.subr.bf16.mxu0 %v3183
        %3649 = vmatpush1.bf16.msra.mxu0 %v3182
        %3650 = vmatprep.subr.bf16.mxu0 %v3191
        %3651 = vmatpush1.bf16.msra.mxu0 %v3190
        %3652 = vmatprep.subr.bf16.mxu0 %v3199
        %3653 = vmatpush1.bf16.msra.mxu0 %v3198
        %3654 = vmatprep.mubr.bf16.mxu0 %v1181
        %3655 = vmatmul.mubr.bf16.gmra.mrb[0].mxu0 %v1180
        %v3656 = vpop.f32.mrb[0].mxu0
        %v3657 = vadd.f32 %v2407, %v3656
        %v3658 = vpop.f32.mrb[0].mxu0
        %v3659 = vadd.f32 %v2409, %v3658
        %v3660 = vpop.f32.mrb[0].mxu0
        %v3661 = vpop.f32.mrb[0].mxu0
        %3662 = vdwg.mxu0
        %3663 = vmatprep.subr.bf16.mxu0 %v3207
        %3664 = vmatpush1.bf16.msra.mxu0 %v3206
        %3665 = vmatprep.subr.bf16.mxu0 %v3215
        %3666 = vmatpush1.bf16.msra.mxu0 %v3214
        %3667 = vmatprep.subr.bf16.mxu0 %v3223
        %3668 = vmatpush1.bf16.msra.mxu0 %v3222
        %3669 = vmatprep.subr.bf16.mxu0 %v3231
        %3670 = vmatpush1.bf16.msra.mxu0 %v3230
        %3671 = vmatprep.subr.bf16.mxu0 %v3239
        %3672 = vmatpush1.bf16.msra.mxu0 %v3238
        %3673 = vmatprep.subr.bf16.mxu0 %v3247
        %3674 = vmatpush1.bf16.msra.mxu0 %v3246
        %3675 = vmatprep.subr.bf16.mxu0 %v3255
        %3676 = vmatpush1.bf16.msra.mxu0 %v3254
        %3677 = vmatprep.subr.bf16.mxu0 %v3263
        %3678 = vmatpush1.bf16.msra.mxu0 %v3262
        %3679 = vmatprep.subr.bf16.mxu0 0
        %3680 = vmatpush1.bf16.msra.mxu0 0
        %3681 = vmatprep.subr.bf16.mxu0 0
        %3682 = vmatpush1.bf16.msra.mxu0 0
        %3683 = vmatprep.subr.bf16.mxu0 0
        %3684 = vmatpush1.bf16.msra.mxu0 0
        %3685 = vmatprep.subr.bf16.mxu0 0
        %3686 = vmatpush1.bf16.msra.mxu0 0
        %3687 = vmatprep.subr.bf16.mxu0 0
        %3688 = vmatpush1.bf16.msra.mxu0 0
        %3689 = vmatprep.subr.bf16.mxu0 0
        %3690 = vmatpush1.bf16.msra.mxu0 0
        %3691 = vmatprep.subr.bf16.mxu0 0
        %3692 = vmatpush1.bf16.msra.mxu0 0
        %3693 = vmatprep.subr.bf16.mxu0 0
        %3694 = vmatpush1.bf16.msra.mxu0 0
        %3695 = vmatprep.mubr.bf16.mxu0 0
        %3696 = vmatmul.mubr.bf16.gmra.mrb[0].mxu0 %v1182
        %v3697 = vpop.f32.mrb[0].mxu0
        %v3698 = vadd.f32 %v3657, %v3697
        %v3699 = vpop.f32.mrb[0].mxu0
        %v3700 = vadd.f32 %v3659, %v3699
        %v3701 = vpop.f32.mrb[0].mxu0
        %v3702 = vpop.f32.mrb[0].mxu0
        %3703 = vdwg.mxu0
        %3704 = vmatprep.subr.bf16.mxu0 %v3081
        %3705 = vmatpush1.bf16.msra.mxu0 %v3080
        %3706 = vmatprep.subr.bf16.mxu0 %v3089
        %3707 = vmatpush1.bf16.msra.mxu0 %v3088
        %3708 = vmatprep.subr.bf16.mxu0 %v3097
        %3709 = vmatpush1.bf16.msra.mxu0 %v3096
        %3710 = vmatprep.subr.bf16.mxu0 %v3105
        %3711 = vmatpush1.bf16.msra.mxu0 %v3104
        %3712 = vmatprep.subr.bf16.mxu0 %v3113
        %3713 = vmatpush1.bf16.msra.mxu0 %v3112
        %3714 = vmatprep.subr.bf16.mxu0 %v3121
        %3715 = vmatpush1.bf16.msra.mxu0 %v3120
        %3716 = vmatprep.subr.bf16.mxu0 %v3129
        %3717 = vmatpush1.bf16.msra.mxu0 %v3128
        %3718 = vmatprep.subr.bf16.mxu0 %v3137
        %3719 = vmatpush1.bf16.msra.mxu0 %v3136
        %3720 = vmatprep.subr.bf16.mxu0 %v3145
        %3721 = vmatpush1.bf16.msra.mxu0 %v3144
        %3722 = vmatprep.subr.bf16.mxu0 %v3153
        %3723 = vmatpush1.bf16.msra.mxu0 %v3152
        %3724 = vmatprep.subr.bf16.mxu0 %v3161
        %3725 = vmatpush1.bf16.msra.mxu0 %v3160
        %3726 = vmatprep.subr.bf16.mxu0 %v3169
        %3727 = vmatpush1.bf16.msra.mxu0 %v3168
        %3728 = vmatprep.subr.bf16.mxu0 %v3177
        %3729 = vmatpush1.bf16.msra.mxu0 %v3176
        %3730 = vmatprep.subr.bf16.mxu0 %v3185
        %3731 = vmatpush1.bf16.msra.mxu0 %v3184
        %3732 = vmatprep.subr.bf16.mxu0 %v3193
        %3733 = vmatpush1.bf16.msra.mxu0 %v3192
        %3734 = vmatprep.subr.bf16.mxu0 %v3201
        %3735 = vmatpush1.bf16.msra.mxu0 %v3200
        %3736 = vmatprep.mubr.bf16.mxu0 %v1181
        %3737 = vmatmul.mubr.bf16.gmra.mrb[0].mxu0 %v1180
        %v3738 = vpop.f32.mrb[0].mxu0
        %v3739 = vadd.f32 %v2489, %v3738
        %v3740 = vpop.f32.mrb[0].mxu0
        %v3741 = vadd.f32 %v2491, %v3740
        %v3742 = vpop.f32.mrb[0].mxu0
        %v3743 = vpop.f32.mrb[0].mxu0
        %3744 = vdwg.mxu0
        %3745 = vmatprep.subr.bf16.mxu0 %v3209
        %3746 = vmatpush1.bf16.msra.mxu0 %v3208
        %3747 = vmatprep.subr.bf16.mxu0 %v3217
        %3748 = vmatpush1.bf16.msra.mxu0 %v3216
        %3749 = vmatprep.subr.bf16.mxu0 %v3225
        %3750 = vmatpush1.bf16.msra.mxu0 %v3224
        %3751 = vmatprep.subr.bf16.mxu0 %v3233
        %3752 = vmatpush1.bf16.msra.mxu0 %v3232
        %3753 = vmatprep.subr.bf16.mxu0 %v3241
        %3754 = vmatpush1.bf16.msra.mxu0 %v3240
        %3755 = vmatprep.subr.bf16.mxu0 %v3249
        %3756 = vmatpush1.bf16.msra.mxu0 %v3248
        %3757 = vmatprep.subr.bf16.mxu0 %v3257
        %3758 = vmatpush1.bf16.msra.mxu0 %v3256
        %3759 = vmatprep.subr.bf16.mxu0 %v3265
        %3760 = vmatpush1.bf16.msra.mxu0 %v3264
        %3761 = vmatprep.subr.bf16.mxu0 0
        %3762 = vmatpush1.bf16.msra.mxu0 0
        %3763 = vmatprep.subr.bf16.mxu0 0
        %3764 = vmatpush1.bf16.msra.mxu0 0
        %3765 = vmatprep.subr.bf16.mxu0 0
        %3766 = vmatpush1.bf16.msra.mxu0 0
        %3767 = vmatprep.subr.bf16.mxu0 0
        %3768 = vmatpush1.bf16.msra.mxu0 0
        %3769 = vmatprep.subr.bf16.mxu0 0
        %3770 = vmatpush1.bf16.msra.mxu0 0
        %3771 = vmatprep.subr.bf16.mxu0 0
        %3772 = vmatpush1.bf16.msra.mxu0 0
        %3773 = vmatprep.subr.bf16.mxu0 0
        %3774 = vmatpush1.bf16.msra.mxu0 0
        %3775 = vmatprep.subr.bf16.mxu0 0
        %3776 = vmatpush1.bf16.msra.mxu0 0
        %3777 = vmatprep.mubr.bf16.mxu0 0
        %3778 = vmatmul.mubr.bf16.gmra.mrb[0].mxu0 %v1182
        %v3779 = vpop.f32.mrb[0].mxu0
        %v3780 = vadd.f32 %v3739, %v3779
        %v3781 = vpop.f32.mrb[0].mxu0
        %v3782 = vadd.f32 %v3741, %v3781
        %v3783 = vpop.f32.mrb[0].mxu0
        %v3784 = vpop.f32.mrb[0].mxu0
        %3785 = vdwg.mxu0
        %v3786 = vmax.f32 %v3534, %v3536
        %v3787 = vmax.f32 %v3616, %v3618
        %v3788 = vmax.f32 %v3786, %v3787
        %v3790 = vlaneseq
        %v3791 = vshrl.u32 %v3790, 7
        %v3792 = vsub.s32 0, %v3791
        %v3793 = vrot.slane %v1168, %v3792
        %v3795 = vadd.f32 %v3788, %v3793
        %v3796 = vmax.f32 %v3795, 0.0
        %v3797 = vmax.f32 %v3698, %v3700
        %v3798 = vmax.f32 %v3780, %v3782
        %v3799 = vmax.f32 %v3797, %v3798
        %v3800 = vadd.f32 %v3799, %v3793
        %v3801 = vmax.f32 %v3800, 0.0
        %v3802 = vpack.c.bf16 %v3796, %v3796
        %v3803 = vpack.c.bf16 %v3801, %v3801
        %v3805 = vshrl.u32 %v3802, 16
        %v3807 = vshll.u32 %v3802, 16
        %v3809 = vrot.slane %v3807, 1
        %v3810 = vor.u32 %v3805, %v3809
        %v3812 = vshrl.u32 %v3803, 16
        %v3814 = vshll.u32 %v3803, 16
        %v3816 = vrot.slane %v3814, 1
        %v3817 = vor.u32 %v3812, %v3816
        %v3884 = vunpack.c.l.b16 %v928
        %v3885 = vunpack.c.h.b16 %v928
        %v3886 = vunpack.c.l.b16 %v929
        %v3887 = vunpack.c.h.b16 %v929
        %v3888 = vunpack.c.l.b16 %v930
        %v3889 = vunpack.c.h.b16 %v930
        %v3890 = vunpack.c.l.b16 %v931
        %v3891 = vunpack.c.h.b16 %v931
        %v3892 = vunpack.c.l.b16 %v932
        %v3893 = vunpack.c.h.b16 %v932
        %v3894 = vunpack.c.l.b16 %v933
        %v3895 = vunpack.c.h.b16 %v933
        %v3896 = vunpack.c.l.b16 %v934
        %v3897 = vunpack.c.h.b16 %v934
        %v3898 = vunpack.c.l.b16 %v935
        %v3899 = vunpack.c.h.b16 %v935
        %v3900 = vunpack.c.l.b16 %v936
        %v3901 = vunpack.c.h.b16 %v936
        %v3902 = vunpack.c.l.b16 %v937
        %v3903 = vunpack.c.h.b16 %v937
        %v3904 = vunpack.c.l.b16 %v938
        %v3905 = vunpack.c.h.b16 %v938
        %v3906 = vunpack.c.l.b16 %v939
        %v3907 = vunpack.c.h.b16 %v939
        %v3908 = vunpack.c.l.b16 %v940
        %v3909 = vunpack.c.h.b16 %v940
        %v3910 = vunpack.c.l.b16 %v941
        %v3911 = vunpack.c.h.b16 %v941
        %v3912 = vunpack.c.l.b16 %v942
        %v3913 = vunpack.c.h.b16 %v942
        %v3914 = vunpack.c.l.b16 %v943
        %v3915 = vunpack.c.h.b16 %v943
        %v3916 = vunpack.c.l.b16 %v944
        %v3917 = vunpack.c.h.b16 %v944
        %v3918 = vunpack.c.l.b16 %v945
        %v3919 = vunpack.c.h.b16 %v945
        %v3920 = vunpack.c.l.b16 %v946
        %v3921 = vunpack.c.h.b16 %v946
        %v3922 = vunpack.c.l.b16 %v947
        %v3923 = vunpack.c.h.b16 %v947
        %v3924 = vunpack.c.l.b16 %v948
        %v3925 = vunpack.c.h.b16 %v948
        %v3926 = vunpack.c.l.b16 %v949
        %v3927 = vunpack.c.h.b16 %v949
        %v3928 = vunpack.c.l.b16 %v950
        %v3929 = vunpack.c.h.b16 %v950
        %v3930 = vunpack.c.l.b16 %v951
        %v3931 = vunpack.c.h.b16 %v951
        %v3932 = vunpack.c.l.b16 %v952
        %v3933 = vunpack.c.h.b16 %v952
        %v3934 = vunpack.c.l.b16 %v953
        %v3935 = vunpack.c.h.b16 %v953
        %v3936 = vunpack.c.l.b16 %v954
        %v3937 = vunpack.c.h.b16 %v954
        %v3938 = vunpack.c.l.b16 %v955
        %v3939 = vunpack.c.h.b16 %v955
        %v3940 = vunpack.c.l.b16 %v956
        %v3941 = vunpack.c.h.b16 %v956
        %v3942 = vunpack.c.l.b16 %v957
        %v3943 = vunpack.c.h.b16 %v957
        %v3944 = vunpack.c.l.b16 %v958
        %v3945 = vunpack.c.h.b16 %v958
        %v3946 = vunpack.c.l.b16 %v959
        %v3947 = vunpack.c.h.b16 %v959
        %v3948 = vunpack.c.l.b16 %v960
        %v3949 = vunpack.c.h.b16 %v960
        %v3950 = vunpack.c.l.b16 %v961
        %v3951 = vunpack.c.h.b16 %v961
        %v3952 = vunpack.c.l.b16 %v962
        %v3953 = vunpack.c.h.b16 %v962
        %v3954 = vunpack.c.l.b16 %v963
        %v3955 = vunpack.c.h.b16 %v963
        %v3956 = vunpack.c.l.b16 %v964
        %v3957 = vunpack.c.h.b16 %v964
        %v3958 = vunpack.c.l.b16 %v965
        %v3959 = vunpack.c.h.b16 %v965
        %v3960 = vunpack.c.l.b16 %v966
        %v3961 = vunpack.c.h.b16 %v966
        %v3962 = vunpack.c.l.b16 %v967
        %v3963 = vunpack.c.h.b16 %v967
        %v3964 = vunpack.c.l.b16 %v968
        %v3965 = vunpack.c.h.b16 %v968
        %v3966 = vunpack.c.l.b16 %v969
        %v3967 = vunpack.c.h.b16 %v969
        %v3968 = vunpack.c.l.b16 %v970
        %v3969 = vunpack.c.h.b16 %v970
        %v3970 = vunpack.c.l.b16 %v971
        %v3971 = vunpack.c.h.b16 %v971
        %v3972 = vunpack.c.l.b16 %v972
        %v3973 = vunpack.c.h.b16 %v972
        %v3974 = vunpack.c.l.b16 %v973
        %v3975 = vunpack.c.h.b16 %v973
        %v3976 = vunpack.c.l.b16 %v974
        %v3977 = vunpack.c.h.b16 %v974
        %v3978 = vunpack.c.l.b16 %v975
        %v3979 = vunpack.c.h.b16 %v975
        %v3980 = vunpack.c.l.b16 %v976
        %v3981 = vunpack.c.h.b16 %v976
        %v3982 = vunpack.c.l.b16 %v977
        %v3983 = vunpack.c.h.b16 %v977
        %v3984 = vunpack.c.l.b16 %v978
        %v3985 = vunpack.c.h.b16 %v978
        %v3986 = vunpack.c.l.b16 %v979
        %v3987 = vunpack.c.h.b16 %v979
        %v3988 = vunpack.c.l.b16 %v980
        %v3989 = vunpack.c.h.b16 %v980
        %v3990 = vunpack.c.l.b16 %v981
        %v3991 = vunpack.c.h.b16 %v981
        %v3992 = vunpack.c.l.b16 %v982
        %v3993 = vunpack.c.h.b16 %v982
        %v3994 = vunpack.c.l.b16 %v983
        %v3995 = vunpack.c.h.b16 %v983
        %v3996 = vunpack.c.l.b16 %v984
        %v3997 = vunpack.c.h.b16 %v984
        %v3998 = vunpack.c.l.b16 %v985
        %v3999 = vunpack.c.h.b16 %v985
        %v4000 = vunpack.c.l.b16 %v986
        %v4001 = vunpack.c.h.b16 %v986
        %v4002 = vunpack.c.l.b16 %v987
        %v4003 = vunpack.c.h.b16 %v987
        %v4004 = vunpack.c.l.b16 %v988
        %v4005 = vunpack.c.h.b16 %v988
        %v4006 = vunpack.c.l.b16 %v989
        %v4007 = vunpack.c.h.b16 %v989
        %v4008 = vunpack.c.l.b16 %v990
        %v4009 = vunpack.c.h.b16 %v990
        %v4010 = vunpack.c.l.b16 %v991
        %v4011 = vunpack.c.h.b16 %v991
        %v4012 = vpack.c.b16 %v3888, %v3884
        %v4013 = vpack.c.b16 %v3889, %v3885
        %v4014 = vpack.c.b16 %v3890, %v3886
        %v4015 = vpack.c.b16 %v3891, %v3887
        %v4016 = vpack.c.b16 %v3896, %v3892
        %v4017 = vpack.c.b16 %v3897, %v3893
        %v4018 = vpack.c.b16 %v3898, %v3894
        %v4019 = vpack.c.b16 %v3899, %v3895
        %v4020 = vpack.c.b16 %v3904, %v3900
        %v4021 = vpack.c.b16 %v3905, %v3901
        %v4022 = vpack.c.b16 %v3906, %v3902
        %v4023 = vpack.c.b16 %v3907, %v3903
        %v4024 = vpack.c.b16 %v3912, %v3908
        %v4025 = vpack.c.b16 %v3913, %v3909
        %v4026 = vpack.c.b16 %v3914, %v3910
        %v4027 = vpack.c.b16 %v3915, %v3911
        %v4028 = vpack.c.b16 %v3920, %v3916
        %v4029 = vpack.c.b16 %v3921, %v3917
        %v4030 = vpack.c.b16 %v3922, %v3918
        %v4031 = vpack.c.b16 %v3923, %v3919
        %v4032 = vpack.c.b16 %v3928, %v3924
        %v4033 = vpack.c.b16 %v3929, %v3925
        %v4034 = vpack.c.b16 %v3930, %v3926
        %v4035 = vpack.c.b16 %v3931, %v3927
        %v4036 = vpack.c.b16 %v3936, %v3932
        %v4037 = vpack.c.b16 %v3937, %v3933
        %v4038 = vpack.c.b16 %v3938, %v3934
        %v4039 = vpack.c.b16 %v3939, %v3935
        %v4040 = vpack.c.b16 %v3944, %v3940
        %v4041 = vpack.c.b16 %v3945, %v3941
        %v4042 = vpack.c.b16 %v3946, %v3942
        %v4043 = vpack.c.b16 %v3947, %v3943
        %v4044 = vpack.c.b16 %v3952, %v3948
        %v4045 = vpack.c.b16 %v3953, %v3949
        %v4046 = vpack.c.b16 %v3954, %v3950
        %v4047 = vpack.c.b16 %v3955, %v3951
        %v4048 = vpack.c.b16 %v3960, %v3956
        %v4049 = vpack.c.b16 %v3961, %v3957
        %v4050 = vpack.c.b16 %v3962, %v3958
        %v4051 = vpack.c.b16 %v3963, %v3959
        %v4052 = vpack.c.b16 %v3968, %v3964
        %v4053 = vpack.c.b16 %v3969, %v3965
        %v4054 = vpack.c.b16 %v3970, %v3966
        %v4055 = vpack.c.b16 %v3971, %v3967
        %v4056 = vpack.c.b16 %v3976, %v3972
        %v4057 = vpack.c.b16 %v3977, %v3973
        %v4058 = vpack.c.b16 %v3978, %v3974
        %v4059 = vpack.c.b16 %v3979, %v3975
        %v4060 = vpack.c.b16 %v3984, %v3980
        %v4061 = vpack.c.b16 %v3985, %v3981
        %v4062 = vpack.c.b16 %v3986, %v3982
        %v4063 = vpack.c.b16 %v3987, %v3983
        %v4064 = vpack.c.b16 %v3992, %v3988
        %v4065 = vpack.c.b16 %v3993, %v3989
        %v4066 = vpack.c.b16 %v3994, %v3990
        %v4067 = vpack.c.b16 %v3995, %v3991
        %v4068 = vpack.c.b16 %v4000, %v3996
        %v4069 = vpack.c.b16 %v4001, %v3997
        %v4070 = vpack.c.b16 %v4002, %v3998
        %v4071 = vpack.c.b16 %v4003, %v3999
        %v4072 = vpack.c.b16 %v4008, %v4004
        %v4073 = vpack.c.b16 %v4009, %v4005
        %v4074 = vpack.c.b16 %v4010, %v4006
        %v4075 = vpack.c.b16 %v4011, %v4007
        %4140 = vmatprep.subr.bf16.mxu0 %v4013
        %4141 = vmatpush1.bf16.msra.mxu0 %v4012
        %4142 = vmatprep.subr.bf16.mxu0 %v4017
        %4143 = vmatpush1.bf16.msra.mxu0 %v4016
        %4144 = vmatprep.subr.bf16.mxu0 %v4021
        %4145 = vmatpush1.bf16.msra.mxu0 %v4020
        %4146 = vmatprep.subr.bf16.mxu0 %v4025
        %4147 = vmatpush1.bf16.msra.mxu0 %v4024
        %4148 = vmatprep.subr.bf16.mxu0 %v4029
        %4149 = vmatpush1.bf16.msra.mxu0 %v4028
        %4150 = vmatprep.subr.bf16.mxu0 %v4033
        %4151 = vmatpush1.bf16.msra.mxu0 %v4032
        %4152 = vmatprep.subr.bf16.mxu0 %v4037
        %4153 = vmatpush1.bf16.msra.mxu0 %v4036
        %4154 = vmatprep.subr.bf16.mxu0 %v4041
        %4155 = vmatpush1.bf16.msra.mxu0 %v4040
        %4156 = vmatprep.subr.bf16.mxu0 %v4045
        %4157 = vmatpush1.bf16.msra.mxu0 %v4044
        %4158 = vmatprep.subr.bf16.mxu0 %v4049
        %4159 = vmatpush1.bf16.msra.mxu0 %v4048
        %4160 = vmatprep.subr.bf16.mxu0 %v4053
        %4161 = vmatpush1.bf16.msra.mxu0 %v4052
        %4162 = vmatprep.subr.bf16.mxu0 %v4057
        %4163 = vmatpush1.bf16.msra.mxu0 %v4056
        %4164 = vmatprep.subr.bf16.mxu0 %v4061
        %4165 = vmatpush1.bf16.msra.mxu0 %v4060
        %4166 = vmatprep.subr.bf16.mxu0 %v4065
        %4167 = vmatpush1.bf16.msra.mxu0 %v4064
        %4168 = vmatprep.subr.bf16.mxu0 %v4069
        %4169 = vmatpush1.bf16.msra.mxu0 %v4068
        %4170 = vmatprep.subr.bf16.mxu0 %v4073
        %4171 = vmatpush1.bf16.msra.mxu0 %v4072
        %4172 = vmatprep.mubr.bf16.mxu0 %v3817
        %4173 = vmatmul.mubr.bf16.gmra.mrb[0].mxu0 %v3810
        %v4174 = vpop.f32.mrb[0].mxu0
        %v4175 = vadd.f32 0.0, %v4174
        %v4176 = vpop.f32.mrb[0].mxu0
        %v4177 = vadd.f32 0.0, %v4176
        %v4178 = vpop.f32.mrb[0].mxu0
        %v4179 = vpop.f32.mrb[0].mxu0
        %4180 = vdwg.mxu0
        %4181 = vmatprep.subr.bf16.mxu0 %v4015
        %4182 = vmatpush1.bf16.msra.mxu0 %v4014
        %4183 = vmatprep.subr.bf16.mxu0 %v4019
        %4184 = vmatpush1.bf16.msra.mxu0 %v4018
        %4185 = vmatprep.subr.bf16.mxu0 %v4023
        %4186 = vmatpush1.bf16.msra.mxu0 %v4022
        %4187 = vmatprep.subr.bf16.mxu0 %v4027
        %4188 = vmatpush1.bf16.msra.mxu0 %v4026
        %4189 = vmatprep.subr.bf16.mxu0 %v4031
        %4190 = vmatpush1.bf16.msra.mxu0 %v4030
        %4191 = vmatprep.subr.bf16.mxu0 %v4035
        %4192 = vmatpush1.bf16.msra.mxu0 %v4034
        %4193 = vmatprep.subr.bf16.mxu0 %v4039
        %4194 = vmatpush1.bf16.msra.mxu0 %v4038
        %4195 = vmatprep.subr.bf16.mxu0 %v4043
        %4196 = vmatpush1.bf16.msra.mxu0 %v4042
        %4197 = vmatprep.subr.bf16.mxu0 %v4047
        %4198 = vmatpush1.bf16.msra.mxu0 %v4046
        %4199 = vmatprep.subr.bf16.mxu0 %v4051
        %4200 = vmatpush1.bf16.msra.mxu0 %v4050
        %4201 = vmatprep.subr.bf16.mxu0 %v4055
        %4202 = vmatpush1.bf16.msra.mxu0 %v4054
        %4203 = vmatprep.subr.bf16.mxu0 %v4059
        %4204 = vmatpush1.bf16.msra.mxu0 %v4058
        %4205 = vmatprep.subr.bf16.mxu0 %v4063
        %4206 = vmatpush1.bf16.msra.mxu0 %v4062
        %4207 = vmatprep.subr.bf16.mxu0 %v4067
        %4208 = vmatpush1.bf16.msra.mxu0 %v4066
        %4209 = vmatprep.subr.bf16.mxu0 %v4071
        %4210 = vmatpush1.bf16.msra.mxu0 %v4070
        %4211 = vmatprep.subr.bf16.mxu0 %v4075
        %4212 = vmatpush1.bf16.msra.mxu0 %v4074
        %4213 = vmatprep.mubr.bf16.mxu0 %v3817
        %4214 = vmatmul.mubr.bf16.gmra.mrb[0].mxu0 %v3810
        %v4215 = vpop.f32.mrb[0].mxu0
        %v4216 = vadd.f32 0.0, %v4215
        %v4217 = vpop.f32.mrb[0].mxu0
        %v4218 = vadd.f32 0.0, %v4217
        %v4219 = vpop.f32.mrb[0].mxu0
        %v4220 = vpop.f32.mrb[0].mxu0
        %4221 = vdwg.mxu0
        %v4286 = vunpack.c.l.b16 %v864
        %v4287 = vunpack.c.h.b16 %v864
        %v4288 = vunpack.c.l.b16 %v865
        %v4289 = vunpack.c.h.b16 %v865
        %v4290 = vunpack.c.l.b16 %v866
        %v4291 = vunpack.c.h.b16 %v866
        %v4292 = vunpack.c.l.b16 %v867
        %v4293 = vunpack.c.h.b16 %v867
        %v4294 = vunpack.c.l.b16 %v868
        %v4295 = vunpack.c.h.b16 %v868
        %v4296 = vunpack.c.l.b16 %v869
        %v4297 = vunpack.c.h.b16 %v869
        %v4298 = vunpack.c.l.b16 %v870
        %v4299 = vunpack.c.h.b16 %v870
        %v4300 = vunpack.c.l.b16 %v871
        %v4301 = vunpack.c.h.b16 %v871
        %v4302 = vunpack.c.l.b16 %v872
        %v4303 = vunpack.c.h.b16 %v872
        %v4304 = vunpack.c.l.b16 %v873
        %v4305 = vunpack.c.h.b16 %v873
        %v4306 = vunpack.c.l.b16 %v874
        %v4307 = vunpack.c.h.b16 %v874
        %v4308 = vunpack.c.l.b16 %v875
        %v4309 = vunpack.c.h.b16 %v875
        %v4310 = vunpack.c.l.b16 %v876
        %v4311 = vunpack.c.h.b16 %v876
        %v4312 = vunpack.c.l.b16 %v877
        %v4313 = vunpack.c.h.b16 %v877
        %v4314 = vunpack.c.l.b16 %v878
        %v4315 = vunpack.c.h.b16 %v878
        %v4316 = vunpack.c.l.b16 %v879
        %v4317 = vunpack.c.h.b16 %v879
        %v4318 = vunpack.c.l.b16 %v880
        %v4319 = vunpack.c.h.b16 %v880
        %v4320 = vunpack.c.l.b16 %v881
        %v4321 = vunpack.c.h.b16 %v881
        %v4322 = vunpack.c.l.b16 %v882
        %v4323 = vunpack.c.h.b16 %v882
        %v4324 = vunpack.c.l.b16 %v883
        %v4325 = vunpack.c.h.b16 %v883
        %v4326 = vunpack.c.l.b16 %v884
        %v4327 = vunpack.c.h.b16 %v884
        %v4328 = vunpack.c.l.b16 %v885
        %v4329 = vunpack.c.h.b16 %v885
        %v4330 = vunpack.c.l.b16 %v886
        %v4331 = vunpack.c.h.b16 %v886
        %v4332 = vunpack.c.l.b16 %v887
        %v4333 = vunpack.c.h.b16 %v887
        %v4334 = vunpack.c.l.b16 %v888
        %v4335 = vunpack.c.h.b16 %v888
        %v4336 = vunpack.c.l.b16 %v889
        %v4337 = vunpack.c.h.b16 %v889
        %v4338 = vunpack.c.l.b16 %v890
        %v4339 = vunpack.c.h.b16 %v890
        %v4340 = vunpack.c.l.b16 %v891
        %v4341 = vunpack.c.h.b16 %v891
        %v4342 = vunpack.c.l.b16 %v892
        %v4343 = vunpack.c.h.b16 %v892
        %v4344 = vunpack.c.l.b16 %v893
        %v4345 = vunpack.c.h.b16 %v893
        %v4346 = vunpack.c.l.b16 %v894
        %v4347 = vunpack.c.h.b16 %v894
        %v4348 = vunpack.c.l.b16 %v895
        %v4349 = vunpack.c.h.b16 %v895
        %v4350 = vunpack.c.l.b16 %v896
        %v4351 = vunpack.c.h.b16 %v896
        %v4352 = vunpack.c.l.b16 %v897
        %v4353 = vunpack.c.h.b16 %v897
        %v4354 = vunpack.c.l.b16 %v898
        %v4355 = vunpack.c.h.b16 %v898
        %v4356 = vunpack.c.l.b16 %v899
        %v4357 = vunpack.c.h.b16 %v899
        %v4358 = vunpack.c.l.b16 %v900
        %v4359 = vunpack.c.h.b16 %v900
        %v4360 = vunpack.c.l.b16 %v901
        %v4361 = vunpack.c.h.b16 %v901
        %v4362 = vunpack.c.l.b16 %v902
        %v4363 = vunpack.c.h.b16 %v902
        %v4364 = vunpack.c.l.b16 %v903
        %v4365 = vunpack.c.h.b16 %v903
        %v4366 = vunpack.c.l.b16 %v904
        %v4367 = vunpack.c.h.b16 %v904
        %v4368 = vunpack.c.l.b16 %v905
        %v4369 = vunpack.c.h.b16 %v905
        %v4370 = vunpack.c.l.b16 %v906
        %v4371 = vunpack.c.h.b16 %v906
        %v4372 = vunpack.c.l.b16 %v907
        %v4373 = vunpack.c.h.b16 %v907
        %v4374 = vunpack.c.l.b16 %v908
        %v4375 = vunpack.c.h.b16 %v908
        %v4376 = vunpack.c.l.b16 %v909
        %v4377 = vunpack.c.h.b16 %v909
        %v4378 = vunpack.c.l.b16 %v910
        %v4379 = vunpack.c.h.b16 %v910
        %v4380 = vunpack.c.l.b16 %v911
        %v4381 = vunpack.c.h.b16 %v911
        %v4382 = vunpack.c.l.b16 %v912
        %v4383 = vunpack.c.h.b16 %v912
        %v4384 = vunpack.c.l.b16 %v913
        %v4385 = vunpack.c.h.b16 %v913
        %v4386 = vunpack.c.l.b16 %v914
        %v4387 = vunpack.c.h.b16 %v914
        %v4388 = vunpack.c.l.b16 %v915
        %v4389 = vunpack.c.h.b16 %v915
        %v4390 = vunpack.c.l.b16 %v916
        %v4391 = vunpack.c.h.b16 %v916
        %v4392 = vunpack.c.l.b16 %v917
        %v4393 = vunpack.c.h.b16 %v917
        %v4394 = vunpack.c.l.b16 %v918
        %v4395 = vunpack.c.h.b16 %v918
        %v4396 = vunpack.c.l.b16 %v919
        %v4397 = vunpack.c.h.b16 %v919
        %v4398 = vunpack.c.l.b16 %v920
        %v4399 = vunpack.c.h.b16 %v920
        %v4400 = vunpack.c.l.b16 %v921
        %v4401 = vunpack.c.h.b16 %v921
        %v4402 = vunpack.c.l.b16 %v922
        %v4403 = vunpack.c.h.b16 %v922
        %v4404 = vunpack.c.l.b16 %v923
        %v4405 = vunpack.c.h.b16 %v923
        %v4406 = vunpack.c.l.b16 %v924
        %v4407 = vunpack.c.h.b16 %v924
        %v4408 = vunpack.c.l.b16 %v925
        %v4409 = vunpack.c.h.b16 %v925
        %v4410 = vunpack.c.l.b16 %v926
        %v4411 = vunpack.c.h.b16 %v926
        %v4412 = vunpack.c.l.b16 %v927
        %v4413 = vunpack.c.h.b16 %v927
        %v4414 = vpack.c.b16 %v4290, %v4286
        %v4415 = vpack.c.b16 %v4291, %v4287
        %v4416 = vpack.c.b16 %v4292, %v4288
        %v4417 = vpack.c.b16 %v4293, %v4289
        %v4418 = vpack.c.b16 %v4298, %v4294
        %v4419 = vpack.c.b16 %v4299, %v4295
        %v4420 = vpack.c.b16 %v4300, %v4296
        %v4421 = vpack.c.b16 %v4301, %v4297
        %v4422 = vpack.c.b16 %v4306, %v4302
        %v4423 = vpack.c.b16 %v4307, %v4303
        %v4424 = vpack.c.b16 %v4308, %v4304
        %v4425 = vpack.c.b16 %v4309, %v4305
        %v4426 = vpack.c.b16 %v4314, %v4310
        %v4427 = vpack.c.b16 %v4315, %v4311
        %v4428 = vpack.c.b16 %v4316, %v4312
        %v4429 = vpack.c.b16 %v4317, %v4313
        %v4430 = vpack.c.b16 %v4322, %v4318
        %v4431 = vpack.c.b16 %v4323, %v4319
        %v4432 = vpack.c.b16 %v4324, %v4320
        %v4433 = vpack.c.b16 %v4325, %v4321
        %v4434 = vpack.c.b16 %v4330, %v4326
        %v4435 = vpack.c.b16 %v4331, %v4327
        %v4436 = vpack.c.b16 %v4332, %v4328
        %v4437 = vpack.c.b16 %v4333, %v4329
        %v4438 = vpack.c.b16 %v4338, %v4334
        %v4439 = vpack.c.b16 %v4339, %v4335
        %v4440 = vpack.c.b16 %v4340, %v4336
        %v4441 = vpack.c.b16 %v4341, %v4337
        %v4442 = vpack.c.b16 %v4346, %v4342
        %v4443 = vpack.c.b16 %v4347, %v4343
        %v4444 = vpack.c.b16 %v4348, %v4344
        %v4445 = vpack.c.b16 %v4349, %v4345
        %v4446 = vpack.c.b16 %v4354, %v4350
        %v4447 = vpack.c.b16 %v4355, %v4351
        %v4448 = vpack.c.b16 %v4356, %v4352
        %v4449 = vpack.c.b16 %v4357, %v4353
        %v4450 = vpack.c.b16 %v4362, %v4358
        %v4451 = vpack.c.b16 %v4363, %v4359
        %v4452 = vpack.c.b16 %v4364, %v4360
        %v4453 = vpack.c.b16 %v4365, %v4361
        %v4454 = vpack.c.b16 %v4370, %v4366
        %v4455 = vpack.c.b16 %v4371, %v4367
        %v4456 = vpack.c.b16 %v4372, %v4368
        %v4457 = vpack.c.b16 %v4373, %v4369
        %v4458 = vpack.c.b16 %v4378, %v4374
        %v4459 = vpack.c.b16 %v4379, %v4375
        %v4460 = vpack.c.b16 %v4380, %v4376
        %v4461 = vpack.c.b16 %v4381, %v4377
        %v4462 = vpack.c.b16 %v4386, %v4382
        %v4463 = vpack.c.b16 %v4387, %v4383
        %v4464 = vpack.c.b16 %v4388, %v4384
        %v4465 = vpack.c.b16 %v4389, %v4385
        %v4466 = vpack.c.b16 %v4394, %v4390
        %v4467 = vpack.c.b16 %v4395, %v4391
        %v4468 = vpack.c.b16 %v4396, %v4392
        %v4469 = vpack.c.b16 %v4397, %v4393
        %v4470 = vpack.c.b16 %v4402, %v4398
        %v4471 = vpack.c.b16 %v4403, %v4399
        %v4472 = vpack.c.b16 %v4404, %v4400
        %v4473 = vpack.c.b16 %v4405, %v4401
        %v4474 = vpack.c.b16 %v4410, %v4406
        %v4475 = vpack.c.b16 %v4411, %v4407
        %v4476 = vpack.c.b16 %v4412, %v4408
        %v4477 = vpack.c.b16 %v4413, %v4409
        %4542 = vmatprep.subr.bf16.mxu0 %v4415
        %4543 = vmatpush1.bf16.msra.mxu0 %v4414
        %4544 = vmatprep.subr.bf16.mxu0 %v4419
        %4545 = vmatpush1.bf16.msra.mxu0 %v4418
        %4546 = vmatprep.subr.bf16.mxu0 %v4423
        %4547 = vmatpush1.bf16.msra.mxu0 %v4422
        %4548 = vmatprep.subr.bf16.mxu0 %v4427
        %4549 = vmatpush1.bf16.msra.mxu0 %v4426
        %4550 = vmatprep.subr.bf16.mxu0 %v4431
        %4551 = vmatpush1.bf16.msra.mxu0 %v4430
        %4552 = vmatprep.subr.bf16.mxu0 %v4435
        %4553 = vmatpush1.bf16.msra.mxu0 %v4434
        %4554 = vmatprep.subr.bf16.mxu0 %v4439
        %4555 = vmatpush1.bf16.msra.mxu0 %v4438
        %4556 = vmatprep.subr.bf16.mxu0 %v4443
        %4557 = vmatpush1.bf16.msra.mxu0 %v4442
        %4558 = vmatprep.subr.bf16.mxu0 %v4447
        %4559 = vmatpush1.bf16.msra.mxu0 %v4446
        %4560 = vmatprep.subr.bf16.mxu0 %v4451
        %4561 = vmatpush1.bf16.msra.mxu0 %v4450
        %4562 = vmatprep.subr.bf16.mxu0 %v4455
        %4563 = vmatpush1.bf16.msra.mxu0 %v4454
        %4564 = vmatprep.subr.bf16.mxu0 %v4459
        %4565 = vmatpush1.bf16.msra.mxu0 %v4458
        %4566 = vmatprep.subr.bf16.mxu0 %v4463
        %4567 = vmatpush1.bf16.msra.mxu0 %v4462
        %4568 = vmatprep.subr.bf16.mxu0 %v4467
        %4569 = vmatpush1.bf16.msra.mxu0 %v4466
        %4570 = vmatprep.subr.bf16.mxu0 %v4471
        %4571 = vmatpush1.bf16.msra.mxu0 %v4470
        %4572 = vmatprep.subr.bf16.mxu0 %v4475
        %4573 = vmatpush1.bf16.msra.mxu0 %v4474
        %4574 = vmatprep.mubr.bf16.mxu0 %v3803
        %4575 = vmatmul.mubr.bf16.gmra.mrb[0].mxu0 %v3802
        %v4576 = vpop.f32.mrb[0].mxu0
        %v4577 = vadd.f32 %v4175, %v4576
        %v4578 = vpop.f32.mrb[0].mxu0
        %v4579 = vadd.f32 %v4177, %v4578
        %v4580 = vpop.f32.mrb[0].mxu0
        %v4581 = vpop.f32.mrb[0].mxu0
        %4582 = vdwg.mxu0
        %4583 = vmatprep.subr.bf16.mxu0 %v4417
        %4584 = vmatpush1.bf16.msra.mxu0 %v4416
        %4585 = vmatprep.subr.bf16.mxu0 %v4421
        %4586 = vmatpush1.bf16.msra.mxu0 %v4420
        %4587 = vmatprep.subr.bf16.mxu0 %v4425
        %4588 = vmatpush1.bf16.msra.mxu0 %v4424
        %4589 = vmatprep.subr.bf16.mxu0 %v4429
        %4590 = vmatpush1.bf16.msra.mxu0 %v4428
        %4591 = vmatprep.subr.bf16.mxu0 %v4433
        %4592 = vmatpush1.bf16.msra.mxu0 %v4432
        %4593 = vmatprep.subr.bf16.mxu0 %v4437
        %4594 = vmatpush1.bf16.msra.mxu0 %v4436
        %4595 = vmatprep.subr.bf16.mxu0 %v4441
        %4596 = vmatpush1.bf16.msra.mxu0 %v4440
        %4597 = vmatprep.subr.bf16.mxu0 %v4445
        %4598 = vmatpush1.bf16.msra.mxu0 %v4444
        %4599 = vmatprep.subr.bf16.mxu0 %v4449
        %4600 = vmatpush1.bf16.msra.mxu0 %v4448
        %4601 = vmatprep.subr.bf16.mxu0 %v4453
        %4602 = vmatpush1.bf16.msra.mxu0 %v4452
        %4603 = vmatprep.subr.bf16.mxu0 %v4457
        %4604 = vmatpush1.bf16.msra.mxu0 %v4456
        %4605 = vmatprep.subr.bf16.mxu0 %v4461
        %4606 = vmatpush1.bf16.msra.mxu0 %v4460
        %4607 = vmatprep.subr.bf16.mxu0 %v4465
        %4608 = vmatpush1.bf16.msra.mxu0 %v4464
        %4609 = vmatprep.subr.bf16.mxu0 %v4469
        %4610 = vmatpush1.bf16.msra.mxu0 %v4468
        %4611 = vmatprep.subr.bf16.mxu0 %v4473
        %4612 = vmatpush1.bf16.msra.mxu0 %v4472
        %4613 = vmatprep.subr.bf16.mxu0 %v4477
        %4614 = vmatpush1.bf16.msra.mxu0 %v4476
        %4615 = vmatprep.mubr.bf16.mxu0 %v3803
        %4616 = vmatmul.mubr.bf16.gmra.mrb[0].mxu0 %v3802
        %v4617 = vpop.f32.mrb[0].mxu0
        %v4618 = vadd.f32 %v4216, %v4617
        %v4619 = vpop.f32.mrb[0].mxu0
        %v4620 = vadd.f32 %v4218, %v4619
        %v4621 = vpop.f32.mrb[0].mxu0
        %v4622 = vpop.f32.mrb[0].mxu0
        %4623 = vdwg.mxu0
        %v4626 = vrot.slane %v3802, 1
        %v4627 = vrot.slane %v3803, 1
        %v4694 = vunpack.c.l.b16 %v992
        %v4695 = vunpack.c.h.b16 %v992
        %v4696 = vunpack.c.l.b16 %v993
        %v4697 = vunpack.c.h.b16 %v993
        %v4698 = vunpack.c.l.b16 %v994
        %v4699 = vunpack.c.h.b16 %v994
        %v4700 = vunpack.c.l.b16 %v995
        %v4701 = vunpack.c.h.b16 %v995
        %v4702 = vunpack.c.l.b16 %v996
        %v4703 = vunpack.c.h.b16 %v996
        %v4704 = vunpack.c.l.b16 %v997
        %v4705 = vunpack.c.h.b16 %v997
        %v4706 = vunpack.c.l.b16 %v998
        %v4707 = vunpack.c.h.b16 %v998
        %v4708 = vunpack.c.l.b16 %v999
        %v4709 = vunpack.c.h.b16 %v999
        %v4710 = vunpack.c.l.b16 %v1000
        %v4711 = vunpack.c.h.b16 %v1000
        %v4712 = vunpack.c.l.b16 %v1001
        %v4713 = vunpack.c.h.b16 %v1001
        %v4714 = vunpack.c.l.b16 %v1002
        %v4715 = vunpack.c.h.b16 %v1002
        %v4716 = vunpack.c.l.b16 %v1003
        %v4717 = vunpack.c.h.b16 %v1003
        %v4718 = vunpack.c.l.b16 %v1004
        %v4719 = vunpack.c.h.b16 %v1004
        %v4720 = vunpack.c.l.b16 %v1005
        %v4721 = vunpack.c.h.b16 %v1005
        %v4722 = vunpack.c.l.b16 %v1006
        %v4723 = vunpack.c.h.b16 %v1006
        %v4724 = vunpack.c.l.b16 %v1007
        %v4725 = vunpack.c.h.b16 %v1007
        %v4726 = vunpack.c.l.b16 %v1008
        %v4727 = vunpack.c.h.b16 %v1008
        %v4728 = vunpack.c.l.b16 %v1009
        %v4729 = vunpack.c.h.b16 %v1009
        %v4730 = vunpack.c.l.b16 %v1010
        %v4731 = vunpack.c.h.b16 %v1010
        %v4732 = vunpack.c.l.b16 %v1011
        %v4733 = vunpack.c.h.b16 %v1011
        %v4734 = vunpack.c.l.b16 %v1012
        %v4735 = vunpack.c.h.b16 %v1012
        %v4736 = vunpack.c.l.b16 %v1013
        %v4737 = vunpack.c.h.b16 %v1013
        %v4738 = vunpack.c.l.b16 %v1014
        %v4739 = vunpack.c.h.b16 %v1014
        %v4740 = vunpack.c.l.b16 %v1015
        %v4741 = vunpack.c.h.b16 %v1015
        %v4742 = vunpack.c.l.b16 %v1016
        %v4743 = vunpack.c.h.b16 %v1016
        %v4744 = vunpack.c.l.b16 %v1017
        %v4745 = vunpack.c.h.b16 %v1017
        %v4746 = vunpack.c.l.b16 %v1018
        %v4747 = vunpack.c.h.b16 %v1018
        %v4748 = vunpack.c.l.b16 %v1019
        %v4749 = vunpack.c.h.b16 %v1019
        %v4750 = vunpack.c.l.b16 %v1020
        %v4751 = vunpack.c.h.b16 %v1020
        %v4752 = vunpack.c.l.b16 %v1021
        %v4753 = vunpack.c.h.b16 %v1021
        %v4754 = vunpack.c.l.b16 %v1022
        %v4755 = vunpack.c.h.b16 %v1022
        %v4756 = vunpack.c.l.b16 %v1023
        %v4757 = vunpack.c.h.b16 %v1023
        %v4758 = vunpack.c.l.b16 %v1024
        %v4759 = vunpack.c.h.b16 %v1024
        %v4760 = vunpack.c.l.b16 %v1025
        %v4761 = vunpack.c.h.b16 %v1025
        %v4762 = vunpack.c.l.b16 %v1026
        %v4763 = vunpack.c.h.b16 %v1026
        %v4764 = vunpack.c.l.b16 %v1027
        %v4765 = vunpack.c.h.b16 %v1027
        %v4766 = vunpack.c.l.b16 %v1028
        %v4767 = vunpack.c.h.b16 %v1028
        %v4768 = vunpack.c.l.b16 %v1029
        %v4769 = vunpack.c.h.b16 %v1029
        %v4770 = vunpack.c.l.b16 %v1030
        %v4771 = vunpack.c.h.b16 %v1030
        %v4772 = vunpack.c.l.b16 %v1031
        %v4773 = vunpack.c.h.b16 %v1031
        %v4774 = vunpack.c.l.b16 %v1032
        %v4775 = vunpack.c.h.b16 %v1032
        %v4776 = vunpack.c.l.b16 %v1033
        %v4777 = vunpack.c.h.b16 %v1033
        %v4778 = vunpack.c.l.b16 %v1034
        %v4779 = vunpack.c.h.b16 %v1034
        %v4780 = vunpack.c.l.b16 %v1035
        %v4781 = vunpack.c.h.b16 %v1035
        %v4782 = vunpack.c.l.b16 %v1036
        %v4783 = vunpack.c.h.b16 %v1036
        %v4784 = vunpack.c.l.b16 %v1037
        %v4785 = vunpack.c.h.b16 %v1037
        %v4786 = vunpack.c.l.b16 %v1038
        %v4787 = vunpack.c.h.b16 %v1038
        %v4788 = vunpack.c.l.b16 %v1039
        %v4789 = vunpack.c.h.b16 %v1039
        %v4790 = vunpack.c.l.b16 %v1040
        %v4791 = vunpack.c.h.b16 %v1040
        %v4792 = vunpack.c.l.b16 %v1041
        %v4793 = vunpack.c.h.b16 %v1041
        %v4794 = vunpack.c.l.b16 %v1042
        %v4795 = vunpack.c.h.b16 %v1042
        %v4796 = vunpack.c.l.b16 %v1043
        %v4797 = vunpack.c.h.b16 %v1043
        %v4798 = vunpack.c.l.b16 %v1044
        %v4799 = vunpack.c.h.b16 %v1044
        %v4800 = vunpack.c.l.b16 %v1045
        %v4801 = vunpack.c.h.b16 %v1045
        %v4802 = vunpack.c.l.b16 %v1046
        %v4803 = vunpack.c.h.b16 %v1046
        %v4804 = vunpack.c.l.b16 %v1047
        %v4805 = vunpack.c.h.b16 %v1047
        %v4806 = vunpack.c.l.b16 %v1048
        %v4807 = vunpack.c.h.b16 %v1048
        %v4808 = vunpack.c.l.b16 %v1049
        %v4809 = vunpack.c.h.b16 %v1049
        %v4810 = vunpack.c.l.b16 %v1050
        %v4811 = vunpack.c.h.b16 %v1050
        %v4812 = vunpack.c.l.b16 %v1051
        %v4813 = vunpack.c.h.b16 %v1051
        %v4814 = vunpack.c.l.b16 %v1052
        %v4815 = vunpack.c.h.b16 %v1052
        %v4816 = vunpack.c.l.b16 %v1053
        %v4817 = vunpack.c.h.b16 %v1053
        %v4818 = vunpack.c.l.b16 %v1054
        %v4819 = vunpack.c.h.b16 %v1054
        %v4820 = vunpack.c.l.b16 %v1055
        %v4821 = vunpack.c.h.b16 %v1055
        %v4822 = vpack.c.b16 %v4698, %v4694
        %v4823 = vpack.c.b16 %v4699, %v4695
        %v4824 = vpack.c.b16 %v4700, %v4696
        %v4825 = vpack.c.b16 %v4701, %v4697
        %v4826 = vpack.c.b16 %v4706, %v4702
        %v4827 = vpack.c.b16 %v4707, %v4703
        %v4828 = vpack.c.b16 %v4708, %v4704
        %v4829 = vpack.c.b16 %v4709, %v4705
        %v4830 = vpack.c.b16 %v4714, %v4710
        %v4831 = vpack.c.b16 %v4715, %v4711
        %v4832 = vpack.c.b16 %v4716, %v4712
        %v4833 = vpack.c.b16 %v4717, %v4713
        %v4834 = vpack.c.b16 %v4722, %v4718
        %v4835 = vpack.c.b16 %v4723, %v4719
        %v4836 = vpack.c.b16 %v4724, %v4720
        %v4837 = vpack.c.b16 %v4725, %v4721
        %v4838 = vpack.c.b16 %v4730, %v4726
        %v4839 = vpack.c.b16 %v4731, %v4727
        %v4840 = vpack.c.b16 %v4732, %v4728
        %v4841 = vpack.c.b16 %v4733, %v4729
        %v4842 = vpack.c.b16 %v4738, %v4734
        %v4843 = vpack.c.b16 %v4739, %v4735
        %v4844 = vpack.c.b16 %v4740, %v4736
        %v4845 = vpack.c.b16 %v4741, %v4737
        %v4846 = vpack.c.b16 %v4746, %v4742
        %v4847 = vpack.c.b16 %v4747, %v4743
        %v4848 = vpack.c.b16 %v4748, %v4744
        %v4849 = vpack.c.b16 %v4749, %v4745
        %v4850 = vpack.c.b16 %v4754, %v4750
        %v4851 = vpack.c.b16 %v4755, %v4751
        %v4852 = vpack.c.b16 %v4756, %v4752
        %v4853 = vpack.c.b16 %v4757, %v4753
        %v4854 = vpack.c.b16 %v4762, %v4758
        %v4855 = vpack.c.b16 %v4763, %v4759
        %v4856 = vpack.c.b16 %v4764, %v4760
        %v4857 = vpack.c.b16 %v4765, %v4761
        %v4858 = vpack.c.b16 %v4770, %v4766
        %v4859 = vpack.c.b16 %v4771, %v4767
        %v4860 = vpack.c.b16 %v4772, %v4768
        %v4861 = vpack.c.b16 %v4773, %v4769
        %v4862 = vpack.c.b16 %v4778, %v4774
        %v4863 = vpack.c.b16 %v4779, %v4775
        %v4864 = vpack.c.b16 %v4780, %v4776
        %v4865 = vpack.c.b16 %v4781, %v4777
        %v4866 = vpack.c.b16 %v4786, %v4782
        %v4867 = vpack.c.b16 %v4787, %v4783
        %v4868 = vpack.c.b16 %v4788, %v4784
        %v4869 = vpack.c.b16 %v4789, %v4785
        %v4870 = vpack.c.b16 %v4794, %v4790
        %v4871 = vpack.c.b16 %v4795, %v4791
        %v4872 = vpack.c.b16 %v4796, %v4792
        %v4873 = vpack.c.b16 %v4797, %v4793
        %v4874 = vpack.c.b16 %v4802, %v4798
        %v4875 = vpack.c.b16 %v4803, %v4799
        %v4876 = vpack.c.b16 %v4804, %v4800
        %v4877 = vpack.c.b16 %v4805, %v4801
        %v4878 = vpack.c.b16 %v4810, %v4806
        %v4879 = vpack.c.b16 %v4811, %v4807
        %v4880 = vpack.c.b16 %v4812, %v4808
        %v4881 = vpack.c.b16 %v4813, %v4809
        %v4882 = vpack.c.b16 %v4818, %v4814
        %v4883 = vpack.c.b16 %v4819, %v4815
        %v4884 = vpack.c.b16 %v4820, %v4816
        %v4885 = vpack.c.b16 %v4821, %v4817
        %4950 = vmatprep.subr.bf16.mxu0 %v4823
        %4951 = vmatpush1.bf16.msra.mxu0 %v4822
        %4952 = vmatprep.subr.bf16.mxu0 %v4827
        %4953 = vmatpush1.bf16.msra.mxu0 %v4826
        %4954 = vmatprep.subr.bf16.mxu0 %v4831
        %4955 = vmatpush1.bf16.msra.mxu0 %v4830
        %4956 = vmatprep.subr.bf16.mxu0 %v4835
        %4957 = vmatpush1.bf16.msra.mxu0 %v4834
        %4958 = vmatprep.subr.bf16.mxu0 %v4839
        %4959 = vmatpush1.bf16.msra.mxu0 %v4838
        %4960 = vmatprep.subr.bf16.mxu0 %v4843
        %4961 = vmatpush1.bf16.msra.mxu0 %v4842
        %4962 = vmatprep.subr.bf16.mxu0 %v4847
        %4963 = vmatpush1.bf16.msra.mxu0 %v4846
        %4964 = vmatprep.subr.bf16.mxu0 %v4851
        %4965 = vmatpush1.bf16.msra.mxu0 %v4850
        %4966 = vmatprep.subr.bf16.mxu0 %v4855
        %4967 = vmatpush1.bf16.msra.mxu0 %v4854
        %4968 = vmatprep.subr.bf16.mxu0 %v4859
        %4969 = vmatpush1.bf16.msra.mxu0 %v4858
        %4970 = vmatprep.subr.bf16.mxu0 %v4863
        %4971 = vmatpush1.bf16.msra.mxu0 %v4862
        %4972 = vmatprep.subr.bf16.mxu0 %v4867
        %4973 = vmatpush1.bf16.msra.mxu0 %v4866
        %4974 = vmatprep.subr.bf16.mxu0 %v4871
        %4975 = vmatpush1.bf16.msra.mxu0 %v4870
        %4976 = vmatprep.subr.bf16.mxu0 %v4875
        %4977 = vmatpush1.bf16.msra.mxu0 %v4874
        %4978 = vmatprep.subr.bf16.mxu0 %v4879
        %4979 = vmatpush1.bf16.msra.mxu0 %v4878
        %4980 = vmatprep.subr.bf16.mxu0 %v4883
        %4981 = vmatpush1.bf16.msra.mxu0 %v4882
        %4982 = vmatprep.mubr.bf16.mxu0 %v4627
        %4983 = vmatmul.mubr.bf16.gmra.mrb[0].mxu0 %v4626
        %v4984 = vpop.f32.mrb[0].mxu0
        %v4985 = vadd.f32 0.0, %v4984
        %v4986 = vpop.f32.mrb[0].mxu0
        %v4987 = vadd.f32 0.0, %v4986
        %v4988 = vpop.f32.mrb[0].mxu0
        %v4989 = vpop.f32.mrb[0].mxu0
        %4990 = vdwg.mxu0
        %4991 = vmatprep.subr.bf16.mxu0 %v4825
        %4992 = vmatpush1.bf16.msra.mxu0 %v4824
        %4993 = vmatprep.subr.bf16.mxu0 %v4829
        %4994 = vmatpush1.bf16.msra.mxu0 %v4828
        %4995 = vmatprep.subr.bf16.mxu0 %v4833
        %4996 = vmatpush1.bf16.msra.mxu0 %v4832
        %4997 = vmatprep.subr.bf16.mxu0 %v4837
        %4998 = vmatpush1.bf16.msra.mxu0 %v4836
        %4999 = vmatprep.subr.bf16.mxu0 %v4841
        %5000 = vmatpush1.bf16.msra.mxu0 %v4840
        %5001 = vmatprep.subr.bf16.mxu0 %v4845
        %5002 = vmatpush1.bf16.msra.mxu0 %v4844
        %5003 = vmatprep.subr.bf16.mxu0 %v4849
        %5004 = vmatpush1.bf16.msra.mxu0 %v4848
        %5005 = vmatprep.subr.bf16.mxu0 %v4853
        %5006 = vmatpush1.bf16.msra.mxu0 %v4852
        %5007 = vmatprep.subr.bf16.mxu0 %v4857
        %5008 = vmatpush1.bf16.msra.mxu0 %v4856
        %5009 = vmatprep.subr.bf16.mxu0 %v4861
        %5010 = vmatpush1.bf16.msra.mxu0 %v4860
        %5011 = vmatprep.subr.bf16.mxu0 %v4865
        %5012 = vmatpush1.bf16.msra.mxu0 %v4864
        %5013 = vmatprep.subr.bf16.mxu0 %v4869
        %5014 = vmatpush1.bf16.msra.mxu0 %v4868
        %5015 = vmatprep.subr.bf16.mxu0 %v4873
        %5016 = vmatpush1.bf16.msra.mxu0 %v4872
        %5017 = vmatprep.subr.bf16.mxu0 %v4877
        %5018 = vmatpush1.bf16.msra.mxu0 %v4876
        %5019 = vmatprep.subr.bf16.mxu0 %v4881
        %5020 = vmatpush1.bf16.msra.mxu0 %v4880
        %5021 = vmatprep.subr.bf16.mxu0 %v4885
        %5022 = vmatpush1.bf16.msra.mxu0 %v4884
        %5023 = vmatprep.mubr.bf16.mxu0 %v4627
        %5024 = vmatmul.mubr.bf16.gmra.mrb[0].mxu0 %v4626
        %v5025 = vpop.f32.mrb[0].mxu0
        %v5026 = vadd.f32 0.0, %v5025
        %v5027 = vpop.f32.mrb[0].mxu0
        %v5028 = vadd.f32 0.0, %v5027
        %v5029 = vpop.f32.mrb[0].mxu0
        %v5030 = vpop.f32.mrb[0].mxu0
        %5031 = vdwg.mxu0
        %v5032 = vadd.f32 %v4577, %v4985
        %v5033 = vadd.f32 %v4579, %v4987
        %v5034 = vadd.f32 %v4618, %v5026
        %v5035 = vadd.f32 %v4620, %v5028
        %v5036 = vmax.f32 %v5032, %v5033
        %v5037 = vmax.f32 %v5034, %v5035
        %v5038 = vmax.f32 %v5036, %v5037
        %v5040 = vlaneseq
        %v5041 = vshrl.u32 %v5040, 7
        %v5042 = vsub.s32 0, %v5041
        %v5043 = vrot.slane %v1169, %v5042
        %v5045 = vadd.f32 %v5038, %v5043
        %v5046 = vmax.f32 %v5045, 0.0
        %v5047 = vpack.c.bf16 %v5046, %v5046
        %v5049 = vshrl.u32 %v5047, 16
        %v5053 = vrot.slane %v5047, 1
        %v5055 = vrot.slane %v5049, 1
        %v5057 = vrot.slane %v5047, 2
        %v5139 = vunpack.c.l.b16 %v1056
        %v5140 = vunpack.c.l.b16 %v1057
        %v5141 = vunpack.c.l.b16 %v1058
        %v5142 = vunpack.c.l.b16 %v1059
        %v5143 = vunpack.c.l.b16 %v1060
        %v5144 = vunpack.c.l.b16 %v1061
        %v5145 = vunpack.c.l.b16 %v1062
        %v5146 = vunpack.c.l.b16 %v1063
        %v5147 = vunpack.c.l.b16 %v1064
        %v5148 = vunpack.c.l.b16 %v1065
        %v5149 = vunpack.c.l.b16 %v1066
        %v5150 = vunpack.c.l.b16 %v1067
        %v5151 = vunpack.c.l.b16 %v1068
        %v5152 = vunpack.c.l.b16 %v1069
        %v5153 = vunpack.c.l.b16 %v1070
        %v5154 = vunpack.c.l.b16 %v1071
        %v5155 = vunpack.c.l.b16 %v1072
        %v5156 = vunpack.c.l.b16 %v1073
        %v5157 = vunpack.c.l.b16 %v1074
        %v5158 = vunpack.c.l.b16 %v1075
        %v5159 = vunpack.c.l.b16 %v1076
        %v5160 = vunpack.c.l.b16 %v1077
        %v5161 = vunpack.c.l.b16 %v1078
        %v5162 = vunpack.c.l.b16 %v1079
        %v5163 = vunpack.c.l.b16 %v1080
        %v5164 = vunpack.c.l.b16 %v1081
        %v5165 = vunpack.c.l.b16 %v1082
        %v5166 = vunpack.c.l.b16 %v1083
        %v5167 = vunpack.c.l.b16 %v1084
        %v5168 = vunpack.c.l.b16 %v1085
        %v5169 = vunpack.c.l.b16 %v1086
        %v5170 = vunpack.c.l.b16 %v1087
        %v5171 = vunpack.c.l.b16 %v1088
        %v5172 = vunpack.c.l.b16 %v1089
        %v5173 = vunpack.c.l.b16 %v1090
        %v5174 = vunpack.c.l.b16 %v1091
        %v5175 = vunpack.c.l.b16 %v1092
        %v5176 = vunpack.c.l.b16 %v1093
        %v5177 = vunpack.c.l.b16 %v1094
        %v5178 = vunpack.c.l.b16 %v1095
        %v5179 = vunpack.c.l.b16 %v1096
        %v5180 = vunpack.c.l.b16 %v1097
        %v5181 = vunpack.c.l.b16 %v1098
        %v5182 = vunpack.c.l.b16 %v1099
        %v5183 = vunpack.c.l.b16 %v1100
        %v5184 = vunpack.c.l.b16 %v1101
        %v5185 = vunpack.c.l.b16 %v1102
        %v5186 = vunpack.c.l.b16 %v1103
        %v5187 = vunpack.c.l.b16 %v1104
        %v5188 = vunpack.c.l.b16 %v1105
        %v5189 = vunpack.c.l.b16 %v1106
        %v5190 = vunpack.c.l.b16 %v1107
        %v5191 = vunpack.c.l.b16 %v1108
        %v5192 = vunpack.c.l.b16 %v1109
        %v5193 = vunpack.c.l.b16 %v1110
        %v5194 = vunpack.c.l.b16 %v1111
        %v5195 = vunpack.c.l.b16 %v1112
        %v5196 = vunpack.c.l.b16 %v1113
        %v5197 = vunpack.c.l.b16 %v1114
        %v5198 = vunpack.c.l.b16 %v1115
        %v5199 = vunpack.c.l.b16 %v1116
        %v5200 = vunpack.c.l.b16 %v1117
        %v5201 = vunpack.c.l.b16 %v1118
        %v5202 = vunpack.c.l.b16 %v1119
        %v5203 = vunpack.c.l.b16 %v1120
        %v5204 = vunpack.c.l.b16 %v1121
        %v5205 = vunpack.c.l.b16 %v1122
        %v5206 = vunpack.c.l.b16 %v1123
        %v5207 = vunpack.c.l.b16 %v1124
        %v5208 = vunpack.c.l.b16 %v1125
        %v5209 = vunpack.c.l.b16 %v1126
        %v5210 = vunpack.c.l.b16 %v1127
        %v5211 = vunpack.c.l.b16 %v1128
        %v5212 = vunpack.c.l.b16 %v1129
        %v5213 = vunpack.c.l.b16 %v1130
        %v5214 = vunpack.c.l.b16 %v1131
        %v5215 = vunpack.c.l.b16 %v1132
        %v5216 = vunpack.c.l.b16 %v1133
        %v5217 = vunpack.c.l.b16 %v1134
        %v5218 = vunpack.c.l.b16 %v1135
        %v5219 = vpack.c.b16 %v5140, %v5139
        %v5220 = vpack.c.b16 %v5142, %v5141
        %v5221 = vpack.c.b16 %v5144, %v5143
        %v5222 = vpack.c.b16 %v5146, %v5145
        %v5223 = vpack.c.b16 %v5148, %v5147
        %v5224 = vpack.c.b16 %v5150, %v5149
        %v5225 = vpack.c.b16 %v5152, %v5151
        %v5226 = vpack.c.b16 %v5154, %v5153
        %v5227 = vpack.c.b16 %v5156, %v5155
        %v5228 = vpack.c.b16 %v5158, %v5157
        %v5229 = vpack.c.b16 %v5160, %v5159
        %v5230 = vpack.c.b16 %v5162, %v5161
        %v5231 = vpack.c.b16 %v5164, %v5163
        %v5232 = vpack.c.b16 %v5166, %v5165
        %v5233 = vpack.c.b16 %v5168, %v5167
        %v5234 = vpack.c.b16 %v5170, %v5169
        %v5235 = vpack.c.b16 %v5172, %v5171
        %v5236 = vpack.c.b16 %v5174, %v5173
        %v5237 = vpack.c.b16 %v5176, %v5175
        %v5238 = vpack.c.b16 %v5178, %v5177
        %v5239 = vpack.c.b16 %v5180, %v5179
        %v5240 = vpack.c.b16 %v5182, %v5181
        %v5241 = vpack.c.b16 %v5184, %v5183
        %v5242 = vpack.c.b16 %v5186, %v5185
        %v5243 = vpack.c.b16 %v5188, %v5187
        %v5244 = vpack.c.b16 %v5190, %v5189
        %v5245 = vpack.c.b16 %v5192, %v5191
        %v5246 = vpack.c.b16 %v5194, %v5193
        %v5247 = vpack.c.b16 %v5196, %v5195
        %v5248 = vpack.c.b16 %v5198, %v5197
        %v5249 = vpack.c.b16 %v5200, %v5199
        %v5250 = vpack.c.b16 %v5202, %v5201
        %v5251 = vpack.c.b16 %v5204, %v5203
        %v5252 = vpack.c.b16 %v5206, %v5205
        %v5253 = vpack.c.b16 %v5208, %v5207
        %v5254 = vpack.c.b16 %v5210, %v5209
        %v5255 = vpack.c.b16 %v5212, %v5211
        %v5256 = vpack.c.b16 %v5214, %v5213
        %v5257 = vpack.c.b16 %v5216, %v5215
        %v5258 = vpack.c.b16 %v5218, %v5217
        %5299 = vmatprep.subr.bf16.mxu0 0
        %5300 = vmatpush1.bf16.msra.mxu0 %v5219
        %5301 = vmatprep.subr.bf16.mxu0 0
        %5302 = vmatpush1.bf16.msra.mxu0 %v5220
        %5303 = vmatprep.subr.bf16.mxu0 0
        %5304 = vmatpush1.bf16.msra.mxu0 %v5221
        %5305 = vmatprep.subr.bf16.mxu0 0
        %5306 = vmatpush1.bf16.msra.mxu0 %v5222
        %5307 = vmatprep.subr.bf16.mxu0 0
        %5308 = vmatpush1.bf16.msra.mxu0 %v5223
        %5309 = vmatprep.subr.bf16.mxu0 0
        %5310 = vmatpush1.bf16.msra.mxu0 %v5224
        %5311 = vmatprep.subr.bf16.mxu0 0
        %5312 = vmatpush1.bf16.msra.mxu0 %v5225
        %5313 = vmatprep.subr.bf16.mxu0 0
        %5314 = vmatpush1.bf16.msra.mxu0 %v5226
        %5315 = vmatprep.subr.bf16.mxu0 0
        %5316 = vmatpush1.bf16.msra.mxu0 %v5227
        %5317 = vmatprep.subr.bf16.mxu0 0
        %5318 = vmatpush1.bf16.msra.mxu0 %v5228
        %5319 = vmatprep.subr.bf16.mxu0 0
        %5320 = vmatpush1.bf16.msra.mxu0 %v5229
        %5321 = vmatprep.subr.bf16.mxu0 0
        %5322 = vmatpush1.bf16.msra.mxu0 %v5230
        %5323 = vmatprep.subr.bf16.mxu0 0
        %5324 = vmatpush1.bf16.msra.mxu0 %v5231
        %5325 = vmatprep.subr.bf16.mxu0 0
        %5326 = vmatpush1.bf16.msra.mxu0 %v5232
        %5327 = vmatprep.subr.bf16.mxu0 0
        %5328 = vmatpush1.bf16.msra.mxu0 %v5233
        %5329 = vmatprep.subr.bf16.mxu0 0
        %5330 = vmatpush1.bf16.msra.mxu0 %v5234
        %5331 = vmatprep.mubr.bf16.mxu0 %v5049
        %5332 = vmatmul.mubr.bf16.gmra.mrb[0].mxu0 %v5047
        %v5333 = vpop.f32.mrb[0].mxu0
        %v5334 = vadd.f32 %v1170, %v5333
        %v5335 = vpop.f32.mrb[0].mxu0
        %v5336 = vpop.f32.mrb[0].mxu0
        %v5337 = vpop.f32.mrb[0].mxu0
        %5338 = vdwg.mxu0
        %5339 = vmatprep.subr.bf16.mxu0 0
        %5340 = vmatpush1.bf16.msra.mxu0 %v5235
        %5341 = vmatprep.subr.bf16.mxu0 0
        %5342 = vmatpush1.bf16.msra.mxu0 %v5236
        %5343 = vmatprep.subr.bf16.mxu0 0
        %5344 = vmatpush1.bf16.msra.mxu0 %v5237
        %5345 = vmatprep.subr.bf16.mxu0 0
        %5346 = vmatpush1.bf16.msra.mxu0 %v5238
        %5347 = vmatprep.subr.bf16.mxu0 0
        %5348 = vmatpush1.bf16.msra.mxu0 %v5239
        %5349 = vmatprep.subr.bf16.mxu0 0
        %5350 = vmatpush1.bf16.msra.mxu0 %v5240
        %5351 = vmatprep.subr.bf16.mxu0 0
        %5352 = vmatpush1.bf16.msra.mxu0 %v5241
        %5353 = vmatprep.subr.bf16.mxu0 0
        %5354 = vmatpush1.bf16.msra.mxu0 %v5242
        %5355 = vmatprep.subr.bf16.mxu0 0
        %5356 = vmatpush1.bf16.msra.mxu0 %v5243
        %5357 = vmatprep.subr.bf16.mxu0 0
        %5358 = vmatpush1.bf16.msra.mxu0 %v5244
        %5359 = vmatprep.subr.bf16.mxu0 0
        %5360 = vmatpush1.bf16.msra.mxu0 %v5245
        %5361 = vmatprep.subr.bf16.mxu0 0
        %5362 = vmatpush1.bf16.msra.mxu0 %v5246
        %5363 = vmatprep.subr.bf16.mxu0 0
        %5364 = vmatpush1.bf16.msra.mxu0 %v5247
        %5365 = vmatprep.subr.bf16.mxu0 0
        %5366 = vmatpush1.bf16.msra.mxu0 %v5248
        %5367 = vmatprep.subr.bf16.mxu0 0
        %5368 = vmatpush1.bf16.msra.mxu0 %v5249
        %5369 = vmatprep.subr.bf16.mxu0 0
        %5370 = vmatpush1.bf16.msra.mxu0 %v5250
        %5371 = vmatprep.mubr.bf16.mxu0 %v5055
        %5372 = vmatmul.mubr.bf16.gmra.mrb[0].mxu0 %v5053
        %v5373 = vpop.f32.mrb[0].mxu0
        %v5374 = vadd.f32 %v5334, %v5373
        %v5375 = vpop.f32.mrb[0].mxu0
        %v5376 = vpop.f32.mrb[0].mxu0
        %v5377 = vpop.f32.mrb[0].mxu0
        %5378 = vdwg.mxu0
        %5379 = vmatprep.subr.bf16.mxu0 0
        %5380 = vmatpush1.bf16.msra.mxu0 %v5251
        %5381 = vmatprep.subr.bf16.mxu0 0
        %5382 = vmatpush1.bf16.msra.mxu0 %v5252
        %5383 = vmatprep.subr.bf16.mxu0 0
        %5384 = vmatpush1.bf16.msra.mxu0 %v5253
        %5385 = vmatprep.subr.bf16.mxu0 0
        %5386 = vmatpush1.bf16.msra.mxu0 %v5254
        %5387 = vmatprep.subr.bf16.mxu0 0
        %5388 = vmatpush1.bf16.msra.mxu0 %v5255
        %5389 = vmatprep.subr.bf16.mxu0 0
        %5390 = vmatpush1.bf16.msra.mxu0 %v5256
        %5391 = vmatprep.subr.bf16.mxu0 0
        %5392 = vmatpush1.bf16.msra.mxu0 %v5257
        %5393 = vmatprep.subr.bf16.mxu0 0
        %5394 = vmatpush1.bf16.msra.mxu0 %v5258
        %5395 = vmatprep.subr.bf16.mxu0 0
        %5396 = vmatpush1.bf16.msra.mxu0 0
        %5397 = vmatprep.subr.bf16.mxu0 0
        %5398 = vmatpush1.bf16.msra.mxu0 0
        %5399 = vmatprep.subr.bf16.mxu0 0
        %5400 = vmatpush1.bf16.msra.mxu0 0
        %5401 = vmatprep.subr.bf16.mxu0 0
        %5402 = vmatpush1.bf16.msra.mxu0 0
        %5403 = vmatprep.subr.bf16.mxu0 0
        %5404 = vmatpush1.bf16.msra.mxu0 0
        %5405 = vmatprep.subr.bf16.mxu0 0
        %5406 = vmatpush1.bf16.msra.mxu0 0
        %5407 = vmatprep.subr.bf16.mxu0 0
        %5408 = vmatpush1.bf16.msra.mxu0 0
        %5409 = vmatprep.subr.bf16.mxu0 0
        %5410 = vmatpush1.bf16.msra.mxu0 0
        %5411 = vmatprep.mubr.bf16.mxu0 0
        %5412 = vmatmul.mubr.bf16.gmra.mrb[0].mxu0 %v5057
        %v5413 = vpop.f32.mrb[0].mxu0
        %v5414 = vadd.f32 %v5374, %v5413
        %v5415 = vpop.f32.mrb[0].mxu0
        %v5416 = vpop.f32.mrb[0].mxu0
        %v5417 = vpop.f32.mrb[0].mxu0
        %5418 = vdwg.mxu0
        %v5419 = vmax.f32 %v5414, 0.0
        %v5420 = vpack.c.bf16 %v5419, %v5419
        %v5437 = vunpack.c.l.b16 %v1136
        %v5438 = vunpack.c.l.b16 %v1137
        %v5439 = vunpack.c.l.b16 %v1138
        %v5440 = vunpack.c.l.b16 %v1139
        %v5441 = vunpack.c.l.b16 %v1140
        %v5442 = vunpack.c.l.b16 %v1141
        %v5443 = vunpack.c.l.b16 %v1142
        %v5444 = vunpack.c.l.b16 %v1143
        %v5445 = vunpack.c.l.b16 %v1144
        %v5446 = vunpack.c.l.b16 %v1145
        %v5447 = vunpack.c.l.b16 %v1146
        %v5448 = vunpack.c.l.b16 %v1147
        %v5449 = vunpack.c.l.b16 %v1148
        %v5450 = vunpack.c.l.b16 %v1149
        %v5451 = vunpack.c.l.b16 %v1150
        %v5452 = vunpack.c.l.b16 %v1151
        %v5453 = vpack.c.b16 %v5438, %v5437
        %v5454 = vpack.c.b16 %v5440, %v5439
        %v5455 = vpack.c.b16 %v5442, %v5441
        %v5456 = vpack.c.b16 %v5444, %v5443
        %v5457 = vpack.c.b16 %v5446, %v5445
        %v5458 = vpack.c.b16 %v5448, %v5447
        %v5459 = vpack.c.b16 %v5450, %v5449
        %v5460 = vpack.c.b16 %v5452, %v5451
        %5469 = vmatprep.subr.bf16.mxu0 0
        %5470 = vmatpush1.bf16.msra.mxu0 %v5453
        %5471 = vmatprep.subr.bf16.mxu0 0
        %5472 = vmatpush1.bf16.msra.mxu0 %v5454
        %5473 = vmatprep.subr.bf16.mxu0 0
        %5474 = vmatpush1.bf16.msra.mxu0 %v5455
        %5475 = vmatprep.subr.bf16.mxu0 0
        %5476 = vmatpush1.bf16.msra.mxu0 %v5456
        %5477 = vmatprep.subr.bf16.mxu0 0
        %5478 = vmatpush1.bf16.msra.mxu0 %v5457
        %5479 = vmatprep.subr.bf16.mxu0 0
        %5480 = vmatpush1.bf16.msra.mxu0 %v5458
        %5481 = vmatprep.subr.bf16.mxu0 0
        %5482 = vmatpush1.bf16.msra.mxu0 %v5459
        %5483 = vmatprep.subr.bf16.mxu0 0
        %5484 = vmatpush1.bf16.msra.mxu0 %v5460
        %5485 = vmatprep.subr.bf16.mxu0 0
        %5486 = vmatpush1.bf16.msra.mxu0 0
        %5487 = vmatprep.subr.bf16.mxu0 0
        %5488 = vmatpush1.bf16.msra.mxu0 0
        %5489 = vmatprep.subr.bf16.mxu0 0
        %5490 = vmatpush1.bf16.msra.mxu0 0
        %5491 = vmatprep.subr.bf16.mxu0 0
        %5492 = vmatpush1.bf16.msra.mxu0 0
        %5493 = vmatprep.subr.bf16.mxu0 0
        %5494 = vmatpush1.bf16.msra.mxu0 0
        %5495 = vmatprep.subr.bf16.mxu0 0
        %5496 = vmatpush1.bf16.msra.mxu0 0
        %5497 = vmatprep.subr.bf16.mxu0 0
        %5498 = vmatpush1.bf16.msra.mxu0 0
        %5499 = vmatprep.subr.bf16.mxu0 0
        %5500 = vmatpush1.bf16.msra.mxu0 0
        %5501 = vmatprep.mubr.bf16.mxu0 0
        %5502 = vmatmul.mubr.bf16.gmra.mrb[0].mxu0 %v5420
        %v5503 = vpop.f32.mrb[0].mxu0
        %v5504 = vadd.f32 %v1171, %v5503
        %v5505 = vpop.f32.mrb[0].mxu0
        %v5506 = vpop.f32.mrb[0].mxu0
        %v5507 = vpop.f32.mrb[0].mxu0
        %5508 = vdwg.mxu0
        %v5509 = vmax.f32 %v5504, 0.0
        %v5510 = vpack.c.bf16 %v5509, %v5509
        %v5527 = vunpack.c.l.b16 %v1152
        %v5528 = vunpack.c.l.b16 %v1153
        %v5529 = vunpack.c.l.b16 %v1154
        %v5530 = vunpack.c.l.b16 %v1155
        %v5531 = vunpack.c.l.b16 %v1156
        %v5532 = vunpack.c.l.b16 %v1157
        %v5533 = vunpack.c.l.b16 %v1158
        %v5534 = vunpack.c.l.b16 %v1159
        %v5535 = vunpack.c.l.b16 %v1160
        %v5536 = vunpack.c.l.b16 %v1161
        %v5537 = vunpack.c.l.b16 %v1162
        %v5538 = vunpack.c.l.b16 %v1163
        %v5539 = vunpack.c.l.b16 %v1164
        %v5540 = vunpack.c.l.b16 %v1165
        %v5541 = vunpack.c.l.b16 %v1166
        %v5542 = vunpack.c.l.b16 %v1167
        %v5543 = vpack.c.b16 %v5528, %v5527
        %v5544 = vpack.c.b16 %v5530, %v5529
        %v5545 = vpack.c.b16 %v5532, %v5531
        %v5546 = vpack.c.b16 %v5534, %v5533
        %v5547 = vpack.c.b16 %v5536, %v5535
        %v5548 = vpack.c.b16 %v5538, %v5537
        %v5549 = vpack.c.b16 %v5540, %v5539
        %v5550 = vpack.c.b16 %v5542, %v5541
        %5559 = vmatprep.subr.bf16.mxu0 0
        %5560 = vmatpush1.bf16.msra.mxu0 %v5543
        %5561 = vmatprep.subr.bf16.mxu0 0
        %5562 = vmatpush1.bf16.msra.mxu0 %v5544
        %5563 = vmatprep.subr.bf16.mxu0 0
        %5564 = vmatpush1.bf16.msra.mxu0 %v5545
        %5565 = vmatprep.subr.bf16.mxu0 0
        %5566 = vmatpush1.bf16.msra.mxu0 %v5546
        %5567 = vmatprep.subr.bf16.mxu0 0
        %5568 = vmatpush1.bf16.msra.mxu0 %v5547
        %5569 = vmatprep.subr.bf16.mxu0 0
        %5570 = vmatpush1.bf16.msra.mxu0 %v5548
        %5571 = vmatprep.subr.bf16.mxu0 0
        %5572 = vmatpush1.bf16.msra.mxu0 %v5549
        %5573 = vmatprep.subr.bf16.mxu0 0
        %5574 = vmatpush1.bf16.msra.mxu0 %v5550
        %5575 = vmatprep.subr.bf16.mxu0 0
        %5576 = vmatpush1.bf16.msra.mxu0 0
        %5577 = vmatprep.subr.bf16.mxu0 0
        %5578 = vmatpush1.bf16.msra.mxu0 0
        %5579 = vmatprep.subr.bf16.mxu0 0
        %5580 = vmatpush1.bf16.msra.mxu0 0
        %5581 = vmatprep.subr.bf16.mxu0 0
        %5582 = vmatpush1.bf16.msra.mxu0 0
        %5583 = vmatprep.subr.bf16.mxu0 0
        %5584 = vmatpush1.bf16.msra.mxu0 0
        %5585 = vmatprep.subr.bf16.mxu0 0
        %5586 = vmatpush1.bf16.msra.mxu0 0
        %5587 = vmatprep.subr.bf16.mxu0 0
        %5588 = vmatpush1.bf16.msra.mxu0 0
        %5589 = vmatprep.subr.bf16.mxu0 0
        %5590 = vmatpush1.bf16.msra.mxu0 0
        %5591 = vmatprep.mubr.bf16.mxu0 0
        %5592 = vmatmul.mubr.bf16.gmra.mrb[0].mxu0 %v5510
        %v5593 = vpop.f32.mrb[0].mxu0
        %v5594 = vadd.f32 %v1172, %v5593
        %v5595 = vpop.f32.mrb[0].mxu0
        %v5596 = vpop.f32.mrb[0].mxu0
        %v5597 = vpop.f32.mrb[0].mxu0
        %5598 = vdwg.mxu0
        %v5599 = vxor.u32 %v5594, 2147483648
        %v5600 = vmul.f32 %v5599, 1.442695
        %v5601 = vpow.pop %v5600
        %v5602 = vadd.f32 %v5601, 1.0
        %v5603 = vrcp.pop %v5602
        %v5604 = vmul.f32 1.0, %v5603
        %5605 = vst [vmem:[%s478] sm:$0x1] %v5604
        %p5606 = scmp.lt.s32.totalorder %s26, 3
        %s5607 = scalar_select %p5606, %s26, 3
        %s5608 = scalar_lea.vmem %s14, %s5607
        // Predicated region
        $region81: #{net_forward.1} parent=75 // pred_check
          %p5609 = pneg %p343
        $region82: #{net_forward.1} parent=75 // pred_check_branch
          %5611 = sbr.rel (%p5609) target = $region84
        $region83: #{net_forward.1} parent=75 // pred_region
          _
        $region84: #{net_forward.1} parent=75 // pred_fallthru
          _
      $region76: #{net_forward.1} parent=5 // pred_fallthru
        _
      %p5612 = scmp.le.s32.totalorder 2, %s21
      // Predicated region
      $region85: #{net_forward.1} parent=5 // pred_check
        %p5613 = pneg %p5612
      $region86: #{net_forward.1} parent=5 // pred_check_branch
        %5615 = sbr.rel (%p5613) target = $region88
      $region87: #{net_forward.1} parent=5 // pred_region
        %s5616 = ssub.s32 %s21, 2
        // Predicated region
        $region89: #{net_forward.1} parent=87 // pred_check
          %p5617 = pneg %p349
        $region90: #{net_forward.1} parent=87 // pred_check_branch
          %5619 = sbr.rel (%p5617) target = $region92
        $region91: #{net_forward.1} parent=87 // pred_region
          %p5620 = scmp.lt.s32.totalorder %s27, 3
          %s5621 = scalar_select %p5620, %s27, 3
          %s5622 = scalar_lea.vmem %s14, %s5621
        $region92: #{net_forward.1} parent=87 // pred_fallthru
          _
      $region88: #{net_forward.1} parent=5 // pred_fallthru
        _
    $region6: #{net_forward.1} parent=1 // loop_footer
      %s25 = sadd.s32 1, %s21
    $region7: #{net_forward.1} parent=1 // loop_footer_branch
      %20 = sbr.rel target = $region3
    $region8: #{net_forward.1} parent=1 // loop_exit
      _
    %5623 = vsyncpa [#allocation3], 1
    %s5624 = scalar_lea.sflag [#allocation3], 1
    %5625 = vsyncpa %s5624, 1

</llo_original>
